<compile_context>
chip_gen: v7x
topology: tpu7x:2x2x1
jax: 0.10.0
libtpu: 0.0.40
codegen_flags: <defaults>
</compile_context>

<pallas_src>
import math

import jax
import jax.numpy as jnp
from jax.experimental import pallas as pl
from jax.experimental.pallas import tpu as pltpu


# ----------------------------------------------------------------------------
# Model configuration (small, deterministic).
# ----------------------------------------------------------------------------
N_BATCH = 2
PATCH = 9                     # H == W (required by CUSTOM_SPAT)
C_HSI = 16                    # raw HSI channels
C_LIDAR = 2                   # raw LiDAR channels
HSI_CH = (16, 16, 32)         # args.hsi_channels
BN_EPS = 1e-5


# ----------------------------------------------------------------------------
# Shared activation math (used inside Pallas kernels AND by the jnp reference).
# ----------------------------------------------------------------------------
def _apply_act(y, act):
    if act == "none":
        return y
    if act == "relu":
        return jnp.maximum(y, 0.0)
    if act == "silu":                      # nn.SiLU:  x * sigmoid(x)
        return y * (1.0 / (1.0 + jnp.exp(-y)))
    if act == "sigmoid":
        return 1.0 / (1.0 + jnp.exp(-y))
    if act == "hswish":                    # h_swish:  x * relu6(x + 3) / 6
        return y * (jnp.clip(y + 3.0, 0.0, 6.0) * (1.0 / 6.0))
    raise ValueError(f"unknown activation: {act}")


# ----------------------------------------------------------------------------
# Pallas kernels.
# ----------------------------------------------------------------------------
def _make_gemm_act_kernel(act):
    """out = act((x @ w) * scale + bias) — conv-as-GEMM with BN/act epilogue."""
    def kernel(x_ref, w_ref, s_ref, b_ref, o_ref):
        acc = jnp.dot(x_ref[...], w_ref[...], preferred_element_type=jnp.float32)
        y = acc * s_ref[...] + b_ref[...]          # (1, C) broadcast over rows
        o_ref[...] = _apply_act(y, act).astype(o_ref.dtype)
    return kernel


def _row_mean_kernel(x_ref, o_ref):
    # (R, S) -> (R, 1): lane reduction (adaptive average pooling).
    o_ref[...] = jnp.mean(x_ref[...], axis=-1, keepdims=True)


def _mul_kernel(x_ref, m_ref, o_ref):
    # Elementwise multiply; m broadcasts along the lane or sublane axis.
    o_ref[...] = x_ref[...] * m_ref[...]


def _mask_res_silu_kernel(x_ref, m_ref, r_ref, o_ref):
    # Fused: (attention-mask * out) + residual, then SiLU.
    y = x_ref[...] * m_ref[...] + r_ref[...]
    o_ref[...] = _apply_act(y, "silu")


def _spat_mask_kernel(y_ref, c_ref, o_ref):
    # y: (N, P, C) pixels, c: (N, 1, C) center pixel -> exp(-3 * ||y - c||_2)
    d2 = jnp.sum((y_ref[...] - c_ref[...]) ** 2, axis=-1)
    o_ref[...] = jnp.exp(-3.0 * jnp.sqrt(d2))


# ----------------------------------------------------------------------------
# Pallas op wrappers.
# ----------------------------------------------------------------------------
_GEMM_TILE_M = 512   # M-tiling only engages for larger inputs


def _pl_gemm_act(x, w, scale, bias, act):
    m, k = x.shape
    c = w.shape[1]
    tile_m = m if m <= _GEMM_TILE_M else _GEMM_TILE_M
    return pl.pallas_call(
        _make_gemm_act_kernel(act),
        out_shape=jax.ShapeDtypeStruct((m, c), jnp.float32),
        grid=(pl.cdiv(m, tile_m),),
        in_specs=[
            pl.BlockSpec((tile_m, k), lambda i: (i, 0)),
            pl.BlockSpec((k, c), lambda i: (0, 0)),
            pl.BlockSpec((1, c), lambda i: (0, 0)),
            pl.BlockSpec((1, c), lambda i: (0, 0)),
        ],
        out_specs=pl.BlockSpec((tile_m, c), lambda i: (i, 0)),
        compiler_params=pltpu.CompilerParams(dimension_semantics=("parallel",)),
    )(x, w, scale, bias)


def _pl_row_mean(x):
    r, _ = x.shape
    return pl.pallas_call(
        _row_mean_kernel,
        out_shape=jax.ShapeDtypeStruct((r, 1), jnp.float32),
    )(x)


def _pl_mul(x, m):
    return pl.pallas_call(
        _mul_kernel,
        out_shape=jax.ShapeDtypeStruct(x.shape, jnp.float32),
    )(x, m)


def _pl_mask_res_silu(x, m, r):
    return pl.pallas_call(
        _mask_res_silu_kernel,
        out_shape=jax.ShapeDtypeStruct(x.shape, jnp.float32),
    )(x, m, r)


def _pl_spat_mask(y, c):
    n, p, _ = y.shape
    return pl.pallas_call(
        _spat_mask_kernel,
        out_shape=jax.ShapeDtypeStruct((n, p), jnp.float32),
    )(y, c)


class _PallasOps:
    gemm_act = staticmethod(_pl_gemm_act)
    row_mean = staticmethod(_pl_row_mean)
    mul = staticmethod(_pl_mul)
    mask_res_silu = staticmethod(_pl_mask_res_silu)
    spat_mask = staticmethod(_pl_spat_mask)


class _RefOps:
    """Pure-jnp versions of the same primitive ops (correctness reference)."""

    @staticmethod
    def gemm_act(x, w, scale, bias, act):
        return _apply_act(jnp.dot(x, w) * scale + bias, act)

    @staticmethod
    def row_mean(x):
        return jnp.mean(x, axis=-1, keepdims=True)

    @staticmethod
    def mul(x, m):
        return x * m

    @staticmethod
    def mask_res_silu(x, m, r):
        return _apply_act(x * m + r, "silu")

    @staticmethod
    def spat_mask(y, c):
        return jnp.exp(-3.0 * jnp.sqrt(jnp.sum((y - c) ** 2, axis=-1)))


# ----------------------------------------------------------------------------
# Wrapper-level layout plumbing + SSARN forward (shared by Pallas & reference).
# ----------------------------------------------------------------------------
def _im2col_3x3(x):
    """(N, H, W, C) -> (N*H*W, 9*C) patches for a stride-1, pad-1, 3x3 conv."""
    n, h, w, c = x.shape
    xp = jnp.pad(x, ((0, 0), (1, 1), (1, 1), (0, 0)))
    cols = [xp[:, dy:dy + h, dx:dx + w, :] for dy in range(3) for dx in range(3)]
    return jnp.concatenate(cols, axis=-1).reshape(n * h * w, 9 * c)


def _conv3x3_bn_act(x, p, act, ops):
    n, h, w, _ = x.shape
    y = ops.gemm_act(_im2col_3x3(x), p["w"], p["scale"], p["bias"], act)
    return y.reshape(n, h, w, p["w"].shape[1])


def _conv1x1_bn_act(x, p, act, ops):
    n, h, w, c = x.shape
    y = ops.gemm_act(x.reshape(n * h * w, c), p["w"], p["scale"], p["bias"], act)
    return y.reshape(n, h, w, p["w"].shape[1])


def _ca_masks(x, p, ops):
    """Coordinate-Attention masks: returns (N, H, Cout) and (N, W, Cout)."""
    n, h, w, c = x.shape
    # pool_h: mean over W (keep H); pool_w: mean over H (keep W).
    xh = ops.row_mean(jnp.transpose(x, (0, 1, 3, 2)).reshape(n * h * c, w)).reshape(n, h, c)
    xw = ops.row_mean(jnp.transpose(x, (0, 2, 3, 1)).reshape(n * w * c, h)).reshape(n, w, c)
    y = jnp.concatenate([xh, xw], axis=1).reshape(n * (h + w), c)
    y = ops.gemm_act(y, p["conv"]["w"], p["conv"]["scale"], p["conv"]["bias"], "hswish")
    hid = y.shape[-1]
    y = y.reshape(n, h + w, hid)
    yh = y[:, :h, :].reshape(n * h, hid)
    yw = y[:, h:, :].reshape(n * w, hid)
    mh = ops.gemm_act(yh, p["conv_h"]["w"], p["conv_h"]["scale"], p["conv_h"]["bias"], "sigmoid")
    mw = ops.gemm_act(yw, p["conv_w"]["w"], p["conv_w"]["scale"], p["conv_w"]["bias"], "sigmoid")
    cout = mh.shape[-1]
    return mh.reshape(n, h, cout), mw.reshape(n, w, cout)


def _apply_ca(x, mh, mw, ops):
    """out = (mask_h * mask_w) * x via two lane/sublane-safe broadcast muls."""
    n, h, w, c = x.shape
    a = ops.mul(x.reshape(n * h, w, c), mh.reshape(n * h, 1, c))
    return ops.mul(a.reshape(n, h, w * c), mw.reshape(n, 1, w * c)).reshape(n, h, w, c)


def ssarn_forward(x_nchw, params, ops):
    """SSARN.forward (att_after_first=CA, spec_att=CA, spat_att=CUSTOM_SPAT, SiLU)."""
    n, _, h, w = x_nchw.shape
    x = jnp.transpose(x_nchw, (0, 2, 3, 1))            # NCHW -> NHWC
    hsi, lidar = x[..., :C_HSI], x[..., C_HSI:]

    # CUSTOM_SPAT: modulate raw HSI with the lidar center-pixel distance mask.
    hw = h * w
    y = lidar.reshape(n, hw, C_LIDAR)
    center = y[:, hw // 2: hw // 2 + 1, :]
    mask = ops.spat_mask(y, center)                     # (N, H*W)
    hsi = ops.mul(hsi.reshape(n, hw, C_HSI), mask.reshape(n, hw, 1)).reshape(n, h, w, C_HSI)

    # Extractor: Conv_Unit -> CA * out -> Residual_Unit -> Conv_1x1_Unit.
    feat = _conv3x3_bn_act(hsi, params["conv_unit"], "silu", ops)
    mh1, mw1 = _ca_masks(feat, params["ca_first"], ops)
    feat = _apply_ca(feat, mh1, mw1, ops)

    # Residual unit.
    out = _conv3x3_bn_act(feat, params["res_conv1"], "silu", ops)
    out = _conv3x3_bn_act(out, params["res_conv2"], "none", ops)    # conv2 + bn2
    mh2, mw2 = _ca_masks(out, params["res_ca"], ops)
    c2 = out.shape[-1]
    res = ops.gemm_act(feat.reshape(n * h * w, feat.shape[-1]),
                       params["res_conv1_2"]["w"], params["res_conv1_2"]["scale"],
                       params["res_conv1_2"]["bias"], "none")
    a = ops.mul(out.reshape(n * h, w, c2), mh2.reshape(n * h, 1, c2))
    out = ops.mask_res_silu(a.reshape(n, h, w * c2), mw2.reshape(n, 1, w * c2),
                            res.reshape(n, h, w * c2)).reshape(n, h, w, c2)

    out = _conv1x1_bn_act(out, params["conv1x1"], "silu", ops)

    # AdaptiveAvgPool2d((1, 1)) + Flatten.
    cf = out.shape[-1]
    return ops.row_mean(jnp.transpose(out, (0, 3, 1, 2)).reshape(n * cf, h * w)).reshape(n, cf)


# ----------------------------------------------------------------------------
# Deterministic parameter construction (BatchNorm folded into scale/bias).
# ----------------------------------------------------------------------------
def _init_conv(key, ksize, cin, cout, with_bn):
    kw, kb, kbn = jax.random.split(key, 3)
    fan_in = ksize * ksize * cin
    w = jax.random.normal(kw, (fan_in, cout), jnp.float32) / math.sqrt(fan_in)
    conv_b = 0.05 * jax.random.normal(kb, (cout,), jnp.float32)
    if with_bn:
        kg, kbe, km, kv = jax.random.split(kbn, 4)
        gamma = 1.0 + 0.1 * jax.random.normal(kg, (cout,), jnp.float32)
        beta = 0.1 * jax.random.normal(kbe, (cout,), jnp.float32)
        mean = 0.1 * jax.random.normal(km, (cout,), jnp.float32)
        var = 0.5 + jax.random.uniform(kv, (cout,), jnp.float32)
        scale = gamma / jnp.sqrt(var + BN_EPS)
        bias = scale * conv_b + beta - scale * mean     # fold conv bias + BN
    else:
        scale = jnp.ones((cout,), jnp.float32)
        bias = conv_b
    return {"w": w, "scale": scale.reshape(1, cout), "bias": bias.reshape(1, cout)}


def _init_ca(key, cin, cout):
    hidden = max(8, cin // 32)
    k1, k2, k3 = jax.random.split(key, 3)
    return {
        "conv": _init_conv(k1, 1, cin, hidden, True),
        "conv_h": _init_conv(k2, 1, hidden, cout, False),
        "conv_w": _init_conv(k3, 1, hidden, cout, False),
    }


def init_params(key):
    k = jax.random.split(key, 7)
    return {
        "conv_unit": _init_conv(k[0], 3, C_HSI, HSI_CH[0], True),
        "ca_first": _init_ca(k[1], HSI_CH[0], HSI_CH[0]),
        "res_conv1": _init_conv(k[2], 3, HSI_CH[0], HSI_CH[1], True),
        "res_conv2": _init_conv(k[3], 3, HSI_CH[1], HSI_CH[2], True),
        "res_ca": _init_ca(k[4], HSI_CH[2], HSI_CH[2]),
        "res_conv1_2": _init_conv(k[5], 1, HSI_CH[0], HSI_CH[2], False),
        "conv1x1": _init_conv(k[6], 1, HSI_CH[2], HSI_CH[2], True),
    }


# ----------------------------------------------------------------------------
# Main.
# ----------------------------------------------------------------------------
if __name__ == "__main__":
    root = jax.random.PRNGKey(0)
    kx, kp = jax.random.split(root)
    x = jax.random.normal(kx, (N_BATCH, C_HSI + C_LIDAR, PATCH, PATCH), jnp.float32)
    params = init_params(kp)

    fwd_pallas = jax.jit(lambda v: ssarn_forward(v, params, _PallasOps))
    fwd_ref = jax.jit(lambda v: ssarn_forward(v, params, _RefOps))

    out = jax.block_until_ready(fwd_pallas(x))
    ref = jax.block_until_ready(fwd_ref(x))

    assert out.shape == (N_BATCH, HSI_CH[-1]) and out.dtype == jnp.float32
    err = float(jnp.max(jnp.abs(out - ref)))
    assert err < 5e-2, f"Pallas vs reference mismatch: max abs err = {err}"
    print("KERNEL_OK")
</pallas_src>

<mosaic_0001>
module attributes {stable_mosaic.version = 11 : i64} {
  func.func @_spat_mask_kernel(%arg0: memref<2x81x2xf32, #tpu.memory_space<vmem>>, %arg1: memref<2x1x2xf32, #tpu.memory_space<vmem>>, %arg2: memref<2x81xf32, #tpu.memory_space<vmem>>) attributes {dimension_semantics = [], scalar_prefetch = 0 : i64, scratch_operands = 0 : i64, tpu.core_type = #tpu.core_type<tc>} {
    %c0 = arith.constant 0 : index
    %c0_0 = arith.constant 0 : index
    %c0_1 = arith.constant 0 : index
    %0 = vector.load %arg0[%c0, %c0_0, %c0_1] : memref<2x81x2xf32, #tpu.memory_space<vmem>>, vector<2x81x2xf32>
    %c0_2 = arith.constant 0 : index
    %c0_3 = arith.constant 0 : index
    %c0_4 = arith.constant 0 : index
    %1 = vector.load %arg1[%c0_2, %c0_3, %c0_4] : memref<2x1x2xf32, #tpu.memory_space<vmem>>, vector<2x1x2xf32>
    %2 = vector.broadcast %1 : vector<2x1x2xf32> to vector<2x81x2xf32>
    %3 = arith.subf %0, %2 : vector<2x81x2xf32>
    %4 = arith.mulf %3, %3 : vector<2x81x2xf32>
    %cst = arith.constant dense<0.000000e+00> : vector<2x81xf32>
    %5 = vector.multi_reduction <add>, %4, %cst [2] : vector<2x81x2xf32> to vector<2x81xf32>
    %6 = math.sqrt %5 : vector<2x81xf32>
    %cst_5 = arith.constant -3.000000e+00 : f32
    %7 = vector.broadcast %cst_5 : f32 to vector<2x81xf32>
    %8 = arith.mulf %7, %6 : vector<2x81xf32>
    %9 = math.exp %8 : vector<2x81xf32>
    %c0_6 = arith.constant 0 : index
    %c0_7 = arith.constant 0 : index
    %10 = vector.load %arg2[%c0_6, %c0_7] : memref<2x81xf32, #tpu.memory_space<vmem>>, vector<2x81xf32>
    tpu.vector_store %arg2[%c0_6, %c0_7], %9 {strides = array<i32>} : memref<2x81xf32, #tpu.memory_space<vmem>>, vector<2x81xf32>,
    return
  }
}

module attributes {stable_mosaic.version = 11 : i64} {
  func.func @_mul_kernel(%arg0: memref<2x81x16xf32, #tpu.memory_space<vmem>>, %arg1: memref<2x81x1xf32, #tpu.memory_space<vmem>>, %arg2: memref<2x81x16xf32, #tpu.memory_space<vmem>>) attributes {dimension_semantics = [], scalar_prefetch = 0 : i64, scratch_operands = 0 : i64, tpu.core_type = #tpu.core_type<tc>} {
    %c0 = arith.constant 0 : index
    %c0_0 = arith.constant 0 : index
    %c0_1 = arith.constant 0 : index
    %0 = vector.load %arg0[%c0, %c0_0, %c0_1] : memref<2x81x16xf32, #tpu.memory_space<vmem>>, vector<2x81x16xf32>
    %c0_2 = arith.constant 0 : index
    %c0_3 = arith.constant 0 : index
    %c0_4 = arith.constant 0 : index
    %1 = vector.load %arg1[%c0_2, %c0_3, %c0_4] : memref<2x81x1xf32, #tpu.memory_space<vmem>>, vector<2x81x1xf32>
    %2 = vector.broadcast %1 : vector<2x81x1xf32> to vector<2x81x16xf32>
    %3 = arith.mulf %0, %2 : vector<2x81x16xf32>
    %c0_5 = arith.constant 0 : index
    %c0_6 = arith.constant 0 : index
    %c0_7 = arith.constant 0 : index
    %4 = vector.load %arg2[%c0_5, %c0_6, %c0_7] : memref<2x81x16xf32, #tpu.memory_space<vmem>>, vector<2x81x16xf32>
    tpu.vector_store %arg2[%c0_5, %c0_6, %c0_7], %3 {strides = array<i32>} : memref<2x81x16xf32, #tpu.memory_space<vmem>>, vector<2x81x16xf32>,
    return
  }
}

module attributes {stable_mosaic.version = 11 : i64} {
  func.func @kernel(%arg0: i32, %arg1: memref<162x144xf32, #tpu.memory_space<vmem>>, %arg2: memref<144x16xf32, #tpu.memory_space<vmem>>, %arg3: memref<1x16xf32, #tpu.memory_space<vmem>>, %arg4: memref<1x16xf32, #tpu.memory_space<vmem>>, %arg5: memref<162x16xf32, #tpu.memory_space<vmem>>) attributes {dimension_semantics = [#tpu.dimension_semantics<parallel>], iteration_bounds = array<i64: 1>, scalar_prefetch = 0 : i64, scratch_operands = 0 : i64, tpu.core_type = #tpu.core_type<tc>, window_params = [{transform_indices = @transform_0, window_bounds = array<i64: 162, 144>}, {pipeline_mode = #tpu.pipeline_mode<synchronous>, transform_indices = @transform_1, window_bounds = array<i64: 144, 16>}, {pipeline_mode = #tpu.pipeline_mode<synchronous>, transform_indices = @transform_2, window_bounds = array<i64: 1, 16>}, {pipeline_mode = #tpu.pipeline_mode<synchronous>, transform_indices = @transform_3, window_bounds = array<i64: 1, 16>}, {transform_indices = @transform_4, window_bounds = array<i64: 162, 16>}]} {
    %c0 = arith.constant 0 : index
    %c0_0 = arith.constant 0 : index
    %0 = vector.load %arg1[%c0, %c0_0] : memref<162x144xf32, #tpu.memory_space<vmem>>, vector<162x144xf32>
    %c0_1 = arith.constant 0 : index
    %c0_2 = arith.constant 0 : index
    %1 = vector.load %arg2[%c0_1, %c0_2] : memref<144x16xf32, #tpu.memory_space<vmem>>, vector<144x16xf32>
    %cst = arith.constant dense<0.000000e+00> : vector<162x16xf32>
    %2 = tpu.matmul %0, %1, %cst {dimension_numbers = #tpu.dot_dimension_numbers<[1], [0], [0], [1], [0, 0, 1, 1], [], []>} : vector<162x144xf32>, vector<144x16xf32>, vector<162x16xf32> -> vector<162x16xf32>
    %c0_3 = arith.constant 0 : index
    %c0_4 = arith.constant 0 : index
    %3 = vector.load %arg3[%c0_3, %c0_4] : memref<1x16xf32, #tpu.memory_space<vmem>>, vector<1x16xf32>
    %4 = vector.broadcast %3 : vector<1x16xf32> to vector<162x16xf32>
    %5 = arith.mulf %2, %4 : vector<162x16xf32>
    %c0_5 = arith.constant 0 : index
    %c0_6 = arith.constant 0 : index
    %6 = vector.load %arg4[%c0_5, %c0_6] : memref<1x16xf32, #tpu.memory_space<vmem>>, vector<1x16xf32>
    %7 = vector.broadcast %6 : vector<1x16xf32> to vector<162x16xf32>
    %8 = arith.addf %5, %7 : vector<162x16xf32>
    %cst_7 = arith.constant 0.000000e+00 : f32
    %9 = vector.broadcast %cst_7 : f32 to vector<162x16xf32>
    %10 = arith.subf %9, %8 : vector<162x16xf32>
    %11 = math.exp %10 : vector<162x16xf32>
    %cst_8 = arith.constant 1.000000e+00 : f32
    %12 = vector.broadcast %cst_8 : f32 to vector<162x16xf32>
    %13 = arith.addf %12, %11 : vector<162x16xf32>
    %cst_9 = arith.constant 1.000000e+00 : f32
    %14 = vector.broadcast %cst_9 : f32 to vector<162x16xf32>
    %15 = arith.divf %14, %13 : vector<162x16xf32>
    %16 = arith.mulf %8, %15 : vector<162x16xf32>
    %c0_10 = arith.constant 0 : index
    %c0_11 = arith.constant 0 : index
    %17 = vector.load %arg5[%c0_10, %c0_11] : memref<162x16xf32, #tpu.memory_space<vmem>>, vector<162x16xf32>
    tpu.vector_store %arg5[%c0_10, %c0_11], %16 {strides = array<i32>} : memref<162x16xf32, #tpu.memory_space<vmem>>, vector<162x16xf32>,
    return
  }
  func.func @transform_0(%arg0: i32) -> (i32, i32) {
    %c0_i32 = arith.constant 0 : i32
    %c0_i32_0 = arith.constant 0 : i32
    return %arg0, %c0_i32 : i32, i32
  }
  func.func @transform_1(%arg0: i32) -> (i32, i32) {
    %c0_i32 = arith.constant 0 : i32
    %c0_i32_0 = arith.constant 0 : i32
    %c0_i32_1 = arith.constant 0 : i32
    return %c0_i32, %c0_i32_0 : i32, i32
  }
  func.func @transform_2(%arg0: i32) -> (i32, i32) {
    %c0_i32 = arith.constant 0 : i32
    %c0_i32_0 = arith.constant 0 : i32
    %c0_i32_1 = arith.constant 0 : i32
    return %c0_i32, %c0_i32_0 : i32, i32
  }
  func.func @transform_3(%arg0: i32) -> (i32, i32) {
    %c0_i32 = arith.constant 0 : i32
    %c0_i32_0 = arith.constant 0 : i32
    %c0_i32_1 = arith.constant 0 : i32
    return %c0_i32, %c0_i32_0 : i32, i32
  }
  func.func @transform_4(%arg0: i32) -> (i32, i32) {
    %c0_i32 = arith.constant 0 : i32
    %c0_i32_0 = arith.constant 0 : i32
    return %arg0, %c0_i32 : i32, i32
  }
}

module attributes {stable_mosaic.version = 11 : i64} {
  func.func @_row_mean_kernel(%arg0: memref<288x9xf32, #tpu.memory_space<vmem>>, %arg1: memref<288x1xf32, #tpu.memory_space<vmem>>) attributes {dimension_semantics = [], scalar_prefetch = 0 : i64, scratch_operands = 0 : i64, tpu.core_type = #tpu.core_type<tc>} {
    %c0 = arith.constant 0 : index
    %c0_0 = arith.constant 0 : index
    %0 = vector.load %arg0[%c0, %c0_0] : memref<288x9xf32, #tpu.memory_space<vmem>>, vector<288x9xf32>
    %cst = arith.constant dense<0.000000e+00> : vector<288xf32>
    %1 = vector.multi_reduction <add>, %0, %cst [1] : vector<288x9xf32> to vector<288xf32>
    %2 = vector.shape_cast %1 : vector<288xf32> to vector<288x1xf32>
    %cst_1 = arith.constant 9.000000e+00 : f32
    %3 = vector.broadcast %cst_1 : f32 to vector<288x1xf32>
    %4 = arith.divf %2, %3 : vector<288x1xf32>
    %c0_2 = arith.constant 0 : index
    %c0_3 = arith.constant 0 : index
    %5 = vector.load %arg1[%c0_2, %c0_3] : memref<288x1xf32, #tpu.memory_space<vmem>>, vector<288x1xf32>
    tpu.vector_store %arg1[%c0_2, %c0_3], %4 {strides = array<i32>} : memref<288x1xf32, #tpu.memory_space<vmem>>, vector<288x1xf32>,
    return
  }
}

module attributes {stable_mosaic.version = 11 : i64} {
  func.func @kernel(%arg0: i32, %arg1: memref<36x16xf32, #tpu.memory_space<vmem>>, %arg2: memref<16x8xf32, #tpu.memory_space<vmem>>, %arg3: memref<1x8xf32, #tpu.memory_space<vmem>>, %arg4: memref<1x8xf32, #tpu.memory_space<vmem>>, %arg5: memref<36x8xf32, #tpu.memory_space<vmem>>) attributes {dimension_semantics = [#tpu.dimension_semantics<parallel>], iteration_bounds = array<i64: 1>, scalar_prefetch = 0 : i64, scratch_operands = 0 : i64, tpu.core_type = #tpu.core_type<tc>, window_params = [{transform_indices = @transform_0, window_bounds = array<i64: 36, 16>}, {pipeline_mode = #tpu.pipeline_mode<synchronous>, transform_indices = @transform_1, window_bounds = array<i64: 16, 8>}, {pipeline_mode = #tpu.pipeline_mode<synchronous>, transform_indices = @transform_2, window_bounds = array<i64: 1, 8>}, {pipeline_mode = #tpu.pipeline_mode<synchronous>, transform_indices = @transform_3, window_bounds = array<i64: 1, 8>}, {transform_indices = @transform_4, window_bounds = array<i64: 36, 8>}]} {
    %c0 = arith.constant 0 : index
    %c0_0 = arith.constant 0 : index
    %0 = vector.load %arg1[%c0, %c0_0] : memref<36x16xf32, #tpu.memory_space<vmem>>, vector<36x16xf32>
    %c0_1 = arith.constant 0 : index
    %c0_2 = arith.constant 0 : index
    %1 = vector.load %arg2[%c0_1, %c0_2] : memref<16x8xf32, #tpu.memory_space<vmem>>, vector<16x8xf32>
    %cst = arith.constant dense<0.000000e+00> : vector<36x8xf32>
    %2 = tpu.matmul %0, %1, %cst {dimension_numbers = #tpu.dot_dimension_numbers<[1], [0], [0], [1], [0, 0, 1, 1], [], []>} : vector<36x16xf32>, vector<16x8xf32>, vector<36x8xf32> -> vector<36x8xf32>
    %c0_3 = arith.constant 0 : index
    %c0_4 = arith.constant 0 : index
    %3 = vector.load %arg3[%c0_3, %c0_4] : memref<1x8xf32, #tpu.memory_space<vmem>>, vector<1x8xf32>
    %4 = vector.broadcast %3 : vector<1x8xf32> to vector<36x8xf32>
    %5 = arith.mulf %2, %4 : vector<36x8xf32>
    %c0_5 = arith.constant 0 : index
    %c0_6 = arith.constant 0 : index
    %6 = vector.load %arg4[%c0_5, %c0_6] : memref<1x8xf32, #tpu.memory_space<vmem>>, vector<1x8xf32>
    %7 = vector.broadcast %6 : vector<1x8xf32> to vector<36x8xf32>
    %8 = arith.addf %5, %7 : vector<36x8xf32>
    %cst_7 = arith.constant 3.000000e+00 : f32
    %9 = vector.broadcast %cst_7 : f32 to vector<36x8xf32>
    %10 = arith.addf %8, %9 : vector<36x8xf32>
    %cst_8 = arith.constant 0.000000e+00 : f32
    %cst_9 = arith.constant 6.000000e+00 : f32
    %11 = vector.broadcast %cst_8 : f32 to vector<36x8xf32>
    %12 = arith.maximumf %11, %10 : vector<36x8xf32>
    %13 = vector.broadcast %cst_9 : f32 to vector<36x8xf32>
    %14 = arith.minimumf %13, %12 : vector<36x8xf32>
    %cst_10 = arith.constant 0.166666672 : f32
    %15 = vector.broadcast %cst_10 : f32 to vector<36x8xf32>
    %16 = arith.mulf %14, %15 : vector<36x8xf32>
    %17 = arith.mulf %8, %16 : vector<36x8xf32>
    %c0_11 = arith.constant 0 : index
    %c0_12 = arith.constant 0 : index
    %18 = vector.load %arg5[%c0_11, %c0_12] : memref<36x8xf32, #tpu.memory_space<vmem>>, vector<36x8xf32>
    tpu.vector_store %arg5[%c0_11, %c0_12], %17 {strides = array<i32>} : memref<36x8xf32, #tpu.memory_space<vmem>>, vector<36x8xf32>,
    return
  }
  func.func @transform_0(%arg0: i32) -> (i32, i32) {
    %c0_i32 = arith.constant 0 : i32
    %c0_i32_0 = arith.constant 0 : i32
    return %arg0, %c0_i32 : i32, i32
  }
  func.func @transform_1(%arg0: i32) -> (i32, i32) {
    %c0_i32 = arith.constant 0 : i32
    %c0_i32_0 = arith.constant 0 : i32
    %c0_i32_1 = arith.constant 0 : i32
    return %c0_i32, %c0_i32_0 : i32, i32
  }
  func.func @transform_2(%arg0: i32) -> (i32, i32) {
    %c0_i32 = arith.constant 0 : i32
    %c0_i32_0 = arith.constant 0 : i32
    %c0_i32_1 = arith.constant 0 : i32
    return %c0_i32, %c0_i32_0 : i32, i32
  }
  func.func @transform_3(%arg0: i32) -> (i32, i32) {
    %c0_i32 = arith.constant 0 : i32
    %c0_i32_0 = arith.constant 0 : i32
    %c0_i32_1 = arith.constant 0 : i32
    return %c0_i32, %c0_i32_0 : i32, i32
  }
  func.func @transform_4(%arg0: i32) -> (i32, i32) {
    %c0_i32 = arith.constant 0 : i32
    %c0_i32_0 = arith.constant 0 : i32
    return %arg0, %c0_i32 : i32, i32
  }
}

module attributes {stable_mosaic.version = 11 : i64} {
  func.func @kernel(%arg0: i32, %arg1: memref<18x8xf32, #tpu.memory_space<vmem>>, %arg2: memref<8x16xf32, #tpu.memory_space<vmem>>, %arg3: memref<1x16xf32, #tpu.memory_space<vmem>>, %arg4: memref<1x16xf32, #tpu.memory_space<vmem>>, %arg5: memref<18x16xf32, #tpu.memory_space<vmem>>) attributes {dimension_semantics = [#tpu.dimension_semantics<parallel>], iteration_bounds = array<i64: 1>, scalar_prefetch = 0 : i64, scratch_operands = 0 : i64, tpu.core_type = #tpu.core_type<tc>, window_params = [{transform_indices = @transform_0, window_bounds = array<i64: 18, 8>}, {pipeline_mode = #tpu.pipeline_mode<synchronous>, transform_indices = @transform_1, window_bounds = array<i64: 8, 16>}, {pipeline_mode = #tpu.pipeline_mode<synchronous>, transform_indices = @transform_2, window_bounds = array<i64: 1, 16>}, {pipeline_mode = #tpu.pipeline_mode<synchronous>, transform_indices = @transform_3, window_bounds = array<i64: 1, 16>}, {transform_indices = @transform_4, window_bounds = array<i64: 18, 16>}]} {
    %c0 = arith.constant 0 : index
    %c0_0 = arith.constant 0 : index
    %0 = vector.load %arg1[%c0, %c0_0] : memref<18x8xf32, #tpu.memory_space<vmem>>, vector<18x8xf32>
    %c0_1 = arith.constant 0 : index
    %c0_2 = arith.constant 0 : index
    %1 = vector.load %arg2[%c0_1, %c0_2] : memref<8x16xf32, #tpu.memory_space<vmem>>, vector<8x16xf32>
    %cst = arith.constant dense<0.000000e+00> : vector<18x16xf32>
    %2 = tpu.matmul %0, %1, %cst {dimension_numbers = #tpu.dot_dimension_numbers<[1], [0], [0], [1], [0, 0, 1, 1], [], []>} : vector<18x8xf32>, vector<8x16xf32>, vector<18x16xf32> -> vector<18x16xf32>
    %c0_3 = arith.constant 0 : index
    %c0_4 = arith.constant 0 : index
    %3 = vector.load %arg3[%c0_3, %c0_4] : memref<1x16xf32, #tpu.memory_space<vmem>>, vector<1x16xf32>
    %4 = vector.broadcast %3 : vector<1x16xf32> to vector<18x16xf32>
    %5 = arith.mulf %2, %4 : vector<18x16xf32>
    %c0_5 = arith.constant 0 : index
    %c0_6 = arith.constant 0 : index
    %6 = vector.load %arg4[%c0_5, %c0_6] : memref<1x16xf32, #tpu.memory_space<vmem>>, vector<1x16xf32>
    %7 = vector.broadcast %6 : vector<1x16xf32> to vector<18x16xf32>
    %8 = arith.addf %5, %7 : vector<18x16xf32>
    %cst_7 = arith.constant 0.000000e+00 : f32
    %9 = vector.broadcast %cst_7 : f32 to vector<18x16xf32>
    %10 = arith.subf %9, %8 : vector<18x16xf32>
    %11 = math.exp %10 : vector<18x16xf32>
    %cst_8 = arith.constant 1.000000e+00 : f32
    %12 = vector.broadcast %cst_8 : f32 to vector<18x16xf32>
    %13 = arith.addf %12, %11 : vector<18x16xf32>
    %cst_9 = arith.constant 1.000000e+00 : f32
    %14 = vector.broadcast %cst_9 : f32 to vector<18x16xf32>
    %15 = arith.divf %14, %13 : vector<18x16xf32>
    %c0_10 = arith.constant 0 : index
    %c0_11 = arith.constant 0 : index
    %16 = vector.load %arg5[%c0_10, %c0_11] : memref<18x16xf32, #tpu.memory_space<vmem>>, vector<18x16xf32>
    tpu.vector_store %arg5[%c0_10, %c0_11], %15 {strides = array<i32>} : memref<18x16xf32, #tpu.memory_space<vmem>>, vector<18x16xf32>,
    return
  }
  func.func @transform_0(%arg0: i32) -> (i32, i32) {
    %c0_i32 = arith.constant 0 : i32
    %c0_i32_0 = arith.constant 0 : i32
    return %arg0, %c0_i32 : i32, i32
  }
  func.func @transform_1(%arg0: i32) -> (i32, i32) {
    %c0_i32 = arith.constant 0 : i32
    %c0_i32_0 = arith.constant 0 : i32
    %c0_i32_1 = arith.constant 0 : i32
    return %c0_i32, %c0_i32_0 : i32, i32
  }
  func.func @transform_2(%arg0: i32) -> (i32, i32) {
    %c0_i32 = arith.constant 0 : i32
    %c0_i32_0 = arith.constant 0 : i32
    %c0_i32_1 = arith.constant 0 : i32
    return %c0_i32, %c0_i32_0 : i32, i32
  }
  func.func @transform_3(%arg0: i32) -> (i32, i32) {
    %c0_i32 = arith.constant 0 : i32
    %c0_i32_0 = arith.constant 0 : i32
    %c0_i32_1 = arith.constant 0 : i32
    return %c0_i32, %c0_i32_0 : i32, i32
  }
  func.func @transform_4(%arg0: i32) -> (i32, i32) {
    %c0_i32 = arith.constant 0 : i32
    %c0_i32_0 = arith.constant 0 : i32
    return %arg0, %c0_i32 : i32, i32
  }
}

module attributes {stable_mosaic.version = 11 : i64} {
  func.func @_mul_kernel(%arg0: memref<2x9x144xf32, #tpu.memory_space<vmem>>, %arg1: memref<2x1x144xf32, #tpu.memory_space<vmem>>, %arg2: memref<2x9x144xf32, #tpu.memory_space<vmem>>) attributes {dimension_semantics = [], scalar_prefetch = 0 : i64, scratch_operands = 0 : i64, tpu.core_type = #tpu.core_type<tc>} {
    %c0 = arith.constant 0 : index
    %c0_0 = arith.constant 0 : index
    %c0_1 = arith.constant 0 : index
    %0 = vector.load %arg0[%c0, %c0_0, %c0_1] : memref<2x9x144xf32, #tpu.memory_space<vmem>>, vector<2x9x144xf32>
    %c0_2 = arith.constant 0 : index
    %c0_3 = arith.constant 0 : index
    %c0_4 = arith.constant 0 : index
    %1 = vector.load %arg1[%c0_2, %c0_3, %c0_4] : memref<2x1x144xf32, #tpu.memory_space<vmem>>, vector<2x1x144xf32>
    %2 = vector.broadcast %1 : vector<2x1x144xf32> to vector<2x9x144xf32>
    %3 = arith.mulf %0, %2 : vector<2x9x144xf32>
    %c0_5 = arith.constant 0 : index
    %c0_6 = arith.constant 0 : index
    %c0_7 = arith.constant 0 : index
    %4 = vector.load %arg2[%c0_5, %c0_6, %c0_7] : memref<2x9x144xf32, #tpu.memory_space<vmem>>, vector<2x9x144xf32>
    tpu.vector_store %arg2[%c0_5, %c0_6, %c0_7], %3 {strides = array<i32>} : memref<2x9x144xf32, #tpu.memory_space<vmem>>, vector<2x9x144xf32>,
    return
  }
}

module attributes {stable_mosaic.version = 11 : i64} {
  func.func @_mul_kernel(%arg0: memref<18x9x16xf32, #tpu.memory_space<vmem>>, %arg1: memref<18x1x16xf32, #tpu.memory_space<vmem>>, %arg2: memref<18x9x16xf32, #tpu.memory_space<vmem>>) attributes {dimension_semantics = [], scalar_prefetch = 0 : i64, scratch_operands = 0 : i64, tpu.core_type = #tpu.core_type<tc>} {
    %c0 = arith.constant 0 : index
    %c0_0 = arith.constant 0 : index
    %c0_1 = arith.constant 0 : index
    %0 = vector.load %arg0[%c0, %c0_0, %c0_1] : memref<18x9x16xf32, #tpu.memory_space<vmem>>, vector<18x9x16xf32>
    %c0_2 = arith.constant 0 : index
    %c0_3 = arith.constant 0 : index
    %c0_4 = arith.constant 0 : index
    %1 = vector.load %arg1[%c0_2, %c0_3, %c0_4] : memref<18x1x16xf32, #tpu.memory_space<vmem>>, vector<18x1x16xf32>
    %2 = vector.broadcast %1 : vector<18x1x16xf32> to vector<18x9x16xf32>
    %3 = arith.mulf %0, %2 : vector<18x9x16xf32>
    %c0_5 = arith.constant 0 : index
    %c0_6 = arith.constant 0 : index
    %c0_7 = arith.constant 0 : index
    %4 = vector.load %arg2[%c0_5, %c0_6, %c0_7] : memref<18x9x16xf32, #tpu.memory_space<vmem>>, vector<18x9x16xf32>
    tpu.vector_store %arg2[%c0_5, %c0_6, %c0_7], %3 {strides = array<i32>} : memref<18x9x16xf32, #tpu.memory_space<vmem>>, vector<18x9x16xf32>,
    return
  }
}

module attributes {stable_mosaic.version = 11 : i64} {
  func.func @kernel(%arg0: i32, %arg1: memref<162x16xf32, #tpu.memory_space<vmem>>, %arg2: memref<16x32xf32, #tpu.memory_space<vmem>>, %arg3: memref<1x32xf32, #tpu.memory_space<vmem>>, %arg4: memref<1x32xf32, #tpu.memory_space<vmem>>, %arg5: memref<162x32xf32, #tpu.memory_space<vmem>>) attributes {dimension_semantics = [#tpu.dimension_semantics<parallel>], iteration_bounds = array<i64: 1>, scalar_prefetch = 0 : i64, scratch_operands = 0 : i64, tpu.core_type = #tpu.core_type<tc>, window_params = [{transform_indices = @transform_0, window_bounds = array<i64: 162, 16>}, {pipeline_mode = #tpu.pipeline_mode<synchronous>, transform_indices = @transform_1, window_bounds = array<i64: 16, 32>}, {pipeline_mode = #tpu.pipeline_mode<synchronous>, transform_indices = @transform_2, window_bounds = array<i64: 1, 32>}, {pipeline_mode = #tpu.pipeline_mode<synchronous>, transform_indices = @transform_3, window_bounds = array<i64: 1, 32>}, {transform_indices = @transform_4, window_bounds = array<i64: 162, 32>}]} {
    %c0 = arith.constant 0 : index
    %c0_0 = arith.constant 0 : index
    %0 = vector.load %arg1[%c0, %c0_0] : memref<162x16xf32, #tpu.memory_space<vmem>>, vector<162x16xf32>
    %c0_1 = arith.constant 0 : index
    %c0_2 = arith.constant 0 : index
    %1 = vector.load %arg2[%c0_1, %c0_2] : memref<16x32xf32, #tpu.memory_space<vmem>>, vector<16x32xf32>
    %cst = arith.constant dense<0.000000e+00> : vector<162x32xf32>
    %2 = tpu.matmul %0, %1, %cst {dimension_numbers = #tpu.dot_dimension_numbers<[1], [0], [0], [1], [0, 0, 1, 1], [], []>} : vector<162x16xf32>, vector<16x32xf32>, vector<162x32xf32> -> vector<162x32xf32>
    %c0_3 = arith.constant 0 : index
    %c0_4 = arith.constant 0 : index
    %3 = vector.load %arg3[%c0_3, %c0_4] : memref<1x32xf32, #tpu.memory_space<vmem>>, vector<1x32xf32>
    %4 = vector.broadcast %3 : vector<1x32xf32> to vector<162x32xf32>
    %5 = arith.mulf %2, %4 : vector<162x32xf32>
    %c0_5 = arith.constant 0 : index
    %c0_6 = arith.constant 0 : index
    %6 = vector.load %arg4[%c0_5, %c0_6] : memref<1x32xf32, #tpu.memory_space<vmem>>, vector<1x32xf32>
    %7 = vector.broadcast %6 : vector<1x32xf32> to vector<162x32xf32>
    %8 = arith.addf %5, %7 : vector<162x32xf32>
    %c0_7 = arith.constant 0 : index
    %c0_8 = arith.constant 0 : index
    %9 = vector.load %arg5[%c0_7, %c0_8] : memref<162x32xf32, #tpu.memory_space<vmem>>, vector<162x32xf32>
    tpu.vector_store %arg5[%c0_7, %c0_8], %8 {strides = array<i32>} : memref<162x32xf32, #tpu.memory_space<vmem>>, vector<162x32xf32>,
    return
  }
  func.func @transform_0(%arg0: i32) -> (i32, i32) {
    %c0_i32 = arith.constant 0 : i32
    %c0_i32_0 = arith.constant 0 : i32
    return %arg0, %c0_i32 : i32, i32
  }
  func.func @transform_1(%arg0: i32) -> (i32, i32) {
    %c0_i32 = arith.constant 0 : i32
    %c0_i32_0 = arith.constant 0 : i32
    %c0_i32_1 = arith.constant 0 : i32
    return %c0_i32, %c0_i32_0 : i32, i32
  }
  func.func @transform_2(%arg0: i32) -> (i32, i32) {
    %c0_i32 = arith.constant 0 : i32
    %c0_i32_0 = arith.constant 0 : i32
    %c0_i32_1 = arith.constant 0 : i32
    return %c0_i32, %c0_i32_0 : i32, i32
  }
  func.func @transform_3(%arg0: i32) -> (i32, i32) {
    %c0_i32 = arith.constant 0 : i32
    %c0_i32_0 = arith.constant 0 : i32
    %c0_i32_1 = arith.constant 0 : i32
    return %c0_i32, %c0_i32_0 : i32, i32
  }
  func.func @transform_4(%arg0: i32) -> (i32, i32) {
    %c0_i32 = arith.constant 0 : i32
    %c0_i32_0 = arith.constant 0 : i32
    return %arg0, %c0_i32 : i32, i32
  }
}

module attributes {stable_mosaic.version = 11 : i64} {
  func.func @kernel(%arg0: i32, %arg1: memref<162x144xf32, #tpu.memory_space<vmem>>, %arg2: memref<144x32xf32, #tpu.memory_space<vmem>>, %arg3: memref<1x32xf32, #tpu.memory_space<vmem>>, %arg4: memref<1x32xf32, #tpu.memory_space<vmem>>, %arg5: memref<162x32xf32, #tpu.memory_space<vmem>>) attributes {dimension_semantics = [#tpu.dimension_semantics<parallel>], iteration_bounds = array<i64: 1>, scalar_prefetch = 0 : i64, scratch_operands = 0 : i64, tpu.core_type = #tpu.core_type<tc>, window_params = [{transform_indices = @transform_0, window_bounds = array<i64: 162, 144>}, {pipeline_mode = #tpu.pipeline_mode<synchronous>, transform_indices = @transform_1, window_bounds = array<i64: 144, 32>}, {pipeline_mode = #tpu.pipeline_mode<synchronous>, transform_indices = @transform_2, window_bounds = array<i64: 1, 32>}, {pipeline_mode = #tpu.pipeline_mode<synchronous>, transform_indices = @transform_3, window_bounds = array<i64: 1, 32>}, {transform_indices = @transform_4, window_bounds = array<i64: 162, 32>}]} {
    %c0 = arith.constant 0 : index
    %c0_0 = arith.constant 0 : index
    %0 = vector.load %arg1[%c0, %c0_0] : memref<162x144xf32, #tpu.memory_space<vmem>>, vector<162x144xf32>
    %c0_1 = arith.constant 0 : index
    %c0_2 = arith.constant 0 : index
    %1 = vector.load %arg2[%c0_1, %c0_2] : memref<144x32xf32, #tpu.memory_space<vmem>>, vector<144x32xf32>
    %cst = arith.constant dense<0.000000e+00> : vector<162x32xf32>
    %2 = tpu.matmul %0, %1, %cst {dimension_numbers = #tpu.dot_dimension_numbers<[1], [0], [0], [1], [0, 0, 1, 1], [], []>} : vector<162x144xf32>, vector<144x32xf32>, vector<162x32xf32> -> vector<162x32xf32>
    %c0_3 = arith.constant 0 : index
    %c0_4 = arith.constant 0 : index
    %3 = vector.load %arg3[%c0_3, %c0_4] : memref<1x32xf32, #tpu.memory_space<vmem>>, vector<1x32xf32>
    %4 = vector.broadcast %3 : vector<1x32xf32> to vector<162x32xf32>
    %5 = arith.mulf %2, %4 : vector<162x32xf32>
    %c0_5 = arith.constant 0 : index
    %c0_6 = arith.constant 0 : index
    %6 = vector.load %arg4[%c0_5, %c0_6] : memref<1x32xf32, #tpu.memory_space<vmem>>, vector<1x32xf32>
    %7 = vector.broadcast %6 : vector<1x32xf32> to vector<162x32xf32>
    %8 = arith.addf %5, %7 : vector<162x32xf32>
    %c0_7 = arith.constant 0 : index
    %c0_8 = arith.constant 0 : index
    %9 = vector.load %arg5[%c0_7, %c0_8] : memref<162x32xf32, #tpu.memory_space<vmem>>, vector<162x32xf32>
    tpu.vector_store %arg5[%c0_7, %c0_8], %8 {strides = array<i32>} : memref<162x32xf32, #tpu.memory_space<vmem>>, vector<162x32xf32>,
    return
  }
  func.func @transform_0(%arg0: i32) -> (i32, i32) {
    %c0_i32 = arith.constant 0 : i32
    %c0_i32_0 = arith.constant 0 : i32
    return %arg0, %c0_i32 : i32, i32
  }
  func.func @transform_1(%arg0: i32) -> (i32, i32) {
    %c0_i32 = arith.constant 0 : i32
    %c0_i32_0 = arith.constant 0 : i32
    %c0_i32_1 = arith.constant 0 : i32
    return %c0_i32, %c0_i32_0 : i32, i32
  }
  func.func @transform_2(%arg0: i32) -> (i32, i32) {
    %c0_i32 = arith.constant 0 : i32
    %c0_i32_0 = arith.constant 0 : i32
    %c0_i32_1 = arith.constant 0 : i32
    return %c0_i32, %c0_i32_0 : i32, i32
  }
  func.func @transform_3(%arg0: i32) -> (i32, i32) {
    %c0_i32 = arith.constant 0 : i32
    %c0_i32_0 = arith.constant 0 : i32
    %c0_i32_1 = arith.constant 0 : i32
    return %c0_i32, %c0_i32_0 : i32, i32
  }
  func.func @transform_4(%arg0: i32) -> (i32, i32) {
    %c0_i32 = arith.constant 0 : i32
    %c0_i32_0 = arith.constant 0 : i32
    return %arg0, %c0_i32 : i32, i32
  }
}

module attributes {stable_mosaic.version = 11 : i64} {
  func.func @_row_mean_kernel(%arg0: memref<576x9xf32, #tpu.memory_space<vmem>>, %arg1: memref<576x1xf32, #tpu.memory_space<vmem>>) attributes {dimension_semantics = [], scalar_prefetch = 0 : i64, scratch_operands = 0 : i64, tpu.core_type = #tpu.core_type<tc>} {
    %c0 = arith.constant 0 : index
    %c0_0 = arith.constant 0 : index
    %0 = vector.load %arg0[%c0, %c0_0] : memref<576x9xf32, #tpu.memory_space<vmem>>, vector<576x9xf32>
    %cst = arith.constant dense<0.000000e+00> : vector<576xf32>
    %1 = vector.multi_reduction <add>, %0, %cst [1] : vector<576x9xf32> to vector<576xf32>
    %2 = vector.shape_cast %1 : vector<576xf32> to vector<576x1xf32>
    %cst_1 = arith.constant 9.000000e+00 : f32
    %3 = vector.broadcast %cst_1 : f32 to vector<576x1xf32>
    %4 = arith.divf %2, %3 : vector<576x1xf32>
    %c0_2 = arith.constant 0 : index
    %c0_3 = arith.constant 0 : index
    %5 = vector.load %arg1[%c0_2, %c0_3] : memref<576x1xf32, #tpu.memory_space<vmem>>, vector<576x1xf32>
    tpu.vector_store %arg1[%c0_2, %c0_3], %4 {strides = array<i32>} : memref<576x1xf32, #tpu.memory_space<vmem>>, vector<576x1xf32>,
    return
  }
}

module attributes {stable_mosaic.version = 11 : i64} {
  func.func @kernel(%arg0: i32, %arg1: memref<36x32xf32, #tpu.memory_space<vmem>>, %arg2: memref<32x8xf32, #tpu.memory_space<vmem>>, %arg3: memref<1x8xf32, #tpu.memory_space<vmem>>, %arg4: memref<1x8xf32, #tpu.memory_space<vmem>>, %arg5: memref<36x8xf32, #tpu.memory_space<vmem>>) attributes {dimension_semantics = [#tpu.dimension_semantics<parallel>], iteration_bounds = array<i64: 1>, scalar_prefetch = 0 : i64, scratch_operands = 0 : i64, tpu.core_type = #tpu.core_type<tc>, window_params = [{transform_indices = @transform_0, window_bounds = array<i64: 36, 32>}, {pipeline_mode = #tpu.pipeline_mode<synchronous>, transform_indices = @transform_1, window_bounds = array<i64: 32, 8>}, {pipeline_mode = #tpu.pipeline_mode<synchronous>, transform_indices = @transform_2, window_bounds = array<i64: 1, 8>}, {pipeline_mode = #tpu.pipeline_mode<synchronous>, transform_indices = @transform_3, window_bounds = array<i64: 1, 8>}, {transform_indices = @transform_4, window_bounds = array<i64: 36, 8>}]} {
    %c0 = arith.constant 0 : index
    %c0_0 = arith.constant 0 : index
    %0 = vector.load %arg1[%c0, %c0_0] : memref<36x32xf32, #tpu.memory_space<vmem>>, vector<36x32xf32>
    %c0_1 = arith.constant 0 : index
    %c0_2 = arith.constant 0 : index
    %1 = vector.load %arg2[%c0_1, %c0_2] : memref<32x8xf32, #tpu.memory_space<vmem>>, vector<32x8xf32>
    %cst = arith.constant dense<0.000000e+00> : vector<36x8xf32>
    %2 = tpu.matmul %0, %1, %cst {dimension_numbers = #tpu.dot_dimension_numbers<[1], [0], [0], [1], [0, 0, 1, 1], [], []>} : vector<36x32xf32>, vector<32x8xf32>, vector<36x8xf32> -> vector<36x8xf32>
    %c0_3 = arith.constant 0 : index
    %c0_4 = arith.constant 0 : index
    %3 = vector.load %arg3[%c0_3, %c0_4] : memref<1x8xf32, #tpu.memory_space<vmem>>, vector<1x8xf32>
    %4 = vector.broadcast %3 : vector<1x8xf32> to vector<36x8xf32>
    %5 = arith.mulf %2, %4 : vector<36x8xf32>
    %c0_5 = arith.constant 0 : index
    %c0_6 = arith.constant 0 : index
    %6 = vector.load %arg4[%c0_5, %c0_6] : memref<1x8xf32, #tpu.memory_space<vmem>>, vector<1x8xf32>
    %7 = vector.broadcast %6 : vector<1x8xf32> to vector<36x8xf32>
    %8 = arith.addf %5, %7 : vector<36x8xf32>
    %cst_7 = arith.constant 3.000000e+00 : f32
    %9 = vector.broadcast %cst_7 : f32 to vector<36x8xf32>
    %10 = arith.addf %8, %9 : vector<36x8xf32>
    %cst_8 = arith.constant 0.000000e+00 : f32
    %cst_9 = arith.constant 6.000000e+00 : f32
    %11 = vector.broadcast %cst_8 : f32 to vector<36x8xf32>
    %12 = arith.maximumf %11, %10 : vector<36x8xf32>
    %13 = vector.broadcast %cst_9 : f32 to vector<36x8xf32>
    %14 = arith.minimumf %13, %12 : vector<36x8xf32>
    %cst_10 = arith.constant 0.166666672 : f32
    %15 = vector.broadcast %cst_10 : f32 to vector<36x8xf32>
    %16 = arith.mulf %14, %15 : vector<36x8xf32>
    %17 = arith.mulf %8, %16 : vector<36x8xf32>
    %c0_11 = arith.constant 0 : index
    %c0_12 = arith.constant 0 : index
    %18 = vector.load %arg5[%c0_11, %c0_12] : memref<36x8xf32, #tpu.memory_space<vmem>>, vector<36x8xf32>
    tpu.vector_store %arg5[%c0_11, %c0_12], %17 {strides = array<i32>} : memref<36x8xf32, #tpu.memory_space<vmem>>, vector<36x8xf32>,
    return
  }
  func.func @transform_0(%arg0: i32) -> (i32, i32) {
    %c0_i32 = arith.constant 0 : i32
    %c0_i32_0 = arith.constant 0 : i32
    return %arg0, %c0_i32 : i32, i32
  }
  func.func @transform_1(%arg0: i32) -> (i32, i32) {
    %c0_i32 = arith.constant 0 : i32
    %c0_i32_0 = arith.constant 0 : i32
    %c0_i32_1 = arith.constant 0 : i32
    return %c0_i32, %c0_i32_0 : i32, i32
  }
  func.func @transform_2(%arg0: i32) -> (i32, i32) {
    %c0_i32 = arith.constant 0 : i32
    %c0_i32_0 = arith.constant 0 : i32
    %c0_i32_1 = arith.constant 0 : i32
    return %c0_i32, %c0_i32_0 : i32, i32
  }
  func.func @transform_3(%arg0: i32) -> (i32, i32) {
    %c0_i32 = arith.constant 0 : i32
    %c0_i32_0 = arith.constant 0 : i32
    %c0_i32_1 = arith.constant 0 : i32
    return %c0_i32, %c0_i32_0 : i32, i32
  }
  func.func @transform_4(%arg0: i32) -> (i32, i32) {
    %c0_i32 = arith.constant 0 : i32
    %c0_i32_0 = arith.constant 0 : i32
    return %arg0, %c0_i32 : i32, i32
  }
}

module attributes {stable_mosaic.version = 11 : i64} {
  func.func @kernel(%arg0: i32, %arg1: memref<18x8xf32, #tpu.memory_space<vmem>>, %arg2: memref<8x32xf32, #tpu.memory_space<vmem>>, %arg3: memref<1x32xf32, #tpu.memory_space<vmem>>, %arg4: memref<1x32xf32, #tpu.memory_space<vmem>>, %arg5: memref<18x32xf32, #tpu.memory_space<vmem>>) attributes {dimension_semantics = [#tpu.dimension_semantics<parallel>], iteration_bounds = array<i64: 1>, scalar_prefetch = 0 : i64, scratch_operands = 0 : i64, tpu.core_type = #tpu.core_type<tc>, window_params = [{transform_indices = @transform_0, window_bounds = array<i64: 18, 8>}, {pipeline_mode = #tpu.pipeline_mode<synchronous>, transform_indices = @transform_1, window_bounds = array<i64: 8, 32>}, {pipeline_mode = #tpu.pipeline_mode<synchronous>, transform_indices = @transform_2, window_bounds = array<i64: 1, 32>}, {pipeline_mode = #tpu.pipeline_mode<synchronous>, transform_indices = @transform_3, window_bounds = array<i64: 1, 32>}, {transform_indices = @transform_4, window_bounds = array<i64: 18, 32>}]} {
    %c0 = arith.constant 0 : index
    %c0_0 = arith.constant 0 : index
    %0 = vector.load %arg1[%c0, %c0_0] : memref<18x8xf32, #tpu.memory_space<vmem>>, vector<18x8xf32>
    %c0_1 = arith.constant 0 : index
    %c0_2 = arith.constant 0 : index
    %1 = vector.load %arg2[%c0_1, %c0_2] : memref<8x32xf32, #tpu.memory_space<vmem>>, vector<8x32xf32>
    %cst = arith.constant dense<0.000000e+00> : vector<18x32xf32>
    %2 = tpu.matmul %0, %1, %cst {dimension_numbers = #tpu.dot_dimension_numbers<[1], [0], [0], [1], [0, 0, 1, 1], [], []>} : vector<18x8xf32>, vector<8x32xf32>, vector<18x32xf32> -> vector<18x32xf32>
    %c0_3 = arith.constant 0 : index
    %c0_4 = arith.constant 0 : index
    %3 = vector.load %arg3[%c0_3, %c0_4] : memref<1x32xf32, #tpu.memory_space<vmem>>, vector<1x32xf32>
    %4 = vector.broadcast %3 : vector<1x32xf32> to vector<18x32xf32>
    %5 = arith.mulf %2, %4 : vector<18x32xf32>
    %c0_5 = arith.constant 0 : index
    %c0_6 = arith.constant 0 : index
    %6 = vector.load %arg4[%c0_5, %c0_6] : memref<1x32xf32, #tpu.memory_space<vmem>>, vector<1x32xf32>
    %7 = vector.broadcast %6 : vector<1x32xf32> to vector<18x32xf32>
    %8 = arith.addf %5, %7 : vector<18x32xf32>
    %cst_7 = arith.constant 0.000000e+00 : f32
    %9 = vector.broadcast %cst_7 : f32 to vector<18x32xf32>
    %10 = arith.subf %9, %8 : vector<18x32xf32>
    %11 = math.exp %10 : vector<18x32xf32>
    %cst_8 = arith.constant 1.000000e+00 : f32
    %12 = vector.broadcast %cst_8 : f32 to vector<18x32xf32>
    %13 = arith.addf %12, %11 : vector<18x32xf32>
    %cst_9 = arith.constant 1.000000e+00 : f32
    %14 = vector.broadcast %cst_9 : f32 to vector<18x32xf32>
    %15 = arith.divf %14, %13 : vector<18x32xf32>
    %c0_10 = arith.constant 0 : index
    %c0_11 = arith.constant 0 : index
    %16 = vector.load %arg5[%c0_10, %c0_11] : memref<18x32xf32, #tpu.memory_space<vmem>>, vector<18x32xf32>
    tpu.vector_store %arg5[%c0_10, %c0_11], %15 {strides = array<i32>} : memref<18x32xf32, #tpu.memory_space<vmem>>, vector<18x32xf32>,
    return
  }
  func.func @transform_0(%arg0: i32) -> (i32, i32) {
    %c0_i32 = arith.constant 0 : i32
    %c0_i32_0 = arith.constant 0 : i32
    return %arg0, %c0_i32 : i32, i32
  }
  func.func @transform_1(%arg0: i32) -> (i32, i32) {
    %c0_i32 = arith.constant 0 : i32
    %c0_i32_0 = arith.constant 0 : i32
    %c0_i32_1 = arith.constant 0 : i32
    return %c0_i32, %c0_i32_0 : i32, i32
  }
  func.func @transform_2(%arg0: i32) -> (i32, i32) {
    %c0_i32 = arith.constant 0 : i32
    %c0_i32_0 = arith.constant 0 : i32
    %c0_i32_1 = arith.constant 0 : i32
    return %c0_i32, %c0_i32_0 : i32, i32
  }
  func.func @transform_3(%arg0: i32) -> (i32, i32) {
    %c0_i32 = arith.constant 0 : i32
    %c0_i32_0 = arith.constant 0 : i32
    %c0_i32_1 = arith.constant 0 : i32
    return %c0_i32, %c0_i32_0 : i32, i32
  }
  func.func @transform_4(%arg0: i32) -> (i32, i32) {
    %c0_i32 = arith.constant 0 : i32
    %c0_i32_0 = arith.constant 0 : i32
    return %arg0, %c0_i32 : i32, i32
  }
}

module attributes {stable_mosaic.version = 11 : i64} {
  func.func @_mul_kernel(%arg0: memref<18x9x32xf32, #tpu.memory_space<vmem>>, %arg1: memref<18x1x32xf32, #tpu.memory_space<vmem>>, %arg2: memref<18x9x32xf32, #tpu.memory_space<vmem>>) attributes {dimension_semantics = [], scalar_prefetch = 0 : i64, scratch_operands = 0 : i64, tpu.core_type = #tpu.core_type<tc>} {
    %c0 = arith.constant 0 : index
    %c0_0 = arith.constant 0 : index
    %c0_1 = arith.constant 0 : index
    %0 = vector.load %arg0[%c0, %c0_0, %c0_1] : memref<18x9x32xf32, #tpu.memory_space<vmem>>, vector<18x9x32xf32>
    %c0_2 = arith.constant 0 : index
    %c0_3 = arith.constant 0 : index
    %c0_4 = arith.constant 0 : index
    %1 = vector.load %arg1[%c0_2, %c0_3, %c0_4] : memref<18x1x32xf32, #tpu.memory_space<vmem>>, vector<18x1x32xf32>
    %2 = vector.broadcast %1 : vector<18x1x32xf32> to vector<18x9x32xf32>
    %3 = arith.mulf %0, %2 : vector<18x9x32xf32>
    %c0_5 = arith.constant 0 : index
    %c0_6 = arith.constant 0 : index
    %c0_7 = arith.constant 0 : index
    %4 = vector.load %arg2[%c0_5, %c0_6, %c0_7] : memref<18x9x32xf32, #tpu.memory_space<vmem>>, vector<18x9x32xf32>
    tpu.vector_store %arg2[%c0_5, %c0_6, %c0_7], %3 {strides = array<i32>} : memref<18x9x32xf32, #tpu.memory_space<vmem>>, vector<18x9x32xf32>,
    return
  }
}

module attributes {stable_mosaic.version = 11 : i64} {
  func.func @_mask_res_silu_kernel(%arg0: memref<2x9x288xf32, #tpu.memory_space<vmem>>, %arg1: memref<2x1x288xf32, #tpu.memory_space<vmem>>, %arg2: memref<2x9x288xf32, #tpu.memory_space<vmem>>, %arg3: memref<2x9x288xf32, #tpu.memory_space<vmem>>) attributes {dimension_semantics = [], scalar_prefetch = 0 : i64, scratch_operands = 0 : i64, tpu.core_type = #tpu.core_type<tc>} {
    %c0 = arith.constant 0 : index
    %c0_0 = arith.constant 0 : index
    %c0_1 = arith.constant 0 : index
    %0 = vector.load %arg0[%c0, %c0_0, %c0_1] : memref<2x9x288xf32, #tpu.memory_space<vmem>>, vector<2x9x288xf32>
    %c0_2 = arith.constant 0 : index
    %c0_3 = arith.constant 0 : index
    %c0_4 = arith.constant 0 : index
    %1 = vector.load %arg1[%c0_2, %c0_3, %c0_4] : memref<2x1x288xf32, #tpu.memory_space<vmem>>, vector<2x1x288xf32>
    %2 = vector.broadcast %1 : vector<2x1x288xf32> to vector<2x9x288xf32>
    %3 = arith.mulf %0, %2 : vector<2x9x288xf32>
    %c0_5 = arith.constant 0 : index
    %c0_6 = arith.constant 0 : index
    %c0_7 = arith.constant 0 : index
    %4 = vector.load %arg2[%c0_5, %c0_6, %c0_7] : memref<2x9x288xf32, #tpu.memory_space<vmem>>, vector<2x9x288xf32>
    %5 = arith.addf %3, %4 : vector<2x9x288xf32>
    %cst = arith.constant 0.000000e+00 : f32
    %6 = vector.broadcast %cst : f32 to vector<2x9x288xf32>
    %7 = arith.subf %6, %5 : vector<2x9x288xf32>
    %8 = math.exp %7 : vector<2x9x288xf32>
    %cst_8 = arith.constant 1.000000e+00 : f32
    %9 = vector.broadcast %cst_8 : f32 to vector<2x9x288xf32>
    %10 = arith.addf %9, %8 : vector<2x9x288xf32>
    %cst_9 = arith.constant 1.000000e+00 : f32
    %11 = vector.broadcast %cst_9 : f32 to vector<2x9x288xf32>
    %12 = arith.divf %11, %10 : vector<2x9x288xf32>
    %13 = arith.mulf %5, %12 : vector<2x9x288xf32>
    %c0_10 = arith.constant 0 : index
    %c0_11 = arith.constant 0 : index
    %c0_12 = arith.constant 0 : index
    %14 = vector.load %arg3[%c0_10, %c0_11, %c0_12] : memref<2x9x288xf32, #tpu.memory_space<vmem>>, vector<2x9x288xf32>
    tpu.vector_store %arg3[%c0_10, %c0_11, %c0_12], %13 {strides = array<i32>} : memref<2x9x288xf32, #tpu.memory_space<vmem>>, vector<2x9x288xf32>,
    return
  }
}

module attributes {stable_mosaic.version = 11 : i64} {
  func.func @kernel(%arg0: i32, %arg1: memref<162x32xf32, #tpu.memory_space<vmem>>, %arg2: memref<32x32xf32, #tpu.memory_space<vmem>>, %arg3: memref<1x32xf32, #tpu.memory_space<vmem>>, %arg4: memref<1x32xf32, #tpu.memory_space<vmem>>, %arg5: memref<162x32xf32, #tpu.memory_space<vmem>>) attributes {dimension_semantics = [#tpu.dimension_semantics<parallel>], iteration_bounds = array<i64: 1>, scalar_prefetch = 0 : i64, scratch_operands = 0 : i64, tpu.core_type = #tpu.core_type<tc>, window_params = [{transform_indices = @transform_0, window_bounds = array<i64: 162, 32>}, {pipeline_mode = #tpu.pipeline_mode<synchronous>, transform_indices = @transform_1, window_bounds = array<i64: 32, 32>}, {pipeline_mode = #tpu.pipeline_mode<synchronous>, transform_indices = @transform_2, window_bounds = array<i64: 1, 32>}, {pipeline_mode = #tpu.pipeline_mode<synchronous>, transform_indices = @transform_3, window_bounds = array<i64: 1, 32>}, {transform_indices = @transform_4, window_bounds = array<i64: 162, 32>}]} {
    %c0 = arith.constant 0 : index
    %c0_0 = arith.constant 0 : index
    %0 = vector.load %arg1[%c0, %c0_0] : memref<162x32xf32, #tpu.memory_space<vmem>>, vector<162x32xf32>
    %c0_1 = arith.constant 0 : index
    %c0_2 = arith.constant 0 : index
    %1 = vector.load %arg2[%c0_1, %c0_2] : memref<32x32xf32, #tpu.memory_space<vmem>>, vector<32x32xf32>
    %cst = arith.constant dense<0.000000e+00> : vector<162x32xf32>
    %2 = tpu.matmul %0, %1, %cst {dimension_numbers = #tpu.dot_dimension_numbers<[1], [0], [0], [1], [0, 0, 1, 1], [], []>} : vector<162x32xf32>, vector<32x32xf32>, vector<162x32xf32> -> vector<162x32xf32>
    %c0_3 = arith.constant 0 : index
    %c0_4 = arith.constant 0 : index
    %3 = vector.load %arg3[%c0_3, %c0_4] : memref<1x32xf32, #tpu.memory_space<vmem>>, vector<1x32xf32>
    %4 = vector.broadcast %3 : vector<1x32xf32> to vector<162x32xf32>
    %5 = arith.mulf %2, %4 : vector<162x32xf32>
    %c0_5 = arith.constant 0 : index
    %c0_6 = arith.constant 0 : index
    %6 = vector.load %arg4[%c0_5, %c0_6] : memref<1x32xf32, #tpu.memory_space<vmem>>, vector<1x32xf32>
    %7 = vector.broadcast %6 : vector<1x32xf32> to vector<162x32xf32>
    %8 = arith.addf %5, %7 : vector<162x32xf32>
    %cst_7 = arith.constant 0.000000e+00 : f32
    %9 = vector.broadcast %cst_7 : f32 to vector<162x32xf32>
    %10 = arith.subf %9, %8 : vector<162x32xf32>
    %11 = math.exp %10 : vector<162x32xf32>
    %cst_8 = arith.constant 1.000000e+00 : f32
    %12 = vector.broadcast %cst_8 : f32 to vector<162x32xf32>
    %13 = arith.addf %12, %11 : vector<162x32xf32>
    %cst_9 = arith.constant 1.000000e+00 : f32
    %14 = vector.broadcast %cst_9 : f32 to vector<162x32xf32>
    %15 = arith.divf %14, %13 : vector<162x32xf32>
    %16 = arith.mulf %8, %15 : vector<162x32xf32>
    %c0_10 = arith.constant 0 : index
    %c0_11 = arith.constant 0 : index
    %17 = vector.load %arg5[%c0_10, %c0_11] : memref<162x32xf32, #tpu.memory_space<vmem>>, vector<162x32xf32>
    tpu.vector_store %arg5[%c0_10, %c0_11], %16 {strides = array<i32>} : memref<162x32xf32, #tpu.memory_space<vmem>>, vector<162x32xf32>,
    return
  }
  func.func @transform_0(%arg0: i32) -> (i32, i32) {
    %c0_i32 = arith.constant 0 : i32
    %c0_i32_0 = arith.constant 0 : i32
    return %arg0, %c0_i32 : i32, i32
  }
  func.func @transform_1(%arg0: i32) -> (i32, i32) {
    %c0_i32 = arith.constant 0 : i32
    %c0_i32_0 = arith.constant 0 : i32
    %c0_i32_1 = arith.constant 0 : i32
    return %c0_i32, %c0_i32_0 : i32, i32
  }
  func.func @transform_2(%arg0: i32) -> (i32, i32) {
    %c0_i32 = arith.constant 0 : i32
    %c0_i32_0 = arith.constant 0 : i32
    %c0_i32_1 = arith.constant 0 : i32
    return %c0_i32, %c0_i32_0 : i32, i32
  }
  func.func @transform_3(%arg0: i32) -> (i32, i32) {
    %c0_i32 = arith.constant 0 : i32
    %c0_i32_0 = arith.constant 0 : i32
    %c0_i32_1 = arith.constant 0 : i32
    return %c0_i32, %c0_i32_0 : i32, i32
  }
  func.func @transform_4(%arg0: i32) -> (i32, i32) {
    %c0_i32 = arith.constant 0 : i32
    %c0_i32_0 = arith.constant 0 : i32
    return %arg0, %c0_i32 : i32, i32
  }
}

module attributes {stable_mosaic.version = 11 : i64} {
  func.func @_row_mean_kernel(%arg0: memref<64x81xf32, #tpu.memory_space<vmem>>, %arg1: memref<64x1xf32, #tpu.memory_space<vmem>>) attributes {dimension_semantics = [], scalar_prefetch = 0 : i64, scratch_operands = 0 : i64, tpu.core_type = #tpu.core_type<tc>} {
    %c0 = arith.constant 0 : index
    %c0_0 = arith.constant 0 : index
    %0 = vector.load %arg0[%c0, %c0_0] : memref<64x81xf32, #tpu.memory_space<vmem>>, vector<64x81xf32>
    %cst = arith.constant dense<0.000000e+00> : vector<64xf32>
    %1 = vector.multi_reduction <add>, %0, %cst [1] : vector<64x81xf32> to vector<64xf32>
    %2 = vector.shape_cast %1 : vector<64xf32> to vector<64x1xf32>
    %cst_1 = arith.constant 8.100000e+01 : f32
    %3 = vector.broadcast %cst_1 : f32 to vector<64x1xf32>
    %4 = arith.divf %2, %3 : vector<64x1xf32>
    %c0_2 = arith.constant 0 : index
    %c0_3 = arith.constant 0 : index
    %5 = vector.load %arg1[%c0_2, %c0_3] : memref<64x1xf32, #tpu.memory_space<vmem>>, vector<64x1xf32>
    tpu.vector_store %arg1[%c0_2, %c0_3], %4 {strides = array<i32>} : memref<64x1xf32, #tpu.memory_space<vmem>>, vector<64x1xf32>,
    return
  }
}

</mosaic_0001>

<llo_original>
// kernel: _lambda_.22
$region0: #{_lambda_.22}
  #allocation0 [shape = 'u32[]', space=smem, size = 0x4, offset = 0x4, fixed_abs, tag = 'smem constant byte address 0x4 - core index']
  #allocation1 [shape = 'u32[144,128]{1,0:T(1,128)}', space=vmem, size = 0x12000, scoped, tag = 'internal scratch']
  %s0 = inlined_call_operand.vmem [shape: f32[2,81,2], index: 0, kind: input, shape index: {}]
  %s1 = inlined_call_operand.vmem [shape: f32[2,1,2], index: 1, kind: input, shape index: {}]
  %s2 = inlined_call_operand.vmem [shape: f32[2,81], index: 2, kind: output, shape index: {}]
  %s3 = sld [smem:[#allocation0]]
  $region18: #{_lambda_.22} parent=0
    _
  %s5 = ssub.s32 1, %s3
  %s6 = scalar_select 0, %s5, %s3
  // Predicated region
  $region2: #{_lambda_.22} parent=0 // pred_check
    _
  $region3: #{_lambda_.22} parent=0 // pred_check_branch
    %8 = sbr.rel (0) target = $region5
  $region4: #{_lambda_.22} parent=0 // pred_region
    _
  $region5: #{_lambda_.22} parent=0 // pred_fallthru
    _
  // Predicated region
  $region6: #{_lambda_.22} parent=0 // pred_check
    _
  $region7: #{_lambda_.22} parent=0 // pred_check_branch
    %10 = sbr.rel (0) target = $region9
  $region8: #{_lambda_.22} parent=0 // pred_region
    _
  $region9: #{_lambda_.22} parent=0 // pred_fallthru
    _
  %v11 = vld [vmem:[%s0] sm:$0xff]
  %v12 = vld [vmem:[%s0 + $0x8] sm:$0xff]
  %v13 = vld [vmem:[%s0 + $0x10] sm:$0xff]
  %v14 = vld [vmem:[%s0 + $0x18] sm:$0xff]
  %v15 = vld [vmem:[%s0 + $0x20] sm:$0xff]
  %v16 = vld [vmem:[%s0 + $0x28] sm:$0xff]
  %v17 = vld [vmem:[%s0 + $0x30] sm:$0xff]
  %v18 = vld [vmem:[%s0 + $0x38] sm:$0xff]
  %v19 = vld [vmem:[%s0 + $0x40] sm:$0xff]
  %v20 = vld [vmem:[%s0 + $0x48] sm:$0xff]
  %v21 = vld [vmem:[%s0 + $0x50] sm:$0x1]
  %v22 = vld [vmem:[%s0 + $0x58] sm:$0xff]
  %v23 = vld [vmem:[%s0 + $0x60] sm:$0xff]
  %v24 = vld [vmem:[%s0 + $0x68] sm:$0xff]
  %v25 = vld [vmem:[%s0 + $0x70] sm:$0xff]
  %v26 = vld [vmem:[%s0 + $0x78] sm:$0xff]
  %v27 = vld [vmem:[%s0 + $0x80] sm:$0xff]
  %v28 = vld [vmem:[%s0 + $0x88] sm:$0xff]
  %v29 = vld [vmem:[%s0 + $0x90] sm:$0xff]
  %v30 = vld [vmem:[%s0 + $0x98] sm:$0xff]
  %v31 = vld [vmem:[%s0 + $0xa0] sm:$0xff]
  %v32 = vld [vmem:[%s0 + $0xa8] sm:$0x1]
  %v33 = vld [vmem:[%s1] sm:$0x1]
  %v34 = vld [vmem:[%s1 + $0x1] sm:$0x1]
  %v37 = vlaneseq
  %v38 = vshrl.u32 %v37, 7
  %v39 = vsub.s32 0, %v38
  %v40 = vrot.slane %v33, %v39
  %v41 = vlaneseq
  %v42 = vshrl.u32 %v41, 7
  %v43 = vsub.s32 0, %v42
  %v44 = vrot.slane %v34, %v43
  %v47 = vsub.f32 %v11, %v40
  %v48 = vsub.f32 %v12, %v40
  %v49 = vsub.f32 %v13, %v40
  %v50 = vsub.f32 %v14, %v40
  %v51 = vsub.f32 %v15, %v40
  %v52 = vsub.f32 %v16, %v40
  %v53 = vsub.f32 %v17, %v40
  %v54 = vsub.f32 %v18, %v40
  %v55 = vsub.f32 %v19, %v40
  %v56 = vsub.f32 %v20, %v40
  %v57 = vsub.f32 %v21, %v40
  %v58 = vsub.f32 %v22, %v44
  %v59 = vsub.f32 %v23, %v44
  %v60 = vsub.f32 %v24, %v44
  %v61 = vsub.f32 %v25, %v44
  %v62 = vsub.f32 %v26, %v44
  %v63 = vsub.f32 %v27, %v44
  %v64 = vsub.f32 %v28, %v44
  %v65 = vsub.f32 %v29, %v44
  %v66 = vsub.f32 %v30, %v44
  %v67 = vsub.f32 %v31, %v44
  %v68 = vsub.f32 %v32, %v44
  %v69 = vmul.f32 %v47, %v47
  %v70 = vmul.f32 %v48, %v48
  %v71 = vmul.f32 %v49, %v49
  %v72 = vmul.f32 %v50, %v50
  %v73 = vmul.f32 %v51, %v51
  %v74 = vmul.f32 %v52, %v52
  %v75 = vmul.f32 %v53, %v53
  %v76 = vmul.f32 %v54, %v54
  %v77 = vmul.f32 %v55, %v55
  %v78 = vmul.f32 %v56, %v56
  %v79 = vmul.f32 %v57, %v57
  %v80 = vmul.f32 %v58, %v58
  %v81 = vmul.f32 %v59, %v59
  %v82 = vmul.f32 %v60, %v60
  %v83 = vmul.f32 %v61, %v61
  %v84 = vmul.f32 %v62, %v62
  %v85 = vmul.f32 %v63, %v63
  %v86 = vmul.f32 %v64, %v64
  %v87 = vmul.f32 %v65, %v65
  %v88 = vmul.f32 %v66, %v66
  %v89 = vmul.f32 %v67, %v67
  %v90 = vmul.f32 %v68, %v68
  %vm91 = vcmask 15360
  %v92 = vsel %vm91, %v69, 0.0
  %93 = vadd.xlane.f32.xlu0 %v92
  %v94 = vpop.xlane.xlu0 %93
  %v95 = vsel %vm91, %v70, 0.0
  %96 = vadd.xlane.f32.xlu0 %v95
  %v97 = vpop.xlane.xlu0 %96
  %v98 = vsel %vm91, %v71, 0.0
  %99 = vadd.xlane.f32.xlu0 %v98
  %v100 = vpop.xlane.xlu0 %99
  %v101 = vsel %vm91, %v72, 0.0
  %102 = vadd.xlane.f32.xlu0 %v101
  %v103 = vpop.xlane.xlu0 %102
  %v104 = vsel %vm91, %v73, 0.0
  %105 = vadd.xlane.f32.xlu0 %v104
  %v106 = vpop.xlane.xlu0 %105
  %v107 = vsel %vm91, %v74, 0.0
  %108 = vadd.xlane.f32.xlu0 %v107
  %v109 = vpop.xlane.xlu0 %108
  %v110 = vsel %vm91, %v75, 0.0
  %111 = vadd.xlane.f32.xlu0 %v110
  %v112 = vpop.xlane.xlu0 %111
  %v113 = vsel %vm91, %v76, 0.0
  %114 = vadd.xlane.f32.xlu0 %v113
  %v115 = vpop.xlane.xlu0 %114
  %v116 = vsel %vm91, %v77, 0.0
  %117 = vadd.xlane.f32.xlu0 %v116
  %v118 = vpop.xlane.xlu0 %117
  %v119 = vsel %vm91, %v78, 0.0
  %120 = vadd.xlane.f32.xlu0 %v119
  %v121 = vpop.xlane.xlu0 %120
  %vm122 = vcmask 8192
  %v123 = vsel %vm122, %v79, 0.0
  %124 = vadd.xlane.f32.xlu0 %v123
  %v125 = vpop.xlane.xlu0 %124
  %v126 = vsel %vm91, %v80, 0.0
  %127 = vadd.xlane.f32.xlu0 %v126
  %v128 = vpop.xlane.xlu0 %127
  %v129 = vsel %vm91, %v81, 0.0
  %130 = vadd.xlane.f32.xlu0 %v129
  %v131 = vpop.xlane.xlu0 %130
  %v132 = vsel %vm91, %v82, 0.0
  %133 = vadd.xlane.f32.xlu0 %v132
  %v134 = vpop.xlane.xlu0 %133
  %v135 = vsel %vm91, %v83, 0.0
  %136 = vadd.xlane.f32.xlu0 %v135
  %v137 = vpop.xlane.xlu0 %136
  %v138 = vsel %vm91, %v84, 0.0
  %139 = vadd.xlane.f32.xlu0 %v138
  %v140 = vpop.xlane.xlu0 %139
  %v141 = vsel %vm91, %v85, 0.0
  %142 = vadd.xlane.f32.xlu0 %v141
  %v143 = vpop.xlane.xlu0 %142
  %v144 = vsel %vm91, %v86, 0.0
  %145 = vadd.xlane.f32.xlu0 %v144
  %v146 = vpop.xlane.xlu0 %145
  %v147 = vsel %vm91, %v87, 0.0
  %148 = vadd.xlane.f32.xlu0 %v147
  %v149 = vpop.xlane.xlu0 %148
  %v150 = vsel %vm91, %v88, 0.0
  %151 = vadd.xlane.f32.xlu0 %v150
  %v152 = vpop.xlane.xlu0 %151
  %v153 = vsel %vm91, %v89, 0.0
  %154 = vadd.xlane.f32.xlu0 %v153
  %v155 = vpop.xlane.xlu0 %154
  %v156 = vsel %vm122, %v90, 0.0
  %157 = vadd.xlane.f32.xlu0 %v156
  %v158 = vpop.xlane.xlu0 %157
  %v159 = vrsqrt.pop %v94
  %v160 = vmul.f32 %v94, %v159
  %vm161 = vcmp.eq.f32.partialorder %v94, inf
  %v162 = vsel %vm161, %v94, %v160
  %vm163 = vcmp.eq.f32.partialorder %v94, 0.0
  %v164 = vand.u32 %v94, 2147483648
  %v165 = vsel %vm163, %v164, %v162
  %v166 = vrsqrt.pop %v97
  %v167 = vmul.f32 %v97, %v166
  %vm168 = vcmp.eq.f32.partialorder %v97, inf
  %v169 = vsel %vm168, %v97, %v167
  %vm170 = vcmp.eq.f32.partialorder %v97, 0.0
  %v171 = vand.u32 %v97, 2147483648
  %v172 = vsel %vm170, %v171, %v169
  %v173 = vrsqrt.pop %v100
  %v174 = vmul.f32 %v100, %v173
  %vm175 = vcmp.eq.f32.partialorder %v100, inf
  %v176 = vsel %vm175, %v100, %v174
  %vm177 = vcmp.eq.f32.partialorder %v100, 0.0
  %v178 = vand.u32 %v100, 2147483648
  %v179 = vsel %vm177, %v178, %v176
  %v180 = vrsqrt.pop %v103
  %v181 = vmul.f32 %v103, %v180
  %vm182 = vcmp.eq.f32.partialorder %v103, inf
  %v183 = vsel %vm182, %v103, %v181
  %vm184 = vcmp.eq.f32.partialorder %v103, 0.0
  %v185 = vand.u32 %v103, 2147483648
  %v186 = vsel %vm184, %v185, %v183
  %v187 = vrsqrt.pop %v106
  %v188 = vmul.f32 %v106, %v187
  %vm189 = vcmp.eq.f32.partialorder %v106, inf
  %v190 = vsel %vm189, %v106, %v188
  %vm191 = vcmp.eq.f32.partialorder %v106, 0.0
  %v192 = vand.u32 %v106, 2147483648
  %v193 = vsel %vm191, %v192, %v190
  %v194 = vrsqrt.pop %v109
  %v195 = vmul.f32 %v109, %v194
  %vm196 = vcmp.eq.f32.partialorder %v109, inf
  %v197 = vsel %vm196, %v109, %v195
  %vm198 = vcmp.eq.f32.partialorder %v109, 0.0
  %v199 = vand.u32 %v109, 2147483648
  %v200 = vsel %vm198, %v199, %v197
  %v201 = vrsqrt.pop %v112
  %v202 = vmul.f32 %v112, %v201
  %vm203 = vcmp.eq.f32.partialorder %v112, inf
  %v204 = vsel %vm203, %v112, %v202
  %vm205 = vcmp.eq.f32.partialorder %v112, 0.0
  %v206 = vand.u32 %v112, 2147483648
  %v207 = vsel %vm205, %v206, %v204
  %v208 = vrsqrt.pop %v115
  %v209 = vmul.f32 %v115, %v208
  %vm210 = vcmp.eq.f32.partialorder %v115, inf
  %v211 = vsel %vm210, %v115, %v209
  %vm212 = vcmp.eq.f32.partialorder %v115, 0.0
  %v213 = vand.u32 %v115, 2147483648
  %v214 = vsel %vm212, %v213, %v211
  %v215 = vrsqrt.pop %v118
  %v216 = vmul.f32 %v118, %v215
  %vm217 = vcmp.eq.f32.partialorder %v118, inf
  %v218 = vsel %vm217, %v118, %v216
  %vm219 = vcmp.eq.f32.partialorder %v118, 0.0
  %v220 = vand.u32 %v118, 2147483648
  %v221 = vsel %vm219, %v220, %v218
  %v222 = vrsqrt.pop %v121
  %v223 = vmul.f32 %v121, %v222
  %vm224 = vcmp.eq.f32.partialorder %v121, inf
  %v225 = vsel %vm224, %v121, %v223
  %vm226 = vcmp.eq.f32.partialorder %v121, 0.0
  %v227 = vand.u32 %v121, 2147483648
  %v228 = vsel %vm226, %v227, %v225
  %v229 = vrsqrt.pop %v125
  %v230 = vmul.f32 %v125, %v229
  %vm231 = vcmp.eq.f32.partialorder %v125, inf
  %v232 = vsel %vm231, %v125, %v230
  %vm233 = vcmp.eq.f32.partialorder %v125, 0.0
  %v234 = vand.u32 %v125, 2147483648
  %v235 = vsel %vm233, %v234, %v232
  %v236 = vrsqrt.pop %v128
  %v237 = vmul.f32 %v128, %v236
  %vm238 = vcmp.eq.f32.partialorder %v128, inf
  %v239 = vsel %vm238, %v128, %v237
  %vm240 = vcmp.eq.f32.partialorder %v128, 0.0
  %v241 = vand.u32 %v128, 2147483648
  %v242 = vsel %vm240, %v241, %v239
  %v243 = vrsqrt.pop %v131
  %v244 = vmul.f32 %v131, %v243
  %vm245 = vcmp.eq.f32.partialorder %v131, inf
  %v246 = vsel %vm245, %v131, %v244
  %vm247 = vcmp.eq.f32.partialorder %v131, 0.0
  %v248 = vand.u32 %v131, 2147483648
  %v249 = vsel %vm247, %v248, %v246
  %v250 = vrsqrt.pop %v134
  %v251 = vmul.f32 %v134, %v250
  %vm252 = vcmp.eq.f32.partialorder %v134, inf
  %v253 = vsel %vm252, %v134, %v251
  %vm254 = vcmp.eq.f32.partialorder %v134, 0.0
  %v255 = vand.u32 %v134, 2147483648
  %v256 = vsel %vm254, %v255, %v253
  %v257 = vrsqrt.pop %v137
  %v258 = vmul.f32 %v137, %v257
  %vm259 = vcmp.eq.f32.partialorder %v137, inf
  %v260 = vsel %vm259, %v137, %v258
  %vm261 = vcmp.eq.f32.partialorder %v137, 0.0
  %v262 = vand.u32 %v137, 2147483648
  %v263 = vsel %vm261, %v262, %v260
  %v264 = vrsqrt.pop %v140
  %v265 = vmul.f32 %v140, %v264
  %vm266 = vcmp.eq.f32.partialorder %v140, inf
  %v267 = vsel %vm266, %v140, %v265
  %vm268 = vcmp.eq.f32.partialorder %v140, 0.0
  %v269 = vand.u32 %v140, 2147483648
  %v270 = vsel %vm268, %v269, %v267
  %v271 = vrsqrt.pop %v143
  %v272 = vmul.f32 %v143, %v271
  %vm273 = vcmp.eq.f32.partialorder %v143, inf
  %v274 = vsel %vm273, %v143, %v272
  %vm275 = vcmp.eq.f32.partialorder %v143, 0.0
  %v276 = vand.u32 %v143, 2147483648
  %v277 = vsel %vm275, %v276, %v274
  %v278 = vrsqrt.pop %v146
  %v279 = vmul.f32 %v146, %v278
  %vm280 = vcmp.eq.f32.partialorder %v146, inf
  %v281 = vsel %vm280, %v146, %v279
  %vm282 = vcmp.eq.f32.partialorder %v146, 0.0
  %v283 = vand.u32 %v146, 2147483648
  %v284 = vsel %vm282, %v283, %v281
  %v285 = vrsqrt.pop %v149
  %v286 = vmul.f32 %v149, %v285
  %vm287 = vcmp.eq.f32.partialorder %v149, inf
  %v288 = vsel %vm287, %v149, %v286
  %vm289 = vcmp.eq.f32.partialorder %v149, 0.0
  %v290 = vand.u32 %v149, 2147483648
  %v291 = vsel %vm289, %v290, %v288
  %v292 = vrsqrt.pop %v152
  %v293 = vmul.f32 %v152, %v292
  %vm294 = vcmp.eq.f32.partialorder %v152, inf
  %v295 = vsel %vm294, %v152, %v293
  %vm296 = vcmp.eq.f32.partialorder %v152, 0.0
  %v297 = vand.u32 %v152, 2147483648
  %v298 = vsel %vm296, %v297, %v295
  %v299 = vrsqrt.pop %v155
  %v300 = vmul.f32 %v155, %v299
  %vm301 = vcmp.eq.f32.partialorder %v155, inf
  %v302 = vsel %vm301, %v155, %v300
  %vm303 = vcmp.eq.f32.partialorder %v155, 0.0
  %v304 = vand.u32 %v155, 2147483648
  %v305 = vsel %vm303, %v304, %v302
  %v306 = vrsqrt.pop %v158
  %v307 = vmul.f32 %v158, %v306
  %vm308 = vcmp.eq.f32.partialorder %v158, inf
  %v309 = vsel %vm308, %v158, %v307
  %vm310 = vcmp.eq.f32.partialorder %v158, 0.0
  %v311 = vand.u32 %v158, 2147483648
  %v312 = vsel %vm310, %v311, %v309
  %v313 = vmul.f32 %v165, -3.0
  %v314 = vmul.f32 %v172, -3.0
  %v315 = vmul.f32 %v179, -3.0
  %v316 = vmul.f32 %v186, -3.0
  %v317 = vmul.f32 %v193, -3.0
  %v318 = vmul.f32 %v200, -3.0
  %v319 = vmul.f32 %v207, -3.0
  %v320 = vmul.f32 %v214, -3.0
  %v321 = vmul.f32 %v221, -3.0
  %v322 = vmul.f32 %v228, -3.0
  %v323 = vmul.f32 %v235, -3.0
  %v324 = vmul.f32 %v242, -3.0
  %v325 = vmul.f32 %v249, -3.0
  %v326 = vmul.f32 %v256, -3.0
  %v327 = vmul.f32 %v263, -3.0
  %v328 = vmul.f32 %v270, -3.0
  %v329 = vmul.f32 %v277, -3.0
  %v330 = vmul.f32 %v284, -3.0
  %v331 = vmul.f32 %v291, -3.0
  %v332 = vmul.f32 %v298, -3.0
  %v333 = vmul.f32 %v305, -3.0
  %v334 = vmul.f32 %v312, -3.0
  %v335 = vmul.f32 %v313, 1.442695
  %v336 = vpow.pop %v335
  %v337 = vmul.f32 %v314, 1.442695
  %v338 = vpow.pop %v337
  %v339 = vmul.f32 %v315, 1.442695
  %v340 = vpow.pop %v339
  %v341 = vmul.f32 %v316, 1.442695
  %v342 = vpow.pop %v341
  %v343 = vmul.f32 %v317, 1.442695
  %v344 = vpow.pop %v343
  %v345 = vmul.f32 %v318, 1.442695
  %v346 = vpow.pop %v345
  %v347 = vmul.f32 %v319, 1.442695
  %v348 = vpow.pop %v347
  %v349 = vmul.f32 %v320, 1.442695
  %v350 = vpow.pop %v349
  %v351 = vmul.f32 %v321, 1.442695
  %v352 = vpow.pop %v351
  %v353 = vmul.f32 %v322, 1.442695
  %v354 = vpow.pop %v353
  %v355 = vmul.f32 %v323, 1.442695
  %v356 = vpow.pop %v355
  %v357 = vmul.f32 %v324, 1.442695
  %v358 = vpow.pop %v357
  %v359 = vmul.f32 %v325, 1.442695
  %v360 = vpow.pop %v359
  %v361 = vmul.f32 %v326, 1.442695
  %v362 = vpow.pop %v361
  %v363 = vmul.f32 %v327, 1.442695
  %v364 = vpow.pop %v363
  %v365 = vmul.f32 %v328, 1.442695
  %v366 = vpow.pop %v365
  %v367 = vmul.f32 %v329, 1.442695
  %v368 = vpow.pop %v367
  %v369 = vmul.f32 %v330, 1.442695
  %v370 = vpow.pop %v369
  %v371 = vmul.f32 %v331, 1.442695
  %v372 = vpow.pop %v371
  %v373 = vmul.f32 %v332, 1.442695
  %v374 = vpow.pop %v373
  %v375 = vmul.f32 %v333, 1.442695
  %v376 = vpow.pop %v375
  %v377 = vmul.f32 %v334, 1.442695
  %v378 = vpow.pop %v377
  %v401 = vlaneseq
  %v402 = vand.u32 %v401, 127
  %v403 = vlaneseq
  %v404 = vshrl.u32 %v403, 7
  %v405 = vsub.s32 %v402, %v404
  %v406 = vrot.slane %v336, %v405
  %v407 = vadd.s32 %v402, 4294967288
  %v408 = vlaneseq
  %v409 = vshrl.u32 %v408, 7
  %v410 = vsub.s32 %v407, %v409
  %v411 = vrot.slane %v338, %v410
  %vm412 = vcmask 130112
  %v413 = vsel %vm412, %v411, %v406
  %v414 = vadd.s32 %v402, 4294967280
  %v415 = vlaneseq
  %v416 = vshrl.u32 %v415, 7
  %v417 = vsub.s32 %v414, %v416
  %v418 = vrot.slane %v340, %v417
  %vm419 = vcmask 195712
  %v420 = vsel %vm419, %v418, %v413
  %v421 = vadd.s32 %v402, 4294967272
  %v422 = vlaneseq
  %v423 = vshrl.u32 %v422, 7
  %v424 = vsub.s32 %v421, %v423
  %v425 = vrot.slane %v342, %v424
  %vm426 = vcmask 261312
  %v427 = vsel %vm426, %v425, %v420
  %v428 = vadd.s32 %v402, 4294967264
  %v429 = vlaneseq
  %v430 = vshrl.u32 %v429, 7
  %v431 = vsub.s32 %v428, %v430
  %v432 = vrot.slane %v344, %v431
  %vm433 = vcmask 326912
  %v434 = vsel %vm433, %v432, %v427
  %v435 = vadd.s32 %v402, 4294967256
  %v436 = vlaneseq
  %v437 = vshrl.u32 %v436, 7
  %v438 = vsub.s32 %v435, %v437
  %v439 = vrot.slane %v346, %v438
  %vm440 = vcmask 392512
  %v441 = vsel %vm440, %v439, %v434
  %v442 = vadd.s32 %v402, 4294967248
  %v443 = vlaneseq
  %v444 = vshrl.u32 %v443, 7
  %v445 = vsub.s32 %v442, %v444
  %v446 = vrot.slane %v348, %v445
  %vm447 = vcmask 458112
  %v448 = vsel %vm447, %v446, %v441
  %v449 = vadd.s32 %v402, 4294967240
  %v450 = vlaneseq
  %v451 = vshrl.u32 %v450, 7
  %v452 = vsub.s32 %v449, %v451
  %v453 = vrot.slane %v350, %v452
  %vm454 = vcmask 523712
  %v455 = vsel %vm454, %v453, %v448
  %v456 = vadd.s32 %v402, 4294967232
  %v457 = vlaneseq
  %v458 = vshrl.u32 %v457, 7
  %v459 = vsub.s32 %v456, %v458
  %v460 = vrot.slane %v352, %v459
  %vm461 = vcmask 589312
  %v462 = vsel %vm461, %v460, %v455
  %v463 = vadd.s32 %v402, 4294967224
  %v464 = vlaneseq
  %v465 = vshrl.u32 %v464, 7
  %v466 = vsub.s32 %v463, %v465
  %v467 = vrot.slane %v354, %v466
  %vm468 = vcmask 654912
  %v469 = vsel %vm468, %v467, %v462
  %v470 = vadd.s32 %v402, 4294967216
  %v471 = vlaneseq
  %v472 = vshrl.u32 %v471, 7
  %v473 = vsub.s32 %v470, %v472
  %v474 = vrot.slane %v356, %v473
  %vm475 = vcmask 720512
  %v476 = vsel %vm475, %v474, %v469
  %v477 = vlaneseq
  %v478 = vshrl.u32 %v477, 7
  %v479 = vsub.s32 %v402, %v478
  %v480 = vrot.slane %v358, %v479
  %v481 = vlaneseq
  %v482 = vshrl.u32 %v481, 7
  %v483 = vsub.s32 %v407, %v482
  %v484 = vrot.slane %v360, %v483
  %v485 = vsel %vm412, %v484, %v480
  %v486 = vlaneseq
  %v487 = vshrl.u32 %v486, 7
  %v488 = vsub.s32 %v414, %v487
  %v489 = vrot.slane %v362, %v488
  %v490 = vsel %vm419, %v489, %v485
  %v491 = vlaneseq
  %v492 = vshrl.u32 %v491, 7
  %v493 = vsub.s32 %v421, %v492
  %v494 = vrot.slane %v364, %v493
  %v495 = vsel %vm426, %v494, %v490
  %v496 = vlaneseq
  %v497 = vshrl.u32 %v496, 7
  %v498 = vsub.s32 %v428, %v497
  %v499 = vrot.slane %v366, %v498
  %v500 = vsel %vm433, %v499, %v495
  %v501 = vlaneseq
  %v502 = vshrl.u32 %v501, 7
  %v503 = vsub.s32 %v435, %v502
  %v504 = vrot.slane %v368, %v503
  %v505 = vsel %vm440, %v504, %v500
  %v506 = vlaneseq
  %v507 = vshrl.u32 %v506, 7
  %v508 = vsub.s32 %v442, %v507
  %v509 = vrot.slane %v370, %v508
  %v510 = vsel %vm447, %v509, %v505
  %v511 = vlaneseq
  %v512 = vshrl.u32 %v511, 7
  %v513 = vsub.s32 %v449, %v512
  %v514 = vrot.slane %v372, %v513
  %v515 = vsel %vm454, %v514, %v510
  %v516 = vlaneseq
  %v517 = vshrl.u32 %v516, 7
  %v518 = vsub.s32 %v456, %v517
  %v519 = vrot.slane %v374, %v518
  %v520 = vsel %vm461, %v519, %v515
  %v521 = vlaneseq
  %v522 = vshrl.u32 %v521, 7
  %v523 = vsub.s32 %v463, %v522
  %v524 = vrot.slane %v376, %v523
  %v525 = vsel %vm468, %v524, %v520
  %v526 = vlaneseq
  %v527 = vshrl.u32 %v526, 7
  %v528 = vsub.s32 %v470, %v527
  %v529 = vrot.slane %v378, %v528
  %v530 = vsel %vm475, %v529, %v525
  %vm531 = vcmask 1041409
  %v532 = vsel %vm531, %v530, %v476
  %vm534 = vcmask 656384
  %535 = vst.msk [vmem:[%s2] sm:$0x3] %vm534, %v532
  // Predicated region
  $region10: #{_lambda_.22} parent=0 // pred_check
    _
  $region11: #{_lambda_.22} parent=0 // pred_check_branch
    %537 = sbr.rel (0) target = $region13
  $region12: #{_lambda_.22} parent=0 // pred_region
    _
  $region13: #{_lambda_.22} parent=0 // pred_fallthru
    _
  // Predicated region
  $region14: #{_lambda_.22} parent=0 // pred_check
    _
  $region15: #{_lambda_.22} parent=0 // pred_check_branch
    %539 = sbr.rel (0) target = $region17
  $region16: #{_lambda_.22} parent=0 // pred_region
    _
  $region17: #{_lambda_.22} parent=0 // pred_fallthru
    _

// kernel: _lambda_.23
$region0: #{_lambda_.23}
  #allocation0 [shape = 'u32[]', space=smem, size = 0x4, offset = 0x4, fixed_abs, tag = 'smem constant byte address 0x4 - core index']
  #allocation1 [shape = 'u32[144,128]{1,0:T(1,128)}', space=vmem, size = 0x12000, scoped, tag = 'internal scratch']
  %s0 = inlined_call_operand.vmem [shape: f32[2,81,16], index: 0, kind: input, shape index: {}]
  %s1 = inlined_call_operand.vmem [shape: f32[2,81,1], index: 1, kind: input, shape index: {}]
  %s2 = inlined_call_operand.vmem [shape: f32[2,81,16], index: 2, kind: output, shape index: {}]
  %s3 = sld [smem:[#allocation0]]
  $region18: #{_lambda_.23} parent=0
    _
  %s5 = ssub.s32 1, %s3
  %s6 = scalar_select 0, %s5, %s3
  // Predicated region
  $region2: #{_lambda_.23} parent=0 // pred_check
    _
  $region3: #{_lambda_.23} parent=0 // pred_check_branch
    %8 = sbr.rel (0) target = $region5
  $region4: #{_lambda_.23} parent=0 // pred_region
    _
  $region5: #{_lambda_.23} parent=0 // pred_fallthru
    _
  // Predicated region
  $region6: #{_lambda_.23} parent=0 // pred_check
    _
  $region7: #{_lambda_.23} parent=0 // pred_check_branch
    %10 = sbr.rel (0) target = $region9
  $region8: #{_lambda_.23} parent=0 // pred_region
    _
  $region9: #{_lambda_.23} parent=0 // pred_fallthru
    _
  %v11 = vld [vmem:[%s0] sm:$0xff]
  %v12 = vld [vmem:[%s0 + $0x8] sm:$0xff]
  %v13 = vld [vmem:[%s0 + $0x10] sm:$0xff]
  %v14 = vld [vmem:[%s0 + $0x18] sm:$0xff]
  %v15 = vld [vmem:[%s0 + $0x20] sm:$0xff]
  %v16 = vld [vmem:[%s0 + $0x28] sm:$0xff]
  %v17 = vld [vmem:[%s0 + $0x30] sm:$0xff]
  %v18 = vld [vmem:[%s0 + $0x38] sm:$0xff]
  %v19 = vld [vmem:[%s0 + $0x40] sm:$0xff]
  %v20 = vld [vmem:[%s0 + $0x48] sm:$0xff]
  %v21 = vld [vmem:[%s0 + $0x50] sm:$0x1]
  %v22 = vld [vmem:[%s0 + $0x58] sm:$0xff]
  %v23 = vld [vmem:[%s0 + $0x60] sm:$0xff]
  %v24 = vld [vmem:[%s0 + $0x68] sm:$0xff]
  %v25 = vld [vmem:[%s0 + $0x70] sm:$0xff]
  %v26 = vld [vmem:[%s0 + $0x78] sm:$0xff]
  %v27 = vld [vmem:[%s0 + $0x80] sm:$0xff]
  %v28 = vld [vmem:[%s0 + $0x88] sm:$0xff]
  %v29 = vld [vmem:[%s0 + $0x90] sm:$0xff]
  %v30 = vld [vmem:[%s0 + $0x98] sm:$0xff]
  %v31 = vld [vmem:[%s0 + $0xa0] sm:$0xff]
  %v32 = vld [vmem:[%s0 + $0xa8] sm:$0x1]
  %v33 = vld [vmem:[%s1] sm:$0xff]
  %v34 = vld [vmem:[%s1 + $0x8] sm:$0xff]
  %v35 = vld [vmem:[%s1 + $0x10] sm:$0xff]
  %v36 = vld [vmem:[%s1 + $0x18] sm:$0xff]
  %v37 = vld [vmem:[%s1 + $0x20] sm:$0xff]
  %v38 = vld [vmem:[%s1 + $0x28] sm:$0xff]
  %v39 = vld [vmem:[%s1 + $0x30] sm:$0xff]
  %v40 = vld [vmem:[%s1 + $0x38] sm:$0xff]
  %v41 = vld [vmem:[%s1 + $0x40] sm:$0xff]
  %v42 = vld [vmem:[%s1 + $0x48] sm:$0xff]
  %v43 = vld [vmem:[%s1 + $0x50] sm:$0x1]
  %v44 = vld [vmem:[%s1 + $0x58] sm:$0xff]
  %v45 = vld [vmem:[%s1 + $0x60] sm:$0xff]
  %v46 = vld [vmem:[%s1 + $0x68] sm:$0xff]
  %v47 = vld [vmem:[%s1 + $0x70] sm:$0xff]
  %v48 = vld [vmem:[%s1 + $0x78] sm:$0xff]
  %v49 = vld [vmem:[%s1 + $0x80] sm:$0xff]
  %v50 = vld [vmem:[%s1 + $0x88] sm:$0xff]
  %v51 = vld [vmem:[%s1 + $0x90] sm:$0xff]
  %v52 = vld [vmem:[%s1 + $0x98] sm:$0xff]
  %v53 = vld [vmem:[%s1 + $0xa0] sm:$0xff]
  %v54 = vld [vmem:[%s1 + $0xa8] sm:$0x1]
  %56 = vset.pattern.permute.xlu0 0
  %57 = vperm.xlu0 %56, %v33
  %v58 = vpop.permute.xlu0 %57
  %61 = vset.pattern.permute.xlu0 0
  %62 = vperm.xlu0 %61, %v34
  %v63 = vpop.permute.xlu0 %62
  %66 = vset.pattern.permute.xlu0 0
  %67 = vperm.xlu0 %66, %v35
  %v68 = vpop.permute.xlu0 %67
  %71 = vset.pattern.permute.xlu0 0
  %72 = vperm.xlu0 %71, %v36
  %v73 = vpop.permute.xlu0 %72
  %76 = vset.pattern.permute.xlu0 0
  %77 = vperm.xlu0 %76, %v37
  %v78 = vpop.permute.xlu0 %77
  %81 = vset.pattern.permute.xlu0 0
  %82 = vperm.xlu0 %81, %v38
  %v83 = vpop.permute.xlu0 %82
  %86 = vset.pattern.permute.xlu0 0
  %87 = vperm.xlu0 %86, %v39
  %v88 = vpop.permute.xlu0 %87
  %91 = vset.pattern.permute.xlu0 0
  %92 = vperm.xlu0 %91, %v40
  %v93 = vpop.permute.xlu0 %92
  %96 = vset.pattern.permute.xlu0 0
  %97 = vperm.xlu0 %96, %v41
  %v98 = vpop.permute.xlu0 %97
  %101 = vset.pattern.permute.xlu0 0
  %102 = vperm.xlu0 %101, %v42
  %v103 = vpop.permute.xlu0 %102
  %106 = vset.pattern.permute.xlu0 0
  %107 = vperm.xlu0 %106, %v43
  %v108 = vpop.permute.xlu0 %107
  %111 = vset.pattern.permute.xlu0 0
  %112 = vperm.xlu0 %111, %v44
  %v113 = vpop.permute.xlu0 %112
  %116 = vset.pattern.permute.xlu0 0
  %117 = vperm.xlu0 %116, %v45
  %v118 = vpop.permute.xlu0 %117
  %121 = vset.pattern.permute.xlu0 0
  %122 = vperm.xlu0 %121, %v46
  %v123 = vpop.permute.xlu0 %122
  %126 = vset.pattern.permute.xlu0 0
  %127 = vperm.xlu0 %126, %v47
  %v128 = vpop.permute.xlu0 %127
  %131 = vset.pattern.permute.xlu0 0
  %132 = vperm.xlu0 %131, %v48
  %v133 = vpop.permute.xlu0 %132
  %136 = vset.pattern.permute.xlu0 0
  %137 = vperm.xlu0 %136, %v49
  %v138 = vpop.permute.xlu0 %137
  %141 = vset.pattern.permute.xlu0 0
  %142 = vperm.xlu0 %141, %v50
  %v143 = vpop.permute.xlu0 %142
  %146 = vset.pattern.permute.xlu0 0
  %147 = vperm.xlu0 %146, %v51
  %v148 = vpop.permute.xlu0 %147
  %151 = vset.pattern.permute.xlu0 0
  %152 = vperm.xlu0 %151, %v52
  %v153 = vpop.permute.xlu0 %152
  %156 = vset.pattern.permute.xlu0 0
  %157 = vperm.xlu0 %156, %v53
  %v158 = vpop.permute.xlu0 %157
  %161 = vset.pattern.permute.xlu0 0
  %162 = vperm.xlu0 %161, %v54
  %v163 = vpop.permute.xlu0 %162
  %v165 = vmul.f32 %v11, %v58
  %v166 = vmul.f32 %v12, %v63
  %v167 = vmul.f32 %v13, %v68
  %v168 = vmul.f32 %v14, %v73
  %v169 = vmul.f32 %v15, %v78
  %v170 = vmul.f32 %v16, %v83
  %v171 = vmul.f32 %v17, %v88
  %v172 = vmul.f32 %v18, %v93
  %v173 = vmul.f32 %v19, %v98
  %v174 = vmul.f32 %v20, %v103
  %v175 = vmul.f32 %v21, %v108
  %v176 = vmul.f32 %v22, %v113
  %v177 = vmul.f32 %v23, %v118
  %v178 = vmul.f32 %v24, %v123
  %v179 = vmul.f32 %v25, %v128
  %v180 = vmul.f32 %v26, %v133
  %v181 = vmul.f32 %v27, %v138
  %v182 = vmul.f32 %v28, %v143
  %v183 = vmul.f32 %v29, %v148
  %v184 = vmul.f32 %v30, %v153
  %v185 = vmul.f32 %v31, %v158
  %v186 = vmul.f32 %v32, %v163
  %vm187 = vcmask 130048
  %188 = vst.msk [vmem:[%s2] sm:$0xff] %vm187, %v165
  %189 = vst.msk [vmem:[%s2 + $0x8] sm:$0xff] %vm187, %v166
  %190 = vst.msk [vmem:[%s2 + $0x10] sm:$0xff] %vm187, %v167
  %191 = vst.msk [vmem:[%s2 + $0x18] sm:$0xff] %vm187, %v168
  %192 = vst.msk [vmem:[%s2 + $0x20] sm:$0xff] %vm187, %v169
  %193 = vst.msk [vmem:[%s2 + $0x28] sm:$0xff] %vm187, %v170
  %194 = vst.msk [vmem:[%s2 + $0x30] sm:$0xff] %vm187, %v171
  %195 = vst.msk [vmem:[%s2 + $0x38] sm:$0xff] %vm187, %v172
  %196 = vst.msk [vmem:[%s2 + $0x40] sm:$0xff] %vm187, %v173
  %197 = vst.msk [vmem:[%s2 + $0x48] sm:$0xff] %vm187, %v174
  %vm198 = vcmask 122880
  %199 = vst.msk [vmem:[%s2 + $0x50] sm:$0x1] %vm198, %v175
  %200 = vst.msk [vmem:[%s2 + $0x58] sm:$0xff] %vm187, %v176
  %201 = vst.msk [vmem:[%s2 + $0x60] sm:$0xff] %vm187, %v177
  %202 = vst.msk [vmem:[%s2 + $0x68] sm:$0xff] %vm187, %v178
  %203 = vst.msk [vmem:[%s2 + $0x70] sm:$0xff] %vm187, %v179
  %204 = vst.msk [vmem:[%s2 + $0x78] sm:$0xff] %vm187, %v180
  %205 = vst.msk [vmem:[%s2 + $0x80] sm:$0xff] %vm187, %v181
  %206 = vst.msk [vmem:[%s2 + $0x88] sm:$0xff] %vm187, %v182
  %207 = vst.msk [vmem:[%s2 + $0x90] sm:$0xff] %vm187, %v183
  %208 = vst.msk [vmem:[%s2 + $0x98] sm:$0xff] %vm187, %v184
  %209 = vst.msk [vmem:[%s2 + $0xa0] sm:$0xff] %vm187, %v185
  %210 = vst.msk [vmem:[%s2 + $0xa8] sm:$0x1] %vm198, %v186
  // Predicated region
  $region10: #{_lambda_.23} parent=0 // pred_check
    _
  $region11: #{_lambda_.23} parent=0 // pred_check_branch
    %212 = sbr.rel (0) target = $region13
  $region12: #{_lambda_.23} parent=0 // pred_region
    _
  $region13: #{_lambda_.23} parent=0 // pred_fallthru
    _
  // Predicated region
  $region14: #{_lambda_.23} parent=0 // pred_check
    _
  $region15: #{_lambda_.23} parent=0 // pred_check_branch
    %214 = sbr.rel (0) target = $region17
  $region16: #{_lambda_.23} parent=0 // pred_region
    _
  $region17: #{_lambda_.23} parent=0 // pred_fallthru
    _

// kernel: _lambda_.25
$region0: #{_lambda_.25}
  #allocation0 [shape = 'u32[]', space=smem, size = 0x4, offset = 0x4, fixed_abs, tag = 'smem constant byte address 0x4 - core index']
  #allocation1 [shape = 'u32[144,128]{1,0:T(1,128)}', space=vmem, size = 0x12000, scoped, tag = 'internal scratch']
  %s0 = inlined_call_operand.vmem [shape: f32[288,9], index: 0, kind: input, shape index: {}]
  %s1 = inlined_call_operand.vmem [shape: f32[288,1], index: 1, kind: output, shape index: {}]
  %s2 = sld [smem:[#allocation0]]
  $region14: #{_lambda_.25} parent=0
    _
  %s4 = ssub.s32 1, %s2
  %s5 = scalar_select 0, %s4, %s2
  // Predicated region
  $region2: #{_lambda_.25} parent=0 // pred_check
    _
  $region3: #{_lambda_.25} parent=0 // pred_check_branch
    %7 = sbr.rel (0) target = $region5
  $region4: #{_lambda_.25} parent=0 // pred_region
    _
  $region5: #{_lambda_.25} parent=0 // pred_fallthru
    _
  %v8 = vld [vmem:[%s0] sm:$0xff]
  %v9 = vld [vmem:[%s0 + $0x8] sm:$0xff]
  %v10 = vld [vmem:[%s0 + $0x10] sm:$0xff]
  %v11 = vld [vmem:[%s0 + $0x18] sm:$0xff]
  %v12 = vld [vmem:[%s0 + $0x20] sm:$0xff]
  %v13 = vld [vmem:[%s0 + $0x28] sm:$0xff]
  %v14 = vld [vmem:[%s0 + $0x30] sm:$0xff]
  %v15 = vld [vmem:[%s0 + $0x38] sm:$0xff]
  %v16 = vld [vmem:[%s0 + $0x40] sm:$0xff]
  %v17 = vld [vmem:[%s0 + $0x48] sm:$0xff]
  %v18 = vld [vmem:[%s0 + $0x50] sm:$0xff]
  %v19 = vld [vmem:[%s0 + $0x58] sm:$0xff]
  %v20 = vld [vmem:[%s0 + $0x60] sm:$0xff]
  %v21 = vld [vmem:[%s0 + $0x68] sm:$0xff]
  %v22 = vld [vmem:[%s0 + $0x70] sm:$0xff]
  %v23 = vld [vmem:[%s0 + $0x78] sm:$0xff]
  %v24 = vld [vmem:[%s0 + $0x80] sm:$0xff]
  %v25 = vld [vmem:[%s0 + $0x88] sm:$0xff]
  %v26 = vld [vmem:[%s0 + $0x90] sm:$0xff]
  %v27 = vld [vmem:[%s0 + $0x98] sm:$0xff]
  %v28 = vld [vmem:[%s0 + $0xa0] sm:$0xff]
  %v29 = vld [vmem:[%s0 + $0xa8] sm:$0xff]
  %v30 = vld [vmem:[%s0 + $0xb0] sm:$0xff]
  %v31 = vld [vmem:[%s0 + $0xb8] sm:$0xff]
  %v32 = vld [vmem:[%s0 + $0xc0] sm:$0xff]
  %v33 = vld [vmem:[%s0 + $0xc8] sm:$0xff]
  %v34 = vld [vmem:[%s0 + $0xd0] sm:$0xff]
  %v35 = vld [vmem:[%s0 + $0xd8] sm:$0xff]
  %v36 = vld [vmem:[%s0 + $0xe0] sm:$0xff]
  %v37 = vld [vmem:[%s0 + $0xe8] sm:$0xff]
  %v38 = vld [vmem:[%s0 + $0xf0] sm:$0xff]
  %v39 = vld [vmem:[%s0 + $0xf8] sm:$0xff]
  %v40 = vld [vmem:[%s0 + $0x100] sm:$0xff]
  %v41 = vld [vmem:[%s0 + $0x108] sm:$0xff]
  %v42 = vld [vmem:[%s0 + $0x110] sm:$0xff]
  %v43 = vld [vmem:[%s0 + $0x118] sm:$0xff]
  %vm44 = vcmask 72704
  %v45 = vsel %vm44, %v8, 0.0
  %46 = vadd.xlane.f32.xlu0 %v45
  %v47 = vpop.xlane.xlu0 %46
  %v48 = vsel %vm44, %v9, 0.0
  %49 = vadd.xlane.f32.xlu0 %v48
  %v50 = vpop.xlane.xlu0 %49
  %v51 = vsel %vm44, %v10, 0.0
  %52 = vadd.xlane.f32.xlu0 %v51
  %v53 = vpop.xlane.xlu0 %52
  %v54 = vsel %vm44, %v11, 0.0
  %55 = vadd.xlane.f32.xlu0 %v54
  %v56 = vpop.xlane.xlu0 %55
  %v57 = vsel %vm44, %v12, 0.0
  %58 = vadd.xlane.f32.xlu0 %v57
  %v59 = vpop.xlane.xlu0 %58
  %v60 = vsel %vm44, %v13, 0.0
  %61 = vadd.xlane.f32.xlu0 %v60
  %v62 = vpop.xlane.xlu0 %61
  %v63 = vsel %vm44, %v14, 0.0
  %64 = vadd.xlane.f32.xlu0 %v63
  %v65 = vpop.xlane.xlu0 %64
  %v66 = vsel %vm44, %v15, 0.0
  %67 = vadd.xlane.f32.xlu0 %v66
  %v68 = vpop.xlane.xlu0 %67
  %v69 = vsel %vm44, %v16, 0.0
  %70 = vadd.xlane.f32.xlu0 %v69
  %v71 = vpop.xlane.xlu0 %70
  %v72 = vsel %vm44, %v17, 0.0
  %73 = vadd.xlane.f32.xlu0 %v72
  %v74 = vpop.xlane.xlu0 %73
  %v75 = vsel %vm44, %v18, 0.0
  %76 = vadd.xlane.f32.xlu0 %v75
  %v77 = vpop.xlane.xlu0 %76
  %v78 = vsel %vm44, %v19, 0.0
  %79 = vadd.xlane.f32.xlu0 %v78
  %v80 = vpop.xlane.xlu0 %79
  %v81 = vsel %vm44, %v20, 0.0
  %82 = vadd.xlane.f32.xlu0 %v81
  %v83 = vpop.xlane.xlu0 %82
  %v84 = vsel %vm44, %v21, 0.0
  %85 = vadd.xlane.f32.xlu0 %v84
  %v86 = vpop.xlane.xlu0 %85
  %v87 = vsel %vm44, %v22, 0.0
  %88 = vadd.xlane.f32.xlu0 %v87
  %v89 = vpop.xlane.xlu0 %88
  %v90 = vsel %vm44, %v23, 0.0
  %91 = vadd.xlane.f32.xlu0 %v90
  %v92 = vpop.xlane.xlu0 %91
  %v93 = vsel %vm44, %v24, 0.0
  %94 = vadd.xlane.f32.xlu0 %v93
  %v95 = vpop.xlane.xlu0 %94
  %v96 = vsel %vm44, %v25, 0.0
  %97 = vadd.xlane.f32.xlu0 %v96
  %v98 = vpop.xlane.xlu0 %97
  %v99 = vsel %vm44, %v26, 0.0
  %100 = vadd.xlane.f32.xlu0 %v99
  %v101 = vpop.xlane.xlu0 %100
  %v102 = vsel %vm44, %v27, 0.0
  %103 = vadd.xlane.f32.xlu0 %v102
  %v104 = vpop.xlane.xlu0 %103
  %v105 = vsel %vm44, %v28, 0.0
  %106 = vadd.xlane.f32.xlu0 %v105
  %v107 = vpop.xlane.xlu0 %106
  %v108 = vsel %vm44, %v29, 0.0
  %109 = vadd.xlane.f32.xlu0 %v108
  %v110 = vpop.xlane.xlu0 %109
  %v111 = vsel %vm44, %v30, 0.0
  %112 = vadd.xlane.f32.xlu0 %v111
  %v113 = vpop.xlane.xlu0 %112
  %v114 = vsel %vm44, %v31, 0.0
  %115 = vadd.xlane.f32.xlu0 %v114
  %v116 = vpop.xlane.xlu0 %115
  %v117 = vsel %vm44, %v32, 0.0
  %118 = vadd.xlane.f32.xlu0 %v117
  %v119 = vpop.xlane.xlu0 %118
  %v120 = vsel %vm44, %v33, 0.0
  %121 = vadd.xlane.f32.xlu0 %v120
  %v122 = vpop.xlane.xlu0 %121
  %v123 = vsel %vm44, %v34, 0.0
  %124 = vadd.xlane.f32.xlu0 %v123
  %v125 = vpop.xlane.xlu0 %124
  %v126 = vsel %vm44, %v35, 0.0
  %127 = vadd.xlane.f32.xlu0 %v126
  %v128 = vpop.xlane.xlu0 %127
  %v129 = vsel %vm44, %v36, 0.0
  %130 = vadd.xlane.f32.xlu0 %v129
  %v131 = vpop.xlane.xlu0 %130
  %v132 = vsel %vm44, %v37, 0.0
  %133 = vadd.xlane.f32.xlu0 %v132
  %v134 = vpop.xlane.xlu0 %133
  %v135 = vsel %vm44, %v38, 0.0
  %136 = vadd.xlane.f32.xlu0 %v135
  %v137 = vpop.xlane.xlu0 %136
  %v138 = vsel %vm44, %v39, 0.0
  %139 = vadd.xlane.f32.xlu0 %v138
  %v140 = vpop.xlane.xlu0 %139
  %v141 = vsel %vm44, %v40, 0.0
  %142 = vadd.xlane.f32.xlu0 %v141
  %v143 = vpop.xlane.xlu0 %142
  %v144 = vsel %vm44, %v41, 0.0
  %145 = vadd.xlane.f32.xlu0 %v144
  %v146 = vpop.xlane.xlu0 %145
  %v147 = vsel %vm44, %v42, 0.0
  %148 = vadd.xlane.f32.xlu0 %v147
  %v149 = vpop.xlane.xlu0 %148
  %v150 = vsel %vm44, %v43, 0.0
  %151 = vadd.xlane.f32.xlu0 %v150
  %v152 = vpop.xlane.xlu0 %151
  %v153 = vrcp.pop 9.0
  %v154 = vmul.f32 %v47, %v153
  %v155 = vmul.f32 %v50, %v153
  %v156 = vmul.f32 %v53, %v153
  %v157 = vmul.f32 %v56, %v153
  %v158 = vmul.f32 %v59, %v153
  %v159 = vmul.f32 %v62, %v153
  %v160 = vmul.f32 %v65, %v153
  %v161 = vmul.f32 %v68, %v153
  %v162 = vmul.f32 %v71, %v153
  %v163 = vmul.f32 %v74, %v153
  %v164 = vmul.f32 %v77, %v153
  %v165 = vmul.f32 %v80, %v153
  %v166 = vmul.f32 %v83, %v153
  %v167 = vmul.f32 %v86, %v153
  %v168 = vmul.f32 %v89, %v153
  %v169 = vmul.f32 %v92, %v153
  %v170 = vmul.f32 %v95, %v153
  %v171 = vmul.f32 %v98, %v153
  %v172 = vmul.f32 %v101, %v153
  %v173 = vmul.f32 %v104, %v153
  %v174 = vmul.f32 %v107, %v153
  %v175 = vmul.f32 %v110, %v153
  %v176 = vmul.f32 %v113, %v153
  %v177 = vmul.f32 %v116, %v153
  %v178 = vmul.f32 %v119, %v153
  %v179 = vmul.f32 %v122, %v153
  %v180 = vmul.f32 %v125, %v153
  %v181 = vmul.f32 %v128, %v153
  %v182 = vmul.f32 %v131, %v153
  %v183 = vmul.f32 %v134, %v153
  %v184 = vmul.f32 %v137, %v153
  %v185 = vmul.f32 %v140, %v153
  %v186 = vmul.f32 %v143, %v153
  %v187 = vmul.f32 %v146, %v153
  %v188 = vmul.f32 %v149, %v153
  %v189 = vmul.f32 %v152, %v153
  %vm190 = vcmask 7168
  %191 = vst.msk [vmem:[%s1] sm:$0xff] %vm190, %v154
  %192 = vst.msk [vmem:[%s1 + $0x8] sm:$0xff] %vm190, %v155
  %193 = vst.msk [vmem:[%s1 + $0x10] sm:$0xff] %vm190, %v156
  %194 = vst.msk [vmem:[%s1 + $0x18] sm:$0xff] %vm190, %v157
  %195 = vst.msk [vmem:[%s1 + $0x20] sm:$0xff] %vm190, %v158
  %196 = vst.msk [vmem:[%s1 + $0x28] sm:$0xff] %vm190, %v159
  %197 = vst.msk [vmem:[%s1 + $0x30] sm:$0xff] %vm190, %v160
  %198 = vst.msk [vmem:[%s1 + $0x38] sm:$0xff] %vm190, %v161
  %199 = vst.msk [vmem:[%s1 + $0x40] sm:$0xff] %vm190, %v162
  %200 = vst.msk [vmem:[%s1 + $0x48] sm:$0xff] %vm190, %v163
  %201 = vst.msk [vmem:[%s1 + $0x50] sm:$0xff] %vm190, %v164
  %202 = vst.msk [vmem:[%s1 + $0x58] sm:$0xff] %vm190, %v165
  %203 = vst.msk [vmem:[%s1 + $0x60] sm:$0xff] %vm190, %v166
  %204 = vst.msk [vmem:[%s1 + $0x68] sm:$0xff] %vm190, %v167
  %205 = vst.msk [vmem:[%s1 + $0x70] sm:$0xff] %vm190, %v168
  %206 = vst.msk [vmem:[%s1 + $0x78] sm:$0xff] %vm190, %v169
  %207 = vst.msk [vmem:[%s1 + $0x80] sm:$0xff] %vm190, %v170
  %208 = vst.msk [vmem:[%s1 + $0x88] sm:$0xff] %vm190, %v171
  %209 = vst.msk [vmem:[%s1 + $0x90] sm:$0xff] %vm190, %v172
  %210 = vst.msk [vmem:[%s1 + $0x98] sm:$0xff] %vm190, %v173
  %211 = vst.msk [vmem:[%s1 + $0xa0] sm:$0xff] %vm190, %v174
  %212 = vst.msk [vmem:[%s1 + $0xa8] sm:$0xff] %vm190, %v175
  %213 = vst.msk [vmem:[%s1 + $0xb0] sm:$0xff] %vm190, %v176
  %214 = vst.msk [vmem:[%s1 + $0xb8] sm:$0xff] %vm190, %v177
  %215 = vst.msk [vmem:[%s1 + $0xc0] sm:$0xff] %vm190, %v178
  %216 = vst.msk [vmem:[%s1 + $0xc8] sm:$0xff] %vm190, %v179
  %217 = vst.msk [vmem:[%s1 + $0xd0] sm:$0xff] %vm190, %v180
  %218 = vst.msk [vmem:[%s1 + $0xd8] sm:$0xff] %vm190, %v181
  %219 = vst.msk [vmem:[%s1 + $0xe0] sm:$0xff] %vm190, %v182
  %220 = vst.msk [vmem:[%s1 + $0xe8] sm:$0xff] %vm190, %v183
  %221 = vst.msk [vmem:[%s1 + $0xf0] sm:$0xff] %vm190, %v184
  %222 = vst.msk [vmem:[%s1 + $0xf8] sm:$0xff] %vm190, %v185
  %223 = vst.msk [vmem:[%s1 + $0x100] sm:$0xff] %vm190, %v186
  %224 = vst.msk [vmem:[%s1 + $0x108] sm:$0xff] %vm190, %v187
  %225 = vst.msk [vmem:[%s1 + $0x110] sm:$0xff] %vm190, %v188
  %226 = vst.msk [vmem:[%s1 + $0x118] sm:$0xff] %vm190, %v189
  // Predicated region
  $region6: #{_lambda_.25} parent=0 // pred_check
    _
  $region7: #{_lambda_.25} parent=0 // pred_check_branch
    %228 = sbr.rel (0) target = $region9
  $region8: #{_lambda_.25} parent=0 // pred_region
    _
  $region9: #{_lambda_.25} parent=0 // pred_fallthru
    _
  // Predicated region
  $region10: #{_lambda_.25} parent=0 // pred_check
    _
  $region11: #{_lambda_.25} parent=0 // pred_check_branch
    %230 = sbr.rel (0) target = $region13
  $region12: #{_lambda_.25} parent=0 // pred_region
    _
  $region13: #{_lambda_.25} parent=0 // pred_fallthru
    _

// kernel: _lambda_.24
$region0: #{_lambda_.24}
  #allocation0 [shape = 'u32[]', space=smem, size = 0x4, offset = 0x4, fixed_abs, tag = 'smem constant byte address 0x4 - core index']
  #allocation1 [shape = 'u32[144,128]{1,0:T(1,128)}', space=vmem, size = 0x12000, scoped, tag = 'internal scratch']
  %s0 = inlined_call_operand.vmem [shape: f32[162,144], index: 0, kind: input, shape index: {}]
  %s1 = inlined_call_operand.vmem [shape: f32[144,16], index: 1, kind: input, shape index: {}]
  %s2 = inlined_call_operand.vmem [shape: f32[1,16], index: 2, kind: input, shape index: {}]
  %s3 = inlined_call_operand.vmem [shape: f32[1,16], index: 3, kind: input, shape index: {}]
  %s4 = inlined_call_operand.vmem [shape: f32[162,16], index: 4, kind: output, shape index: {}]
  %s5 = sld [smem:[#allocation0]]
  $region26: #{_lambda_.24} parent=0
    _
  %s7 = ssub.s32 1, %s5
  %s8 = scalar_select 0, %s7, %s5
  // Predicated region
  $region2: #{_lambda_.24} parent=0 // pred_check
    _
  $region3: #{_lambda_.24} parent=0 // pred_check_branch
    %10 = sbr.rel (0) target = $region5
  $region4: #{_lambda_.24} parent=0 // pred_region
    _
  $region5: #{_lambda_.24} parent=0 // pred_fallthru
    _
  // Predicated region
  $region6: #{_lambda_.24} parent=0 // pred_check
    _
  $region7: #{_lambda_.24} parent=0 // pred_check_branch
    %12 = sbr.rel (0) target = $region9
  $region8: #{_lambda_.24} parent=0 // pred_region
    _
  $region9: #{_lambda_.24} parent=0 // pred_fallthru
    _
  // Predicated region
  $region10: #{_lambda_.24} parent=0 // pred_check
    _
  $region11: #{_lambda_.24} parent=0 // pred_check_branch
    %14 = sbr.rel (0) target = $region13
  $region12: #{_lambda_.24} parent=0 // pred_region
    _
  $region13: #{_lambda_.24} parent=0 // pred_fallthru
    _
  // Predicated region
  $region14: #{_lambda_.24} parent=0 // pred_check
    _
  $region15: #{_lambda_.24} parent=0 // pred_check_branch
    %16 = sbr.rel (0) target = $region17
  $region16: #{_lambda_.24} parent=0 // pred_region
    _
  $region17: #{_lambda_.24} parent=0 // pred_fallthru
    _
  %v17 = vld [vmem:[%s0] sm:$0xff]
  %v18 = vld [vmem:[%s0 + $0x8] sm:$0xff]
  %v19 = vld [vmem:[%s0 + $0x10] sm:$0xff]
  %v20 = vld [vmem:[%s0 + $0x18] sm:$0xff]
  %v21 = vld [vmem:[%s0 + $0x20] sm:$0xff]
  %v22 = vld [vmem:[%s0 + $0x28] sm:$0xff]
  %v23 = vld [vmem:[%s0 + $0x30] sm:$0xff]
  %v24 = vld [vmem:[%s0 + $0x38] sm:$0xff]
  %v25 = vld [vmem:[%s0 + $0x40] sm:$0xff]
  %v26 = vld [vmem:[%s0 + $0x48] sm:$0xff]
  %v27 = vld [vmem:[%s0 + $0x50] sm:$0xff]
  %v28 = vld [vmem:[%s0 + $0x58] sm:$0xff]
  %v29 = vld [vmem:[%s0 + $0x60] sm:$0xff]
  %v30 = vld [vmem:[%s0 + $0x68] sm:$0xff]
  %v31 = vld [vmem:[%s0 + $0x70] sm:$0xff]
  %v32 = vld [vmem:[%s0 + $0x78] sm:$0xff]
  %v33 = vld [vmem:[%s0 + $0x80] sm:$0xff]
  %v34 = vld [vmem:[%s0 + $0x88] sm:$0xff]
  %v35 = vld [vmem:[%s0 + $0x90] sm:$0xff]
  %v36 = vld [vmem:[%s0 + $0x98] sm:$0xff]
  %v37 = vld [vmem:[%s0 + $0xa0] sm:$0xff]
  %v38 = vld [vmem:[%s0 + $0xa8] sm:$0xff]
  %v39 = vld [vmem:[%s0 + $0xb0] sm:$0xff]
  %v40 = vld [vmem:[%s0 + $0xb8] sm:$0xff]
  %v41 = vld [vmem:[%s0 + $0xc0] sm:$0xff]
  %v42 = vld [vmem:[%s0 + $0xc8] sm:$0xff]
  %v43 = vld [vmem:[%s0 + $0xd0] sm:$0xff]
  %v44 = vld [vmem:[%s0 + $0xd8] sm:$0xff]
  %v45 = vld [vmem:[%s0 + $0xe0] sm:$0xff]
  %v46 = vld [vmem:[%s0 + $0xe8] sm:$0xff]
  %v47 = vld [vmem:[%s0 + $0xf0] sm:$0xff]
  %v48 = vld [vmem:[%s0 + $0xf8] sm:$0xff]
  %v49 = vld [vmem:[%s0 + $0x100] sm:$0xff]
  %v50 = vld [vmem:[%s0 + $0x108] sm:$0xff]
  %v51 = vld [vmem:[%s0 + $0x110] sm:$0xff]
  %v52 = vld [vmem:[%s0 + $0x118] sm:$0xff]
  %v53 = vld [vmem:[%s0 + $0x120] sm:$0xff]
  %v54 = vld [vmem:[%s0 + $0x128] sm:$0xff]
  %v55 = vld [vmem:[%s0 + $0x130] sm:$0xff]
  %v56 = vld [vmem:[%s0 + $0x138] sm:$0xff]
  %v57 = vld [vmem:[%s0 + $0x140] sm:$0x3]
  %v58 = vld [vmem:[%s0 + $0x148] sm:$0x3]
  %v59 = vld [vmem:[%s1] sm:$0xff]
  %v60 = vld [vmem:[%s1 + $0x8] sm:$0xff]
  %v61 = vld [vmem:[%s1 + $0x10] sm:$0xff]
  %v62 = vld [vmem:[%s1 + $0x18] sm:$0xff]
  %v63 = vld [vmem:[%s1 + $0x20] sm:$0xff]
  %v64 = vld [vmem:[%s1 + $0x28] sm:$0xff]
  %v65 = vld [vmem:[%s1 + $0x30] sm:$0xff]
  %v66 = vld [vmem:[%s1 + $0x38] sm:$0xff]
  %v67 = vld [vmem:[%s1 + $0x40] sm:$0xff]
  %v68 = vld [vmem:[%s1 + $0x48] sm:$0xff]
  %v69 = vld [vmem:[%s1 + $0x50] sm:$0xff]
  %v70 = vld [vmem:[%s1 + $0x58] sm:$0xff]
  %v71 = vld [vmem:[%s1 + $0x60] sm:$0xff]
  %v72 = vld [vmem:[%s1 + $0x68] sm:$0xff]
  %v73 = vld [vmem:[%s1 + $0x70] sm:$0xff]
  %v74 = vld [vmem:[%s1 + $0x78] sm:$0xff]
  %v75 = vld [vmem:[%s1 + $0x80] sm:$0xff]
  %v76 = vld [vmem:[%s1 + $0x88] sm:$0xff]
  %vm77 = vcmask 130048
  %v79 = vsel %vm77, %v18, 0
  %v82 = vsel %vm77, %v20, 0
  %v85 = vsel %vm77, %v22, 0
  %v88 = vsel %vm77, %v24, 0
  %v91 = vsel %vm77, %v26, 0
  %v94 = vsel %vm77, %v28, 0
  %v97 = vsel %vm77, %v30, 0
  %v100 = vsel %vm77, %v32, 0
  %v103 = vsel %vm77, %v34, 0
  %v106 = vsel %vm77, %v36, 0
  %v109 = vsel %vm77, %v38, 0
  %v112 = vsel %vm77, %v40, 0
  %v115 = vsel %vm77, %v42, 0
  %v118 = vsel %vm77, %v44, 0
  %v121 = vsel %vm77, %v46, 0
  %v124 = vsel %vm77, %v48, 0
  %v127 = vsel %vm77, %v50, 0
  %v130 = vsel %vm77, %v52, 0
  %v133 = vsel %vm77, %v54, 0
  %v136 = vsel %vm77, %v56, 0
  %v139 = vsel %vm77, %v58, 0
  %141 = vmatprep.subr.mxu0 0.0
  %142 = vmatpush1.msra.mxu0 %v59
  %143 = vmatprep.subr.mxu0 0.0
  %144 = vmatpush1.msra.mxu0 %v60
  %145 = vmatprep.subr.mxu0 0.0
  %146 = vmatpush1.msra.mxu0 %v61
  %147 = vmatprep.subr.mxu0 0.0
  %148 = vmatpush1.msra.mxu0 %v62
  %149 = vmatprep.subr.mxu0 0.0
  %150 = vmatpush1.msra.mxu0 %v63
  %151 = vmatprep.subr.mxu0 0.0
  %152 = vmatpush1.msra.mxu0 %v64
  %153 = vmatprep.subr.mxu0 0.0
  %154 = vmatpush1.msra.mxu0 %v65
  %155 = vmatprep.subr.mxu0 0.0
  %156 = vmatpush1.msra.mxu0 %v66
  %157 = vmatprep.subr.mxu0 0.0
  %158 = vmatpush1.msra.mxu0 %v67
  %159 = vmatprep.subr.mxu0 0.0
  %160 = vmatpush1.msra.mxu0 %v68
  %161 = vmatprep.subr.mxu0 0.0
  %162 = vmatpush1.msra.mxu0 %v69
  %163 = vmatprep.subr.mxu0 0.0
  %164 = vmatpush1.msra.mxu0 %v70
  %165 = vmatprep.subr.mxu0 0.0
  %166 = vmatpush1.msra.mxu0 %v71
  %167 = vmatprep.subr.mxu0 0.0
  %168 = vmatpush1.msra.mxu0 %v72
  %169 = vmatprep.subr.mxu0 0.0
  %170 = vmatpush1.msra.mxu0 %v73
  %171 = vmatprep.subr.mxu0 0.0
  %172 = vmatpush1.msra.mxu0 %v74
  %173 = vmatprep.subr.mxu0 0.0
  %174 = vmatpush1.msra.mxu0 %v75
  %175 = vmatprep.subr.mxu0 0.0
  %176 = vmatpush1.msra.mxu0 %v76
  %177 = vmatprep.subr.mxu0 0.0
  %178 = vmatpush1.msra.mxu0 0.0
  %179 = vmatprep.subr.mxu0 0.0
  %180 = vmatpush1.msra.mxu0 0.0
  %181 = vmatprep.subr.mxu0 0.0
  %182 = vmatpush1.msra.mxu0 0.0
  %183 = vmatprep.subr.mxu0 0.0
  %184 = vmatpush1.msra.mxu0 0.0
  %185 = vmatprep.subr.mxu0 0.0
  %186 = vmatpush1.msra.mxu0 0.0
  %187 = vmatprep.subr.mxu0 0.0
  %188 = vmatpush1.msra.mxu0 0.0
  %189 = vmatprep.subr.mxu0 0.0
  %190 = vmatpush1.msra.mxu0 0.0
  %191 = vmatprep.subr.mxu0 0.0
  %192 = vmatpush1.msra.mxu0 0.0
  %193 = vmatprep.subr.mxu0 0.0
  %194 = vmatpush1.msra.mxu0 0.0
  %195 = vmatprep.subr.mxu0 0.0
  %196 = vmatpush1.msra.mxu0 0.0
  %197 = vmatprep.subr.mxu0 0.0
  %198 = vmatpush1.msra.mxu0 0.0
  %199 = vmatprep.subr.mxu0 0.0
  %200 = vmatpush1.msra.mxu0 0.0
  %201 = vmatprep.subr.mxu0 0.0
  %202 = vmatpush1.msra.mxu0 0.0
  %203 = vmatprep.subr.mxu0 0.0
  %204 = vmatpush1.msra.mxu0 0.0
  %205 = vmatprep.mubr.f32.mxu0 %v79
  %206 = vmatmul.mubr.f32.gmra.mrb[0].mxu0 %v17
  %v207 = vpop.f32.mrb[0].mxu0
  %v208 = vadd.f32 0.0, %v207
  %v209 = vpop.f32.mrb[0].mxu0
  %210 = vmatprep.mubr.f32.mxu0 %v82
  %211 = vmatmul.mubr.f32.gmra.mrb[0].mxu0 %v19
  %v212 = vpop.f32.mrb[0].mxu0
  %v213 = vadd.f32 0.0, %v212
  %v214 = vpop.f32.mrb[0].mxu0
  %215 = vmatprep.mubr.f32.mxu0 %v85
  %216 = vmatmul.mubr.f32.gmra.mrb[0].mxu0 %v21
  %v217 = vpop.f32.mrb[0].mxu0
  %v218 = vadd.f32 0.0, %v217
  %v219 = vpop.f32.mrb[0].mxu0
  %220 = vmatprep.mubr.f32.mxu0 %v88
  %221 = vmatmul.mubr.f32.gmra.mrb[0].mxu0 %v23
  %v222 = vpop.f32.mrb[0].mxu0
  %v223 = vadd.f32 0.0, %v222
  %v224 = vpop.f32.mrb[0].mxu0
  %225 = vmatprep.mubr.f32.mxu0 %v91
  %226 = vmatmul.mubr.f32.gmra.mrb[0].mxu0 %v25
  %v227 = vpop.f32.mrb[0].mxu0
  %v228 = vadd.f32 0.0, %v227
  %v229 = vpop.f32.mrb[0].mxu0
  %230 = vmatprep.mubr.f32.mxu0 %v94
  %231 = vmatmul.mubr.f32.gmra.mrb[0].mxu0 %v27
  %v232 = vpop.f32.mrb[0].mxu0
  %v233 = vadd.f32 0.0, %v232
  %v234 = vpop.f32.mrb[0].mxu0
  %235 = vmatprep.mubr.f32.mxu0 %v97
  %236 = vmatmul.mubr.f32.gmra.mrb[0].mxu0 %v29
  %v237 = vpop.f32.mrb[0].mxu0
  %v238 = vadd.f32 0.0, %v237
  %v239 = vpop.f32.mrb[0].mxu0
  %240 = vmatprep.mubr.f32.mxu0 %v100
  %241 = vmatmul.mubr.f32.gmra.mrb[0].mxu0 %v31
  %v242 = vpop.f32.mrb[0].mxu0
  %v243 = vadd.f32 0.0, %v242
  %v244 = vpop.f32.mrb[0].mxu0
  %245 = vmatprep.mubr.f32.mxu0 %v103
  %246 = vmatmul.mubr.f32.gmra.mrb[0].mxu0 %v33
  %v247 = vpop.f32.mrb[0].mxu0
  %v248 = vadd.f32 0.0, %v247
  %v249 = vpop.f32.mrb[0].mxu0
  %250 = vmatprep.mubr.f32.mxu0 %v106
  %251 = vmatmul.mubr.f32.gmra.mrb[0].mxu0 %v35
  %v252 = vpop.f32.mrb[0].mxu0
  %v253 = vadd.f32 0.0, %v252
  %v254 = vpop.f32.mrb[0].mxu0
  %255 = vmatprep.mubr.f32.mxu0 %v109
  %256 = vmatmul.mubr.f32.gmra.mrb[0].mxu0 %v37
  %v257 = vpop.f32.mrb[0].mxu0
  %v258 = vadd.f32 0.0, %v257
  %v259 = vpop.f32.mrb[0].mxu0
  %260 = vmatprep.mubr.f32.mxu0 %v112
  %261 = vmatmul.mubr.f32.gmra.mrb[0].mxu0 %v39
  %v262 = vpop.f32.mrb[0].mxu0
  %v263 = vadd.f32 0.0, %v262
  %v264 = vpop.f32.mrb[0].mxu0
  %265 = vmatprep.mubr.f32.mxu0 %v115
  %266 = vmatmul.mubr.f32.gmra.mrb[0].mxu0 %v41
  %v267 = vpop.f32.mrb[0].mxu0
  %v268 = vadd.f32 0.0, %v267
  %v269 = vpop.f32.mrb[0].mxu0
  %270 = vmatprep.mubr.f32.mxu0 %v118
  %271 = vmatmul.mubr.f32.gmra.mrb[0].mxu0 %v43
  %v272 = vpop.f32.mrb[0].mxu0
  %v273 = vadd.f32 0.0, %v272
  %v274 = vpop.f32.mrb[0].mxu0
  %275 = vmatprep.mubr.f32.mxu0 %v121
  %276 = vmatmul.mubr.f32.gmra.mrb[0].mxu0 %v45
  %v277 = vpop.f32.mrb[0].mxu0
  %v278 = vadd.f32 0.0, %v277
  %v279 = vpop.f32.mrb[0].mxu0
  %280 = vmatprep.mubr.f32.mxu0 %v124
  %281 = vmatmul.mubr.f32.gmra.mrb[0].mxu0 %v47
  %v282 = vpop.f32.mrb[0].mxu0
  %v283 = vadd.f32 0.0, %v282
  %v284 = vpop.f32.mrb[0].mxu0
  %285 = vmatprep.mubr.f32.mxu0 %v127
  %286 = vmatmul.mubr.f32.gmra.mrb[0].mxu0 %v49
  %v287 = vpop.f32.mrb[0].mxu0
  %v288 = vadd.f32 0.0, %v287
  %v289 = vpop.f32.mrb[0].mxu0
  %290 = vmatprep.mubr.f32.mxu0 %v130
  %291 = vmatmul.mubr.f32.gmra.mrb[0].mxu0 %v51
  %v292 = vpop.f32.mrb[0].mxu0
  %v293 = vadd.f32 0.0, %v292
  %v294 = vpop.f32.mrb[0].mxu0
  %295 = vmatprep.mubr.f32.mxu0 %v133
  %296 = vmatmul.mubr.f32.gmra.mrb[0].mxu0 %v53
  %v297 = vpop.f32.mrb[0].mxu0
  %v298 = vadd.f32 0.0, %v297
  %v299 = vpop.f32.mrb[0].mxu0
  %300 = vmatprep.mubr.f32.mxu0 %v136
  %301 = vmatmul.mubr.f32.gmra.mrb[0].mxu0 %v55
  %v302 = vpop.f32.mrb[0].mxu0
  %v303 = vadd.f32 0.0, %v302
  %v304 = vpop.f32.mrb[0].mxu0
  %305 = vmatprep.mubr.f32.mxu0 %v139
  %306 = vmatmul.mubr.f32.gmra.mrb[0].mxu0 %v57
  %v307 = vpop.f32.mrb[0].mxu0
  %v308 = vadd.f32 0.0, %v307
  %v309 = vpop.f32.mrb[0].mxu0
  %310 = vdwg.mxu0
  %v311 = vld [vmem:[%s2] sm:$0x1]
  %v313 = vlaneseq
  %v314 = vshrl.u32 %v313, 7
  %v315 = vsub.s32 0, %v314
  %v316 = vrot.slane %v311, %v315
  %v318 = vmul.f32 %v208, %v316
  %v319 = vmul.f32 %v213, %v316
  %v320 = vmul.f32 %v218, %v316
  %v321 = vmul.f32 %v223, %v316
  %v322 = vmul.f32 %v228, %v316
  %v323 = vmul.f32 %v233, %v316
  %v324 = vmul.f32 %v238, %v316
  %v325 = vmul.f32 %v243, %v316
  %v326 = vmul.f32 %v248, %v316
  %v327 = vmul.f32 %v253, %v316
  %v328 = vmul.f32 %v258, %v316
  %v329 = vmul.f32 %v263, %v316
  %v330 = vmul.f32 %v268, %v316
  %v331 = vmul.f32 %v273, %v316
  %v332 = vmul.f32 %v278, %v316
  %v333 = vmul.f32 %v283, %v316
  %v334 = vmul.f32 %v288, %v316
  %v335 = vmul.f32 %v293, %v316
  %v336 = vmul.f32 %v298, %v316
  %v337 = vmul.f32 %v303, %v316
  %v338 = vmul.f32 %v308, %v316
  %v339 = vld [vmem:[%s3] sm:$0x1]
  %v341 = vlaneseq
  %v342 = vshrl.u32 %v341, 7
  %v343 = vsub.s32 0, %v342
  %v344 = vrot.slane %v339, %v343
  %v346 = vadd.f32 %v318, %v344
  %v347 = vadd.f32 %v319, %v344
  %v348 = vadd.f32 %v320, %v344
  %v349 = vadd.f32 %v321, %v344
  %v350 = vadd.f32 %v322, %v344
  %v351 = vadd.f32 %v323, %v344
  %v352 = vadd.f32 %v324, %v344
  %v353 = vadd.f32 %v325, %v344
  %v354 = vadd.f32 %v326, %v344
  %v355 = vadd.f32 %v327, %v344
  %v356 = vadd.f32 %v328, %v344
  %v357 = vadd.f32 %v329, %v344
  %v358 = vadd.f32 %v330, %v344
  %v359 = vadd.f32 %v331, %v344
  %v360 = vadd.f32 %v332, %v344
  %v361 = vadd.f32 %v333, %v344
  %v362 = vadd.f32 %v334, %v344
  %v363 = vadd.f32 %v335, %v344
  %v364 = vadd.f32 %v336, %v344
  %v365 = vadd.f32 %v337, %v344
  %v366 = vadd.f32 %v338, %v344
  %v367 = vsub.f32 0.0, %v346
  %v368 = vsub.f32 0.0, %v347
  %v369 = vsub.f32 0.0, %v348
  %v370 = vsub.f32 0.0, %v349
  %v371 = vsub.f32 0.0, %v350
  %v372 = vsub.f32 0.0, %v351
  %v373 = vsub.f32 0.0, %v352
  %v374 = vsub.f32 0.0, %v353
  %v375 = vsub.f32 0.0, %v354
  %v376 = vsub.f32 0.0, %v355
  %v377 = vsub.f32 0.0, %v356
  %v378 = vsub.f32 0.0, %v357
  %v379 = vsub.f32 0.0, %v358
  %v380 = vsub.f32 0.0, %v359
  %v381 = vsub.f32 0.0, %v360
  %v382 = vsub.f32 0.0, %v361
  %v383 = vsub.f32 0.0, %v362
  %v384 = vsub.f32 0.0, %v363
  %v385 = vsub.f32 0.0, %v364
  %v386 = vsub.f32 0.0, %v365
  %v387 = vsub.f32 0.0, %v366
  %v388 = vmul.f32 %v367, 1.442695
  %v389 = vpow.pop %v388
  %v390 = vmul.f32 %v368, 1.442695
  %v391 = vpow.pop %v390
  %v392 = vmul.f32 %v369, 1.442695
  %v393 = vpow.pop %v392
  %v394 = vmul.f32 %v370, 1.442695
  %v395 = vpow.pop %v394
  %v396 = vmul.f32 %v371, 1.442695
  %v397 = vpow.pop %v396
  %v398 = vmul.f32 %v372, 1.442695
  %v399 = vpow.pop %v398
  %v400 = vmul.f32 %v373, 1.442695
  %v401 = vpow.pop %v400
  %v402 = vmul.f32 %v374, 1.442695
  %v403 = vpow.pop %v402
  %v404 = vmul.f32 %v375, 1.442695
  %v405 = vpow.pop %v404
  %v406 = vmul.f32 %v376, 1.442695
  %v407 = vpow.pop %v406
  %v408 = vmul.f32 %v377, 1.442695
  %v409 = vpow.pop %v408
  %v410 = vmul.f32 %v378, 1.442695
  %v411 = vpow.pop %v410
  %v412 = vmul.f32 %v379, 1.442695
  %v413 = vpow.pop %v412
  %v414 = vmul.f32 %v380, 1.442695
  %v415 = vpow.pop %v414
  %v416 = vmul.f32 %v381, 1.442695
  %v417 = vpow.pop %v416
  %v418 = vmul.f32 %v382, 1.442695
  %v419 = vpow.pop %v418
  %v420 = vmul.f32 %v383, 1.442695
  %v421 = vpow.pop %v420
  %v422 = vmul.f32 %v384, 1.442695
  %v423 = vpow.pop %v422
  %v424 = vmul.f32 %v385, 1.442695
  %v425 = vpow.pop %v424
  %v426 = vmul.f32 %v386, 1.442695
  %v427 = vpow.pop %v426
  %v428 = vmul.f32 %v387, 1.442695
  %v429 = vpow.pop %v428
  %v430 = vadd.f32 %v389, 1.0
  %v431 = vadd.f32 %v391, 1.0
  %v432 = vadd.f32 %v393, 1.0
  %v433 = vadd.f32 %v395, 1.0
  %v434 = vadd.f32 %v397, 1.0
  %v435 = vadd.f32 %v399, 1.0
  %v436 = vadd.f32 %v401, 1.0
  %v437 = vadd.f32 %v403, 1.0
  %v438 = vadd.f32 %v405, 1.0
  %v439 = vadd.f32 %v407, 1.0
  %v440 = vadd.f32 %v409, 1.0
  %v441 = vadd.f32 %v411, 1.0
  %v442 = vadd.f32 %v413, 1.0
  %v443 = vadd.f32 %v415, 1.0
  %v444 = vadd.f32 %v417, 1.0
  %v445 = vadd.f32 %v419, 1.0
  %v446 = vadd.f32 %v421, 1.0
  %v447 = vadd.f32 %v423, 1.0
  %v448 = vadd.f32 %v425, 1.0
  %v449 = vadd.f32 %v427, 1.0
  %v450 = vadd.f32 %v429, 1.0
  %v451 = vrcp.pop %v430
  %v452 = vmul.f32 1.0, %v451
  %v453 = vrcp.pop %v431
  %v454 = vmul.f32 1.0, %v453
  %v455 = vrcp.pop %v432
  %v456 = vmul.f32 1.0, %v455
  %v457 = vrcp.pop %v433
  %v458 = vmul.f32 1.0, %v457
  %v459 = vrcp.pop %v434
  %v460 = vmul.f32 1.0, %v459
  %v461 = vrcp.pop %v435
  %v462 = vmul.f32 1.0, %v461
  %v463 = vrcp.pop %v436
  %v464 = vmul.f32 1.0, %v463
  %v465 = vrcp.pop %v437
  %v466 = vmul.f32 1.0, %v465
  %v467 = vrcp.pop %v438
  %v468 = vmul.f32 1.0, %v467
  %v469 = vrcp.pop %v439
  %v470 = vmul.f32 1.0, %v469
  %v471 = vrcp.pop %v440
  %v472 = vmul.f32 1.0, %v471
  %v473 = vrcp.pop %v441
  %v474 = vmul.f32 1.0, %v473
  %v475 = vrcp.pop %v442
  %v476 = vmul.f32 1.0, %v475
  %v477 = vrcp.pop %v443
  %v478 = vmul.f32 1.0, %v477
  %v479 = vrcp.pop %v444
  %v480 = vmul.f32 1.0, %v479
  %v481 = vrcp.pop %v445
  %v482 = vmul.f32 1.0, %v481
  %v483 = vrcp.pop %v446
  %v484 = vmul.f32 1.0, %v483
  %v485 = vrcp.pop %v447
  %v486 = vmul.f32 1.0, %v485
  %v487 = vrcp.pop %v448
  %v488 = vmul.f32 1.0, %v487
  %v489 = vrcp.pop %v449
  %v490 = vmul.f32 1.0, %v489
  %v491 = vrcp.pop %v450
  %v492 = vmul.f32 1.0, %v491
  %v493 = vmul.f32 %v346, %v452
  %v494 = vmul.f32 %v347, %v454
  %v495 = vmul.f32 %v348, %v456
  %v496 = vmul.f32 %v349, %v458
  %v497 = vmul.f32 %v350, %v460
  %v498 = vmul.f32 %v351, %v462
  %v499 = vmul.f32 %v352, %v464
  %v500 = vmul.f32 %v353, %v466
  %v501 = vmul.f32 %v354, %v468
  %v502 = vmul.f32 %v355, %v470
  %v503 = vmul.f32 %v356, %v472
  %v504 = vmul.f32 %v357, %v474
  %v505 = vmul.f32 %v358, %v476
  %v506 = vmul.f32 %v359, %v478
  %v507 = vmul.f32 %v360, %v480
  %v508 = vmul.f32 %v361, %v482
  %v509 = vmul.f32 %v362, %v484
  %v510 = vmul.f32 %v363, %v486
  %v511 = vmul.f32 %v364, %v488
  %v512 = vmul.f32 %v365, %v490
  %v513 = vmul.f32 %v366, %v492
  %514 = vst.msk [vmem:[%s4] sm:$0xff] %vm77, %v493
  %515 = vst.msk [vmem:[%s4 + $0x8] sm:$0xff] %vm77, %v494
  %516 = vst.msk [vmem:[%s4 + $0x10] sm:$0xff] %vm77, %v495
  %517 = vst.msk [vmem:[%s4 + $0x18] sm:$0xff] %vm77, %v496
  %518 = vst.msk [vmem:[%s4 + $0x20] sm:$0xff] %vm77, %v497
  %519 = vst.msk [vmem:[%s4 + $0x28] sm:$0xff] %vm77, %v498
  %520 = vst.msk [vmem:[%s4 + $0x30] sm:$0xff] %vm77, %v499
  %521 = vst.msk [vmem:[%s4 + $0x38] sm:$0xff] %vm77, %v500
  %522 = vst.msk [vmem:[%s4 + $0x40] sm:$0xff] %vm77, %v501
  %523 = vst.msk [vmem:[%s4 + $0x48] sm:$0xff] %vm77, %v502
  %524 = vst.msk [vmem:[%s4 + $0x50] sm:$0xff] %vm77, %v503
  %525 = vst.msk [vmem:[%s4 + $0x58] sm:$0xff] %vm77, %v504
  %526 = vst.msk [vmem:[%s4 + $0x60] sm:$0xff] %vm77, %v505
  %527 = vst.msk [vmem:[%s4 + $0x68] sm:$0xff] %vm77, %v506
  %528 = vst.msk [vmem:[%s4 + $0x70] sm:$0xff] %vm77, %v507
  %529 = vst.msk [vmem:[%s4 + $0x78] sm:$0xff] %vm77, %v508
  %530 = vst.msk [vmem:[%s4 + $0x80] sm:$0xff] %vm77, %v509
  %531 = vst.msk [vmem:[%s4 + $0x88] sm:$0xff] %vm77, %v510
  %532 = vst.msk [vmem:[%s4 + $0x90] sm:$0xff] %vm77, %v511
  %533 = vst.msk [vmem:[%s4 + $0x98] sm:$0xff] %vm77, %v512
  %vm534 = vcmask 123904
  %535 = vst.msk [vmem:[%s4 + $0xa0] sm:$0x3] %vm534, %v513
  // Predicated region
  $region18: #{_lambda_.24} parent=0 // pred_check
    _
  $region19: #{_lambda_.24} parent=0 // pred_check_branch
    %537 = sbr.rel (0) target = $region21
  $region20: #{_lambda_.24} parent=0 // pred_region
    _
  $region21: #{_lambda_.24} parent=0 // pred_fallthru
    _
  // Predicated region
  $region22: #{_lambda_.24} parent=0 // pred_check
    _
  $region23: #{_lambda_.24} parent=0 // pred_check_branch
    %539 = sbr.rel (0) target = $region25
  $region24: #{_lambda_.24} parent=0 // pred_region
    _
  $region25: #{_lambda_.24} parent=0 // pred_fallthru
    _

// kernel: _lambda_.27
$region0: #{_lambda_.27}
  #allocation0 [shape = 'u32[]', space=smem, size = 0x4, offset = 0x4, fixed_abs, tag = 'smem constant byte address 0x4 - core index']
  #allocation1 [shape = 'u32[144,128]{1,0:T(1,128)}', space=vmem, size = 0x12000, scoped, tag = 'internal scratch']
  %s0 = inlined_call_operand.vmem [shape: f32[36,16], index: 0, kind: input, shape index: {}]
  %s1 = inlined_call_operand.vmem [shape: f32[16,8], index: 1, kind: input, shape index: {}]
  %s2 = inlined_call_operand.vmem [shape: f32[1,8], index: 2, kind: input, shape index: {}]
  %s3 = inlined_call_operand.vmem [shape: f32[1,8], index: 3, kind: input, shape index: {}]
  %s4 = inlined_call_operand.vmem [shape: f32[36,8], index: 4, kind: output, shape index: {}]
  %s5 = sld [smem:[#allocation0]]
  $region26: #{_lambda_.27} parent=0
    _
  %s7 = ssub.s32 1, %s5
  %s8 = scalar_select 0, %s7, %s5
  // Predicated region
  $region2: #{_lambda_.27} parent=0 // pred_check
    _
  $region3: #{_lambda_.27} parent=0 // pred_check_branch
    %10 = sbr.rel (0) target = $region5
  $region4: #{_lambda_.27} parent=0 // pred_region
    _
  $region5: #{_lambda_.27} parent=0 // pred_fallthru
    _
  // Predicated region
  $region6: #{_lambda_.27} parent=0 // pred_check
    _
  $region7: #{_lambda_.27} parent=0 // pred_check_branch
    %12 = sbr.rel (0) target = $region9
  $region8: #{_lambda_.27} parent=0 // pred_region
    _
  $region9: #{_lambda_.27} parent=0 // pred_fallthru
    _
  // Predicated region
  $region10: #{_lambda_.27} parent=0 // pred_check
    _
  $region11: #{_lambda_.27} parent=0 // pred_check_branch
    %14 = sbr.rel (0) target = $region13
  $region12: #{_lambda_.27} parent=0 // pred_region
    _
  $region13: #{_lambda_.27} parent=0 // pred_fallthru
    _
  // Predicated region
  $region14: #{_lambda_.27} parent=0 // pred_check
    _
  $region15: #{_lambda_.27} parent=0 // pred_check_branch
    %16 = sbr.rel (0) target = $region17
  $region16: #{_lambda_.27} parent=0 // pred_region
    _
  $region17: #{_lambda_.27} parent=0 // pred_fallthru
    _
  %v17 = vld [vmem:[%s0] sm:$0xff]
  %v18 = vld [vmem:[%s0 + $0x8] sm:$0xff]
  %v19 = vld [vmem:[%s0 + $0x10] sm:$0xff]
  %v20 = vld [vmem:[%s0 + $0x18] sm:$0xff]
  %v21 = vld [vmem:[%s0 + $0x20] sm:$0xf]
  %v22 = vld [vmem:[%s1] sm:$0xff]
  %v23 = vld [vmem:[%s1 + $0x8] sm:$0xff]
  %vm24 = vcmask 130048
  %v26 = vsel %vm24, %v17, 0
  %v29 = vsel %vm24, %v18, 0
  %v32 = vsel %vm24, %v19, 0
  %v35 = vsel %vm24, %v20, 0
  %v38 = vsel %vm24, %v21, 0
  %40 = vmatprep.subr.mxu0 0.0
  %41 = vmatpush1.msra.mxu0 %v22
  %42 = vmatprep.subr.mxu0 0.0
  %43 = vmatpush1.msra.mxu0 %v23
  %44 = vmatprep.subr.mxu0 0.0
  %45 = vmatpush1.msra.mxu0 0.0
  %46 = vmatprep.subr.mxu0 0.0
  %47 = vmatpush1.msra.mxu0 0.0
  %48 = vmatprep.subr.mxu0 0.0
  %49 = vmatpush1.msra.mxu0 0.0
  %50 = vmatprep.subr.mxu0 0.0
  %51 = vmatpush1.msra.mxu0 0.0
  %52 = vmatprep.subr.mxu0 0.0
  %53 = vmatpush1.msra.mxu0 0.0
  %54 = vmatprep.subr.mxu0 0.0
  %55 = vmatpush1.msra.mxu0 0.0
  %56 = vmatprep.subr.mxu0 0.0
  %57 = vmatpush1.msra.mxu0 0.0
  %58 = vmatprep.subr.mxu0 0.0
  %59 = vmatpush1.msra.mxu0 0.0
  %60 = vmatprep.subr.mxu0 0.0
  %61 = vmatpush1.msra.mxu0 0.0
  %62 = vmatprep.subr.mxu0 0.0
  %63 = vmatpush1.msra.mxu0 0.0
  %64 = vmatprep.subr.mxu0 0.0
  %65 = vmatpush1.msra.mxu0 0.0
  %66 = vmatprep.subr.mxu0 0.0
  %67 = vmatpush1.msra.mxu0 0.0
  %68 = vmatprep.subr.mxu0 0.0
  %69 = vmatpush1.msra.mxu0 0.0
  %70 = vmatprep.subr.mxu0 0.0
  %71 = vmatpush1.msra.mxu0 0.0
  %72 = vmatprep.subr.mxu0 0.0
  %73 = vmatpush1.msra.mxu0 0.0
  %74 = vmatprep.subr.mxu0 0.0
  %75 = vmatpush1.msra.mxu0 0.0
  %76 = vmatprep.subr.mxu0 0.0
  %77 = vmatpush1.msra.mxu0 0.0
  %78 = vmatprep.subr.mxu0 0.0
  %79 = vmatpush1.msra.mxu0 0.0
  %80 = vmatprep.subr.mxu0 0.0
  %81 = vmatpush1.msra.mxu0 0.0
  %82 = vmatprep.subr.mxu0 0.0
  %83 = vmatpush1.msra.mxu0 0.0
  %84 = vmatprep.subr.mxu0 0.0
  %85 = vmatpush1.msra.mxu0 0.0
  %86 = vmatprep.subr.mxu0 0.0
  %87 = vmatpush1.msra.mxu0 0.0
  %88 = vmatprep.subr.mxu0 0.0
  %89 = vmatpush1.msra.mxu0 0.0
  %90 = vmatprep.subr.mxu0 0.0
  %91 = vmatpush1.msra.mxu0 0.0
  %92 = vmatprep.subr.mxu0 0.0
  %93 = vmatpush1.msra.mxu0 0.0
  %94 = vmatprep.subr.mxu0 0.0
  %95 = vmatpush1.msra.mxu0 0.0
  %96 = vmatprep.subr.mxu0 0.0
  %97 = vmatpush1.msra.mxu0 0.0
  %98 = vmatprep.subr.mxu0 0.0
  %99 = vmatpush1.msra.mxu0 0.0
  %100 = vmatprep.subr.mxu0 0.0
  %101 = vmatpush1.msra.mxu0 0.0
  %102 = vmatprep.subr.mxu0 0.0
  %103 = vmatpush1.msra.mxu0 0.0
  %104 = vmatprep.mubr.f32.mxu0 0.0
  %105 = vmatmul.mubr.f32.gmra.mrb[0].mxu0 %v26
  %v106 = vpop.f32.mrb[0].mxu0
  %v107 = vadd.f32 0.0, %v106
  %v108 = vpop.f32.mrb[0].mxu0
  %109 = vmatprep.mubr.f32.mxu0 0.0
  %110 = vmatmul.mubr.f32.gmra.mrb[0].mxu0 %v29
  %v111 = vpop.f32.mrb[0].mxu0
  %v112 = vadd.f32 0.0, %v111
  %v113 = vpop.f32.mrb[0].mxu0
  %114 = vmatprep.mubr.f32.mxu0 0.0
  %115 = vmatmul.mubr.f32.gmra.mrb[0].mxu0 %v32
  %v116 = vpop.f32.mrb[0].mxu0
  %v117 = vadd.f32 0.0, %v116
  %v118 = vpop.f32.mrb[0].mxu0
  %119 = vmatprep.mubr.f32.mxu0 0.0
  %120 = vmatmul.mubr.f32.gmra.mrb[0].mxu0 %v35
  %v121 = vpop.f32.mrb[0].mxu0
  %v122 = vadd.f32 0.0, %v121
  %v123 = vpop.f32.mrb[0].mxu0
  %124 = vmatprep.mubr.f32.mxu0 0.0
  %125 = vmatmul.mubr.f32.gmra.mrb[0].mxu0 %v38
  %v126 = vpop.f32.mrb[0].mxu0
  %v127 = vadd.f32 0.0, %v126
  %v128 = vpop.f32.mrb[0].mxu0
  %129 = vdwg.mxu0
  %v130 = vld [vmem:[%s2] sm:$0x1]
  %v132 = vlaneseq
  %v133 = vshrl.u32 %v132, 7
  %v134 = vsub.s32 0, %v133
  %v135 = vrot.slane %v130, %v134
  %v137 = vmul.f32 %v107, %v135
  %v138 = vmul.f32 %v112, %v135
  %v139 = vmul.f32 %v117, %v135
  %v140 = vmul.f32 %v122, %v135
  %v141 = vmul.f32 %v127, %v135
  %v142 = vld [vmem:[%s3] sm:$0x1]
  %v144 = vlaneseq
  %v145 = vshrl.u32 %v144, 7
  %v146 = vsub.s32 0, %v145
  %v147 = vrot.slane %v142, %v146
  %v149 = vadd.f32 %v137, %v147
  %v150 = vadd.f32 %v138, %v147
  %v151 = vadd.f32 %v139, %v147
  %v152 = vadd.f32 %v140, %v147
  %v153 = vadd.f32 %v141, %v147
  %v154 = vadd.f32 %v149, 3.0
  %v155 = vadd.f32 %v150, 3.0
  %v156 = vadd.f32 %v151, 3.0
  %v157 = vadd.f32 %v152, 3.0
  %v158 = vadd.f32 %v153, 3.0
  %v159 = vmax.f32 %v154, 0.0
  %v160 = vmax.f32 %v155, 0.0
  %v161 = vmax.f32 %v156, 0.0
  %v162 = vmax.f32 %v157, 0.0
  %v163 = vmax.f32 %v158, 0.0
  %v164 = vmin.f32 %v159, 6.0
  %v165 = vmin.f32 %v160, 6.0
  %v166 = vmin.f32 %v161, 6.0
  %v167 = vmin.f32 %v162, 6.0
  %v168 = vmin.f32 %v163, 6.0
  %v169 = vmul.f32 %v164, 0.16666667
  %v170 = vmul.f32 %v165, 0.16666667
  %v171 = vmul.f32 %v166, 0.16666667
  %v172 = vmul.f32 %v167, 0.16666667
  %v173 = vmul.f32 %v168, 0.16666667
  %v174 = vmul.f32 %v149, %v169
  %v175 = vmul.f32 %v150, %v170
  %v176 = vmul.f32 %v151, %v171
  %v177 = vmul.f32 %v152, %v172
  %v178 = vmul.f32 %v153, %v173
  %vm179 = vcmask 64512
  %180 = vst.msk [vmem:[%s4] sm:$0xff] %vm179, %v174
  %181 = vst.msk [vmem:[%s4 + $0x8] sm:$0xff] %vm179, %v175
  %182 = vst.msk [vmem:[%s4 + $0x10] sm:$0xff] %vm179, %v176
  %183 = vst.msk [vmem:[%s4 + $0x18] sm:$0xff] %vm179, %v177
  %vm184 = vcmask 60416
  %185 = vst.msk [vmem:[%s4 + $0x20] sm:$0xf] %vm184, %v178
  // Predicated region
  $region18: #{_lambda_.27} parent=0 // pred_check
    _
  $region19: #{_lambda_.27} parent=0 // pred_check_branch
    %187 = sbr.rel (0) target = $region21
  $region20: #{_lambda_.27} parent=0 // pred_region
    _
  $region21: #{_lambda_.27} parent=0 // pred_fallthru
    _
  // Predicated region
  $region22: #{_lambda_.27} parent=0 // pred_check
    _
  $region23: #{_lambda_.27} parent=0 // pred_check_branch
    %189 = sbr.rel (0) target = $region25
  $region24: #{_lambda_.27} parent=0 // pred_region
    _
  $region25: #{_lambda_.27} parent=0 // pred_fallthru
    _

// kernel: _lambda_.28
$region0: #{_lambda_.28}
  #allocation0 [shape = 'u32[]', space=smem, size = 0x4, offset = 0x4, fixed_abs, tag = 'smem constant byte address 0x4 - core index']
  #allocation1 [shape = 'u32[144,128]{1,0:T(1,128)}', space=vmem, size = 0x12000, scoped, tag = 'internal scratch']
  %s0 = inlined_call_operand.vmem [shape: f32[18,8], index: 0, kind: input, shape index: {}]
  %s1 = inlined_call_operand.vmem [shape: f32[8,16], index: 1, kind: input, shape index: {}]
  %s2 = inlined_call_operand.vmem [shape: f32[1,16], index: 2, kind: input, shape index: {}]
  %s3 = inlined_call_operand.vmem [shape: f32[1,16], index: 3, kind: input, shape index: {}]
  %s4 = inlined_call_operand.vmem [shape: f32[18,16], index: 4, kind: output, shape index: {}]
  %s5 = sld [smem:[#allocation0]]
  $region26: #{_lambda_.28} parent=0
    _
  %s7 = ssub.s32 1, %s5
  %s8 = scalar_select 0, %s7, %s5
  // Predicated region
  $region2: #{_lambda_.28} parent=0 // pred_check
    _
  $region3: #{_lambda_.28} parent=0 // pred_check_branch
    %10 = sbr.rel (0) target = $region5
  $region4: #{_lambda_.28} parent=0 // pred_region
    _
  $region5: #{_lambda_.28} parent=0 // pred_fallthru
    _
  // Predicated region
  $region6: #{_lambda_.28} parent=0 // pred_check
    _
  $region7: #{_lambda_.28} parent=0 // pred_check_branch
    %12 = sbr.rel (0) target = $region9
  $region8: #{_lambda_.28} parent=0 // pred_region
    _
  $region9: #{_lambda_.28} parent=0 // pred_fallthru
    _
  // Predicated region
  $region10: #{_lambda_.28} parent=0 // pred_check
    _
  $region11: #{_lambda_.28} parent=0 // pred_check_branch
    %14 = sbr.rel (0) target = $region13
  $region12: #{_lambda_.28} parent=0 // pred_region
    _
  $region13: #{_lambda_.28} parent=0 // pred_fallthru
    _
  // Predicated region
  $region14: #{_lambda_.28} parent=0 // pred_check
    _
  $region15: #{_lambda_.28} parent=0 // pred_check_branch
    %16 = sbr.rel (0) target = $region17
  $region16: #{_lambda_.28} parent=0 // pred_region
    _
  $region17: #{_lambda_.28} parent=0 // pred_fallthru
    _
  %v17 = vld [vmem:[%s0] sm:$0xff]
  %v18 = vld [vmem:[%s0 + $0x8] sm:$0xff]
  %v19 = vld [vmem:[%s0 + $0x10] sm:$0x3]
  %v20 = vld [vmem:[%s1] sm:$0xff]
  %vm21 = vcmask 64512
  %v23 = vsel %vm21, %v17, 0
  %v26 = vsel %vm21, %v18, 0
  %v29 = vsel %vm21, %v19, 0
  %31 = vmatprep.subr.mxu0 0.0
  %32 = vmatpush1.msra.mxu0 %v20
  %33 = vmatprep.subr.mxu0 0.0
  %34 = vmatpush1.msra.mxu0 0.0
  %35 = vmatprep.subr.mxu0 0.0
  %36 = vmatpush1.msra.mxu0 0.0
  %37 = vmatprep.subr.mxu0 0.0
  %38 = vmatpush1.msra.mxu0 0.0
  %39 = vmatprep.subr.mxu0 0.0
  %40 = vmatpush1.msra.mxu0 0.0
  %41 = vmatprep.subr.mxu0 0.0
  %42 = vmatpush1.msra.mxu0 0.0
  %43 = vmatprep.subr.mxu0 0.0
  %44 = vmatpush1.msra.mxu0 0.0
  %45 = vmatprep.subr.mxu0 0.0
  %46 = vmatpush1.msra.mxu0 0.0
  %47 = vmatprep.subr.mxu0 0.0
  %48 = vmatpush1.msra.mxu0 0.0
  %49 = vmatprep.subr.mxu0 0.0
  %50 = vmatpush1.msra.mxu0 0.0
  %51 = vmatprep.subr.mxu0 0.0
  %52 = vmatpush1.msra.mxu0 0.0
  %53 = vmatprep.subr.mxu0 0.0
  %54 = vmatpush1.msra.mxu0 0.0
  %55 = vmatprep.subr.mxu0 0.0
  %56 = vmatpush1.msra.mxu0 0.0
  %57 = vmatprep.subr.mxu0 0.0
  %58 = vmatpush1.msra.mxu0 0.0
  %59 = vmatprep.subr.mxu0 0.0
  %60 = vmatpush1.msra.mxu0 0.0
  %61 = vmatprep.subr.mxu0 0.0
  %62 = vmatpush1.msra.mxu0 0.0
  %63 = vmatprep.subr.mxu0 0.0
  %64 = vmatpush1.msra.mxu0 0.0
  %65 = vmatprep.subr.mxu0 0.0
  %66 = vmatpush1.msra.mxu0 0.0
  %67 = vmatprep.subr.mxu0 0.0
  %68 = vmatpush1.msra.mxu0 0.0
  %69 = vmatprep.subr.mxu0 0.0
  %70 = vmatpush1.msra.mxu0 0.0
  %71 = vmatprep.subr.mxu0 0.0
  %72 = vmatpush1.msra.mxu0 0.0
  %73 = vmatprep.subr.mxu0 0.0
  %74 = vmatpush1.msra.mxu0 0.0
  %75 = vmatprep.subr.mxu0 0.0
  %76 = vmatpush1.msra.mxu0 0.0
  %77 = vmatprep.subr.mxu0 0.0
  %78 = vmatpush1.msra.mxu0 0.0
  %79 = vmatprep.subr.mxu0 0.0
  %80 = vmatpush1.msra.mxu0 0.0
  %81 = vmatprep.subr.mxu0 0.0
  %82 = vmatpush1.msra.mxu0 0.0
  %83 = vmatprep.subr.mxu0 0.0
  %84 = vmatpush1.msra.mxu0 0.0
  %85 = vmatprep.subr.mxu0 0.0
  %86 = vmatpush1.msra.mxu0 0.0
  %87 = vmatprep.subr.mxu0 0.0
  %88 = vmatpush1.msra.mxu0 0.0
  %89 = vmatprep.subr.mxu0 0.0
  %90 = vmatpush1.msra.mxu0 0.0
  %91 = vmatprep.subr.mxu0 0.0
  %92 = vmatpush1.msra.mxu0 0.0
  %93 = vmatprep.subr.mxu0 0.0
  %94 = vmatpush1.msra.mxu0 0.0
  %95 = vmatprep.mubr.f32.mxu0 0.0
  %96 = vmatmul.mubr.f32.gmra.mrb[0].mxu0 %v23
  %v97 = vpop.f32.mrb[0].mxu0
  %v98 = vadd.f32 0.0, %v97
  %v99 = vpop.f32.mrb[0].mxu0
  %100 = vmatprep.mubr.f32.mxu0 0.0
  %101 = vmatmul.mubr.f32.gmra.mrb[0].mxu0 %v26
  %v102 = vpop.f32.mrb[0].mxu0
  %v103 = vadd.f32 0.0, %v102
  %v104 = vpop.f32.mrb[0].mxu0
  %105 = vmatprep.mubr.f32.mxu0 0.0
  %106 = vmatmul.mubr.f32.gmra.mrb[0].mxu0 %v29
  %v107 = vpop.f32.mrb[0].mxu0
  %v108 = vadd.f32 0.0, %v107
  %v109 = vpop.f32.mrb[0].mxu0
  %110 = vdwg.mxu0
  %v111 = vld [vmem:[%s2] sm:$0x1]
  %v113 = vlaneseq
  %v114 = vshrl.u32 %v113, 7
  %v115 = vsub.s32 0, %v114
  %v116 = vrot.slane %v111, %v115
  %v118 = vmul.f32 %v98, %v116
  %v119 = vmul.f32 %v103, %v116
  %v120 = vmul.f32 %v108, %v116
  %v121 = vld [vmem:[%s3] sm:$0x1]
  %v123 = vlaneseq
  %v124 = vshrl.u32 %v123, 7
  %v125 = vsub.s32 0, %v124
  %v126 = vrot.slane %v121, %v125
  %v128 = vadd.f32 %v118, %v126
  %v129 = vadd.f32 %v119, %v126
  %v130 = vadd.f32 %v120, %v126
  %v131 = vsub.f32 0.0, %v128
  %v132 = vsub.f32 0.0, %v129
  %v133 = vsub.f32 0.0, %v130
  %v134 = vmul.f32 %v131, 1.442695
  %v135 = vpow.pop %v134
  %v136 = vmul.f32 %v132, 1.442695
  %v137 = vpow.pop %v136
  %v138 = vmul.f32 %v133, 1.442695
  %v139 = vpow.pop %v138
  %v140 = vadd.f32 %v135, 1.0
  %v141 = vadd.f32 %v137, 1.0
  %v142 = vadd.f32 %v139, 1.0
  %v143 = vrcp.pop %v140
  %v144 = vmul.f32 1.0, %v143
  %v145 = vrcp.pop %v141
  %v146 = vmul.f32 1.0, %v145
  %v147 = vrcp.pop %v142
  %v148 = vmul.f32 1.0, %v147
  %vm149 = vcmask 130048
  %150 = vst.msk [vmem:[%s4] sm:$0xff] %vm149, %v144
  %151 = vst.msk [vmem:[%s4 + $0x8] sm:$0xff] %vm149, %v146
  %vm152 = vcmask 123904
  %153 = vst.msk [vmem:[%s4 + $0x10] sm:$0x3] %vm152, %v148
  // Predicated region
  $region18: #{_lambda_.28} parent=0 // pred_check
    _
  $region19: #{_lambda_.28} parent=0 // pred_check_branch
    %155 = sbr.rel (0) target = $region21
  $region20: #{_lambda_.28} parent=0 // pred_region
    _
  $region21: #{_lambda_.28} parent=0 // pred_fallthru
    _
  // Predicated region
  $region22: #{_lambda_.28} parent=0 // pred_check
    _
  $region23: #{_lambda_.28} parent=0 // pred_check_branch
    %157 = sbr.rel (0) target = $region25
  $region24: #{_lambda_.28} parent=0 // pred_region
    _
  $region25: #{_lambda_.28} parent=0 // pred_fallthru
    _

// kernel: _lambda_.31
$region0: #{_lambda_.31}
  #allocation0 [shape = 'u32[]', space=smem, size = 0x4, offset = 0x4, fixed_abs, tag = 'smem constant byte address 0x4 - core index']
  #allocation1 [shape = 'u32[144,128]{1,0:T(1,128)}', space=vmem, size = 0x12000, scoped, tag = 'internal scratch']
  %s0 = inlined_call_operand.vmem [shape: f32[2,9,144], index: 0, kind: input, shape index: {}]
  %s1 = inlined_call_operand.vmem [shape: f32[2,1,144], index: 1, kind: input, shape index: {}]
  %s2 = inlined_call_operand.vmem [shape: f32[2,9,144], index: 2, kind: output, shape index: {}]
  %s3 = sld [smem:[#allocation0]]
  $region18: #{_lambda_.31} parent=0
    _
  %s5 = ssub.s32 1, %s3
  %s6 = scalar_select 0, %s5, %s3
  // Predicated region
  $region2: #{_lambda_.31} parent=0 // pred_check
    _
  $region3: #{_lambda_.31} parent=0 // pred_check_branch
    %8 = sbr.rel (0) target = $region5
  $region4: #{_lambda_.31} parent=0 // pred_region
    _
  $region5: #{_lambda_.31} parent=0 // pred_fallthru
    _
  // Predicated region
  $region6: #{_lambda_.31} parent=0 // pred_check
    _
  $region7: #{_lambda_.31} parent=0 // pred_check_branch
    %10 = sbr.rel (0) target = $region9
  $region8: #{_lambda_.31} parent=0 // pred_region
    _
  $region9: #{_lambda_.31} parent=0 // pred_fallthru
    _
  %v11 = vld [vmem:[%s0] sm:$0xff]
  %v12 = vld [vmem:[%s0 + $0x8] sm:$0xff]
  %v13 = vld [vmem:[%s0 + $0x10] sm:$0x1]
  %v14 = vld [vmem:[%s0 + $0x18] sm:$0x1]
  %v15 = vld [vmem:[%s0 + $0x20] sm:$0xff]
  %v16 = vld [vmem:[%s0 + $0x28] sm:$0xff]
  %v17 = vld [vmem:[%s0 + $0x30] sm:$0x1]
  %v18 = vld [vmem:[%s0 + $0x38] sm:$0x1]
  %v19 = vld [vmem:[%s1] sm:$0x3]
  %v20 = vld [vmem:[%s1 + $0x2] sm:$0x3]
  %v23 = vlaneseq
  %v24 = vshrl.u32 %v23, 7
  %v25 = vsub.s32 0, %v24
  %v26 = vrot.slane %v19, %v25
  %v27 = vlaneseq
  %v28 = vshrl.u32 %v27, 7
  %v29 = vsub.s32 1, %v28
  %v30 = vrot.slane %v19, %v29
  %v31 = vlaneseq
  %v32 = vshrl.u32 %v31, 7
  %v33 = vsub.s32 0, %v32
  %v34 = vrot.slane %v20, %v33
  %v35 = vlaneseq
  %v36 = vshrl.u32 %v35, 7
  %v37 = vsub.s32 1, %v36
  %v38 = vrot.slane %v20, %v37
  %v43 = vmul.f32 %v11, %v26
  %v44 = vmul.f32 %v12, %v30
  %v45 = vmul.f32 %v13, %v26
  %v46 = vmul.f32 %v14, %v30
  %v47 = vmul.f32 %v15, %v34
  %v48 = vmul.f32 %v16, %v38
  %v49 = vmul.f32 %v17, %v34
  %v50 = vmul.f32 %v18, %v38
  %51 = vst [vmem:[%s2] sm:$0xff] %v43
  %vm52 = vcmask 130048
  %53 = vst.msk [vmem:[%s2 + $0x8] sm:$0xff] %vm52, %v44
  %54 = vst [vmem:[%s2 + $0x10] sm:$0x1] %v45
  %vm55 = vcmask 122880
  %56 = vst.msk [vmem:[%s2 + $0x18] sm:$0x1] %vm55, %v46
  %57 = vst [vmem:[%s2 + $0x20] sm:$0xff] %v47
  %58 = vst.msk [vmem:[%s2 + $0x28] sm:$0xff] %vm52, %v48
  %59 = vst [vmem:[%s2 + $0x30] sm:$0x1] %v49
  %60 = vst.msk [vmem:[%s2 + $0x38] sm:$0x1] %vm55, %v50
  // Predicated region
  $region10: #{_lambda_.31} parent=0 // pred_check
    _
  $region11: #{_lambda_.31} parent=0 // pred_check_branch
    %62 = sbr.rel (0) target = $region13
  $region12: #{_lambda_.31} parent=0 // pred_region
    _
  $region13: #{_lambda_.31} parent=0 // pred_fallthru
    _
  // Predicated region
  $region14: #{_lambda_.31} parent=0 // pred_check
    _
  $region15: #{_lambda_.31} parent=0 // pred_check_branch
    %64 = sbr.rel (0) target = $region17
  $region16: #{_lambda_.31} parent=0 // pred_region
    _
  $region17: #{_lambda_.31} parent=0 // pred_fallthru
    _

// kernel: _lambda_.30
$region0: #{_lambda_.30}
  #allocation0 [shape = 'u32[]', space=smem, size = 0x4, offset = 0x4, fixed_abs, tag = 'smem constant byte address 0x4 - core index']
  #allocation1 [shape = 'u32[144,128]{1,0:T(1,128)}', space=vmem, size = 0x12000, scoped, tag = 'internal scratch']
  %s0 = inlined_call_operand.vmem [shape: f32[18,9,16], index: 0, kind: input, shape index: {}]
  %s1 = inlined_call_operand.vmem [shape: f32[18,1,16], index: 1, kind: input, shape index: {}]
  %s2 = inlined_call_operand.vmem [shape: f32[18,9,16], index: 2, kind: output, shape index: {}]
  %s3 = sld [smem:[#allocation0]]
  $region18: #{_lambda_.30} parent=0
    _
  %s5 = ssub.s32 1, %s3
  %s6 = scalar_select 0, %s5, %s3
  // Predicated region
  $region2: #{_lambda_.30} parent=0 // pred_check
    _
  $region3: #{_lambda_.30} parent=0 // pred_check_branch
    %8 = sbr.rel (0) target = $region5
  $region4: #{_lambda_.30} parent=0 // pred_region
    _
  $region5: #{_lambda_.30} parent=0 // pred_fallthru
    _
  // Predicated region
  $region6: #{_lambda_.30} parent=0 // pred_check
    _
  $region7: #{_lambda_.30} parent=0 // pred_check_branch
    %10 = sbr.rel (0) target = $region9
  $region8: #{_lambda_.30} parent=0 // pred_region
    _
  $region9: #{_lambda_.30} parent=0 // pred_fallthru
    _
  %v11 = vld [vmem:[%s0] sm:$0xff]
  %v12 = vld [vmem:[%s0 + $0x8] sm:$0x1]
  %v13 = vld [vmem:[%s0 + $0x10] sm:$0xff]
  %v14 = vld [vmem:[%s0 + $0x18] sm:$0x1]
  %v15 = vld [vmem:[%s0 + $0x20] sm:$0xff]
  %v16 = vld [vmem:[%s0 + $0x28] sm:$0x1]
  %v17 = vld [vmem:[%s0 + $0x30] sm:$0xff]
  %v18 = vld [vmem:[%s0 + $0x38] sm:$0x1]
  %v19 = vld [vmem:[%s0 + $0x40] sm:$0xff]
  %v20 = vld [vmem:[%s0 + $0x48] sm:$0x1]
  %v21 = vld [vmem:[%s0 + $0x50] sm:$0xff]
  %v22 = vld [vmem:[%s0 + $0x58] sm:$0x1]
  %v23 = vld [vmem:[%s0 + $0x60] sm:$0xff]
  %v24 = vld [vmem:[%s0 + $0x68] sm:$0x1]
  %v25 = vld [vmem:[%s0 + $0x70] sm:$0xff]
  %v26 = vld [vmem:[%s0 + $0x78] sm:$0x1]
  %v27 = vld [vmem:[%s0 + $0x80] sm:$0xff]
  %v28 = vld [vmem:[%s0 + $0x88] sm:$0x1]
  %v29 = vld [vmem:[%s0 + $0x90] sm:$0xff]
  %v30 = vld [vmem:[%s0 + $0x98] sm:$0x1]
  %v31 = vld [vmem:[%s0 + $0xa0] sm:$0xff]
  %v32 = vld [vmem:[%s0 + $0xa8] sm:$0x1]
  %v33 = vld [vmem:[%s0 + $0xb0] sm:$0xff]
  %v34 = vld [vmem:[%s0 + $0xb8] sm:$0x1]
  %v35 = vld [vmem:[%s0 + $0xc0] sm:$0xff]
  %v36 = vld [vmem:[%s0 + $0xc8] sm:$0x1]
  %v37 = vld [vmem:[%s0 + $0xd0] sm:$0xff]
  %v38 = vld [vmem:[%s0 + $0xd8] sm:$0x1]
  %v39 = vld [vmem:[%s0 + $0xe0] sm:$0xff]
  %v40 = vld [vmem:[%s0 + $0xe8] sm:$0x1]
  %v41 = vld [vmem:[%s0 + $0xf0] sm:$0xff]
  %v42 = vld [vmem:[%s0 + $0xf8] sm:$0x1]
  %v43 = vld [vmem:[%s0 + $0x100] sm:$0xff]
  %v44 = vld [vmem:[%s0 + $0x108] sm:$0x1]
  %v45 = vld [vmem:[%s0 + $0x110] sm:$0xff]
  %v46 = vld [vmem:[%s0 + $0x118] sm:$0x1]
  %v47 = vld [vmem:[%s1] sm:$0x1]
  %v48 = vld [vmem:[%s1 + $0x1] sm:$0x1]
  %v49 = vld [vmem:[%s1 + $0x2] sm:$0x1]
  %v50 = vld [vmem:[%s1 + $0x3] sm:$0x1]
  %v51 = vld [vmem:[%s1 + $0x4] sm:$0x1]
  %v52 = vld [vmem:[%s1 + $0x5] sm:$0x1]
  %v53 = vld [vmem:[%s1 + $0x6] sm:$0x1]
  %v54 = vld [vmem:[%s1 + $0x7] sm:$0x1]
  %v55 = vld [vmem:[%s1 + $0x8] sm:$0x1]
  %v56 = vld [vmem:[%s1 + $0x9] sm:$0x1]
  %v57 = vld [vmem:[%s1 + $0xa] sm:$0x1]
  %v58 = vld [vmem:[%s1 + $0xb] sm:$0x1]
  %v59 = vld [vmem:[%s1 + $0xc] sm:$0x1]
  %v60 = vld [vmem:[%s1 + $0xd] sm:$0x1]
  %v61 = vld [vmem:[%s1 + $0xe] sm:$0x1]
  %v62 = vld [vmem:[%s1 + $0xf] sm:$0x1]
  %v63 = vld [vmem:[%s1 + $0x10] sm:$0x1]
  %v64 = vld [vmem:[%s1 + $0x11] sm:$0x1]
  %v83 = vlaneseq
  %v84 = vshrl.u32 %v83, 7
  %v85 = vsub.s32 0, %v84
  %v86 = vrot.slane %v47, %v85
  %v87 = vlaneseq
  %v88 = vshrl.u32 %v87, 7
  %v89 = vsub.s32 0, %v88
  %v90 = vrot.slane %v48, %v89
  %v91 = vlaneseq
  %v92 = vshrl.u32 %v91, 7
  %v93 = vsub.s32 0, %v92
  %v94 = vrot.slane %v49, %v93
  %v95 = vlaneseq
  %v96 = vshrl.u32 %v95, 7
  %v97 = vsub.s32 0, %v96
  %v98 = vrot.slane %v50, %v97
  %v99 = vlaneseq
  %v100 = vshrl.u32 %v99, 7
  %v101 = vsub.s32 0, %v100
  %v102 = vrot.slane %v51, %v101
  %v103 = vlaneseq
  %v104 = vshrl.u32 %v103, 7
  %v105 = vsub.s32 0, %v104
  %v106 = vrot.slane %v52, %v105
  %v107 = vlaneseq
  %v108 = vshrl.u32 %v107, 7
  %v109 = vsub.s32 0, %v108
  %v110 = vrot.slane %v53, %v109
  %v111 = vlaneseq
  %v112 = vshrl.u32 %v111, 7
  %v113 = vsub.s32 0, %v112
  %v114 = vrot.slane %v54, %v113
  %v115 = vlaneseq
  %v116 = vshrl.u32 %v115, 7
  %v117 = vsub.s32 0, %v116
  %v118 = vrot.slane %v55, %v117
  %v119 = vlaneseq
  %v120 = vshrl.u32 %v119, 7
  %v121 = vsub.s32 0, %v120
  %v122 = vrot.slane %v56, %v121
  %v123 = vlaneseq
  %v124 = vshrl.u32 %v123, 7
  %v125 = vsub.s32 0, %v124
  %v126 = vrot.slane %v57, %v125
  %v127 = vlaneseq
  %v128 = vshrl.u32 %v127, 7
  %v129 = vsub.s32 0, %v128
  %v130 = vrot.slane %v58, %v129
  %v131 = vlaneseq
  %v132 = vshrl.u32 %v131, 7
  %v133 = vsub.s32 0, %v132
  %v134 = vrot.slane %v59, %v133
  %v135 = vlaneseq
  %v136 = vshrl.u32 %v135, 7
  %v137 = vsub.s32 0, %v136
  %v138 = vrot.slane %v60, %v137
  %v139 = vlaneseq
  %v140 = vshrl.u32 %v139, 7
  %v141 = vsub.s32 0, %v140
  %v142 = vrot.slane %v61, %v141
  %v143 = vlaneseq
  %v144 = vshrl.u32 %v143, 7
  %v145 = vsub.s32 0, %v144
  %v146 = vrot.slane %v62, %v145
  %v147 = vlaneseq
  %v148 = vshrl.u32 %v147, 7
  %v149 = vsub.s32 0, %v148
  %v150 = vrot.slane %v63, %v149
  %v151 = vlaneseq
  %v152 = vshrl.u32 %v151, 7
  %v153 = vsub.s32 0, %v152
  %v154 = vrot.slane %v64, %v153
  %v173 = vmul.f32 %v11, %v86
  %v174 = vmul.f32 %v12, %v86
  %v175 = vmul.f32 %v13, %v90
  %v176 = vmul.f32 %v14, %v90
  %v177 = vmul.f32 %v15, %v94
  %v178 = vmul.f32 %v16, %v94
  %v179 = vmul.f32 %v17, %v98
  %v180 = vmul.f32 %v18, %v98
  %v181 = vmul.f32 %v19, %v102
  %v182 = vmul.f32 %v20, %v102
  %v183 = vmul.f32 %v21, %v106
  %v184 = vmul.f32 %v22, %v106
  %v185 = vmul.f32 %v23, %v110
  %v186 = vmul.f32 %v24, %v110
  %v187 = vmul.f32 %v25, %v114
  %v188 = vmul.f32 %v26, %v114
  %v189 = vmul.f32 %v27, %v118
  %v190 = vmul.f32 %v28, %v118
  %v191 = vmul.f32 %v29, %v122
  %v192 = vmul.f32 %v30, %v122
  %v193 = vmul.f32 %v31, %v126
  %v194 = vmul.f32 %v32, %v126
  %v195 = vmul.f32 %v33, %v130
  %v196 = vmul.f32 %v34, %v130
  %v197 = vmul.f32 %v35, %v134
  %v198 = vmul.f32 %v36, %v134
  %v199 = vmul.f32 %v37, %v138
  %v200 = vmul.f32 %v38, %v138
  %v201 = vmul.f32 %v39, %v142
  %v202 = vmul.f32 %v40, %v142
  %v203 = vmul.f32 %v41, %v146
  %v204 = vmul.f32 %v42, %v146
  %v205 = vmul.f32 %v43, %v150
  %v206 = vmul.f32 %v44, %v150
  %v207 = vmul.f32 %v45, %v154
  %v208 = vmul.f32 %v46, %v154
  %vm209 = vcmask 130048
  %210 = vst.msk [vmem:[%s2] sm:$0xff] %vm209, %v173
  %vm211 = vcmask 122880
  %212 = vst.msk [vmem:[%s2 + $0x8] sm:$0x1] %vm211, %v174
  %213 = vst.msk [vmem:[%s2 + $0x10] sm:$0xff] %vm209, %v175
  %214 = vst.msk [vmem:[%s2 + $0x18] sm:$0x1] %vm211, %v176
  %215 = vst.msk [vmem:[%s2 + $0x20] sm:$0xff] %vm209, %v177
  %216 = vst.msk [vmem:[%s2 + $0x28] sm:$0x1] %vm211, %v178
  %217 = vst.msk [vmem:[%s2 + $0x30] sm:$0xff] %vm209, %v179
  %218 = vst.msk [vmem:[%s2 + $0x38] sm:$0x1] %vm211, %v180
  %219 = vst.msk [vmem:[%s2 + $0x40] sm:$0xff] %vm209, %v181
  %220 = vst.msk [vmem:[%s2 + $0x48] sm:$0x1] %vm211, %v182
  %221 = vst.msk [vmem:[%s2 + $0x50] sm:$0xff] %vm209, %v183
  %222 = vst.msk [vmem:[%s2 + $0x58] sm:$0x1] %vm211, %v184
  %223 = vst.msk [vmem:[%s2 + $0x60] sm:$0xff] %vm209, %v185
  %224 = vst.msk [vmem:[%s2 + $0x68] sm:$0x1] %vm211, %v186
  %225 = vst.msk [vmem:[%s2 + $0x70] sm:$0xff] %vm209, %v187
  %226 = vst.msk [vmem:[%s2 + $0x78] sm:$0x1] %vm211, %v188
  %227 = vst.msk [vmem:[%s2 + $0x80] sm:$0xff] %vm209, %v189
  %228 = vst.msk [vmem:[%s2 + $0x88] sm:$0x1] %vm211, %v190
  %229 = vst.msk [vmem:[%s2 + $0x90] sm:$0xff] %vm209, %v191
  %230 = vst.msk [vmem:[%s2 + $0x98] sm:$0x1] %vm211, %v192
  %231 = vst.msk [vmem:[%s2 + $0xa0] sm:$0xff] %vm209, %v193
  %232 = vst.msk [vmem:[%s2 + $0xa8] sm:$0x1] %vm211, %v194
  %233 = vst.msk [vmem:[%s2 + $0xb0] sm:$0xff] %vm209, %v195
  %234 = vst.msk [vmem:[%s2 + $0xb8] sm:$0x1] %vm211, %v196
  %235 = vst.msk [vmem:[%s2 + $0xc0] sm:$0xff] %vm209, %v197
  %236 = vst.msk [vmem:[%s2 + $0xc8] sm:$0x1] %vm211, %v198
  %237 = vst.msk [vmem:[%s2 + $0xd0] sm:$0xff] %vm209, %v199
  %238 = vst.msk [vmem:[%s2 + $0xd8] sm:$0x1] %vm211, %v200
  %239 = vst.msk [vmem:[%s2 + $0xe0] sm:$0xff] %vm209, %v201
  %240 = vst.msk [vmem:[%s2 + $0xe8] sm:$0x1] %vm211, %v202
  %241 = vst.msk [vmem:[%s2 + $0xf0] sm:$0xff] %vm209, %v203
  %242 = vst.msk [vmem:[%s2 + $0xf8] sm:$0x1] %vm211, %v204
  %243 = vst.msk [vmem:[%s2 + $0x100] sm:$0xff] %vm209, %v205
  %244 = vst.msk [vmem:[%s2 + $0x108] sm:$0x1] %vm211, %v206
  %245 = vst.msk [vmem:[%s2 + $0x110] sm:$0xff] %vm209, %v207
  %246 = vst.msk [vmem:[%s2 + $0x118] sm:$0x1] %vm211, %v208
  // Predicated region
  $region10: #{_lambda_.30} parent=0 // pred_check
    _
  $region11: #{_lambda_.30} parent=0 // pred_check_branch
    %248 = sbr.rel (0) target = $region13
  $region12: #{_lambda_.30} parent=0 // pred_region
    _
  $region13: #{_lambda_.30} parent=0 // pred_fallthru
    _
  // Predicated region
  $region14: #{_lambda_.30} parent=0 // pred_check
    _
  $region15: #{_lambda_.30} parent=0 // pred_check_branch
    %250 = sbr.rel (0) target = $region17
  $region16: #{_lambda_.30} parent=0 // pred_region
    _
  $region17: #{_lambda_.30} parent=0 // pred_fallthru
    _

// kernel: _lambda_.39
$region0: #{_lambda_.39}
  #allocation0 [shape = 'u32[]', space=smem, size = 0x4, offset = 0x4, fixed_abs, tag = 'smem constant byte address 0x4 - core index']
  #allocation1 [shape = 'u32[144,128]{1,0:T(1,128)}', space=vmem, size = 0x12000, scoped, tag = 'internal scratch']
  %s0 = inlined_call_operand.vmem [shape: f32[162,16], index: 0, kind: input, shape index: {}]
  %s1 = inlined_call_operand.vmem [shape: f32[16,32], index: 1, kind: input, shape index: {}]
  %s2 = inlined_call_operand.vmem [shape: f32[1,32], index: 2, kind: input, shape index: {}]
  %s3 = inlined_call_operand.vmem [shape: f32[1,32], index: 3, kind: input, shape index: {}]
  %s4 = inlined_call_operand.vmem [shape: f32[162,32], index: 4, kind: output, shape index: {}]
  %s5 = sld [smem:[#allocation0]]
  $region26: #{_lambda_.39} parent=0
    _
  %s7 = ssub.s32 1, %s5
  %s8 = scalar_select 0, %s7, %s5
  // Predicated region
  $region2: #{_lambda_.39} parent=0 // pred_check
    _
  $region3: #{_lambda_.39} parent=0 // pred_check_branch
    %10 = sbr.rel (0) target = $region5
  $region4: #{_lambda_.39} parent=0 // pred_region
    _
  $region5: #{_lambda_.39} parent=0 // pred_fallthru
    _
  // Predicated region
  $region6: #{_lambda_.39} parent=0 // pred_check
    _
  $region7: #{_lambda_.39} parent=0 // pred_check_branch
    %12 = sbr.rel (0) target = $region9
  $region8: #{_lambda_.39} parent=0 // pred_region
    _
  $region9: #{_lambda_.39} parent=0 // pred_fallthru
    _
  // Predicated region
  $region10: #{_lambda_.39} parent=0 // pred_check
    _
  $region11: #{_lambda_.39} parent=0 // pred_check_branch
    %14 = sbr.rel (0) target = $region13
  $region12: #{_lambda_.39} parent=0 // pred_region
    _
  $region13: #{_lambda_.39} parent=0 // pred_fallthru
    _
  // Predicated region
  $region14: #{_lambda_.39} parent=0 // pred_check
    _
  $region15: #{_lambda_.39} parent=0 // pred_check_branch
    %16 = sbr.rel (0) target = $region17
  $region16: #{_lambda_.39} parent=0 // pred_region
    _
  $region17: #{_lambda_.39} parent=0 // pred_fallthru
    _
  %v17 = vld [vmem:[%s0] sm:$0xff]
  %v18 = vld [vmem:[%s0 + $0x8] sm:$0xff]
  %v19 = vld [vmem:[%s0 + $0x10] sm:$0xff]
  %v20 = vld [vmem:[%s0 + $0x18] sm:$0xff]
  %v21 = vld [vmem:[%s0 + $0x20] sm:$0xff]
  %v22 = vld [vmem:[%s0 + $0x28] sm:$0xff]
  %v23 = vld [vmem:[%s0 + $0x30] sm:$0xff]
  %v24 = vld [vmem:[%s0 + $0x38] sm:$0xff]
  %v25 = vld [vmem:[%s0 + $0x40] sm:$0xff]
  %v26 = vld [vmem:[%s0 + $0x48] sm:$0xff]
  %v27 = vld [vmem:[%s0 + $0x50] sm:$0xff]
  %v28 = vld [vmem:[%s0 + $0x58] sm:$0xff]
  %v29 = vld [vmem:[%s0 + $0x60] sm:$0xff]
  %v30 = vld [vmem:[%s0 + $0x68] sm:$0xff]
  %v31 = vld [vmem:[%s0 + $0x70] sm:$0xff]
  %v32 = vld [vmem:[%s0 + $0x78] sm:$0xff]
  %v33 = vld [vmem:[%s0 + $0x80] sm:$0xff]
  %v34 = vld [vmem:[%s0 + $0x88] sm:$0xff]
  %v35 = vld [vmem:[%s0 + $0x90] sm:$0xff]
  %v36 = vld [vmem:[%s0 + $0x98] sm:$0xff]
  %v37 = vld [vmem:[%s0 + $0xa0] sm:$0x3]
  %v38 = vld [vmem:[%s1] sm:$0xff]
  %v39 = vld [vmem:[%s1 + $0x8] sm:$0xff]
  %vm40 = vcmask 130048
  %v42 = vsel %vm40, %v17, 0
  %v45 = vsel %vm40, %v18, 0
  %v48 = vsel %vm40, %v19, 0
  %v51 = vsel %vm40, %v20, 0
  %v54 = vsel %vm40, %v21, 0
  %v57 = vsel %vm40, %v22, 0
  %v60 = vsel %vm40, %v23, 0
  %v63 = vsel %vm40, %v24, 0
  %v66 = vsel %vm40, %v25, 0
  %v69 = vsel %vm40, %v26, 0
  %v72 = vsel %vm40, %v27, 0
  %v75 = vsel %vm40, %v28, 0
  %v78 = vsel %vm40, %v29, 0
  %v81 = vsel %vm40, %v30, 0
  %v84 = vsel %vm40, %v31, 0
  %v87 = vsel %vm40, %v32, 0
  %v90 = vsel %vm40, %v33, 0
  %v93 = vsel %vm40, %v34, 0
  %v96 = vsel %vm40, %v35, 0
  %v99 = vsel %vm40, %v36, 0
  %v102 = vsel %vm40, %v37, 0
  %104 = vmatprep.subr.mxu0 0.0
  %105 = vmatpush1.msra.mxu0 %v38
  %106 = vmatprep.subr.mxu0 0.0
  %107 = vmatpush1.msra.mxu0 %v39
  %108 = vmatprep.subr.mxu0 0.0
  %109 = vmatpush1.msra.mxu0 0.0
  %110 = vmatprep.subr.mxu0 0.0
  %111 = vmatpush1.msra.mxu0 0.0
  %112 = vmatprep.subr.mxu0 0.0
  %113 = vmatpush1.msra.mxu0 0.0
  %114 = vmatprep.subr.mxu0 0.0
  %115 = vmatpush1.msra.mxu0 0.0
  %116 = vmatprep.subr.mxu0 0.0
  %117 = vmatpush1.msra.mxu0 0.0
  %118 = vmatprep.subr.mxu0 0.0
  %119 = vmatpush1.msra.mxu0 0.0
  %120 = vmatprep.subr.mxu0 0.0
  %121 = vmatpush1.msra.mxu0 0.0
  %122 = vmatprep.subr.mxu0 0.0
  %123 = vmatpush1.msra.mxu0 0.0
  %124 = vmatprep.subr.mxu0 0.0
  %125 = vmatpush1.msra.mxu0 0.0
  %126 = vmatprep.subr.mxu0 0.0
  %127 = vmatpush1.msra.mxu0 0.0
  %128 = vmatprep.subr.mxu0 0.0
  %129 = vmatpush1.msra.mxu0 0.0
  %130 = vmatprep.subr.mxu0 0.0
  %131 = vmatpush1.msra.mxu0 0.0
  %132 = vmatprep.subr.mxu0 0.0
  %133 = vmatpush1.msra.mxu0 0.0
  %134 = vmatprep.subr.mxu0 0.0
  %135 = vmatpush1.msra.mxu0 0.0
  %136 = vmatprep.subr.mxu0 0.0
  %137 = vmatpush1.msra.mxu0 0.0
  %138 = vmatprep.subr.mxu0 0.0
  %139 = vmatpush1.msra.mxu0 0.0
  %140 = vmatprep.subr.mxu0 0.0
  %141 = vmatpush1.msra.mxu0 0.0
  %142 = vmatprep.subr.mxu0 0.0
  %143 = vmatpush1.msra.mxu0 0.0
  %144 = vmatprep.subr.mxu0 0.0
  %145 = vmatpush1.msra.mxu0 0.0
  %146 = vmatprep.subr.mxu0 0.0
  %147 = vmatpush1.msra.mxu0 0.0
  %148 = vmatprep.subr.mxu0 0.0
  %149 = vmatpush1.msra.mxu0 0.0
  %150 = vmatprep.subr.mxu0 0.0
  %151 = vmatpush1.msra.mxu0 0.0
  %152 = vmatprep.subr.mxu0 0.0
  %153 = vmatpush1.msra.mxu0 0.0
  %154 = vmatprep.subr.mxu0 0.0
  %155 = vmatpush1.msra.mxu0 0.0
  %156 = vmatprep.subr.mxu0 0.0
  %157 = vmatpush1.msra.mxu0 0.0
  %158 = vmatprep.subr.mxu0 0.0
  %159 = vmatpush1.msra.mxu0 0.0
  %160 = vmatprep.subr.mxu0 0.0
  %161 = vmatpush1.msra.mxu0 0.0
  %162 = vmatprep.subr.mxu0 0.0
  %163 = vmatpush1.msra.mxu0 0.0
  %164 = vmatprep.subr.mxu0 0.0
  %165 = vmatpush1.msra.mxu0 0.0
  %166 = vmatprep.subr.mxu0 0.0
  %167 = vmatpush1.msra.mxu0 0.0
  %168 = vmatprep.mubr.f32.mxu0 0.0
  %169 = vmatmul.mubr.f32.gmra.mrb[0].mxu0 %v42
  %v170 = vpop.f32.mrb[0].mxu0
  %v171 = vadd.f32 0.0, %v170
  %v172 = vpop.f32.mrb[0].mxu0
  %173 = vmatprep.mubr.f32.mxu0 0.0
  %174 = vmatmul.mubr.f32.gmra.mrb[0].mxu0 %v45
  %v175 = vpop.f32.mrb[0].mxu0
  %v176 = vadd.f32 0.0, %v175
  %v177 = vpop.f32.mrb[0].mxu0
  %178 = vmatprep.mubr.f32.mxu0 0.0
  %179 = vmatmul.mubr.f32.gmra.mrb[0].mxu0 %v48
  %v180 = vpop.f32.mrb[0].mxu0
  %v181 = vadd.f32 0.0, %v180
  %v182 = vpop.f32.mrb[0].mxu0
  %183 = vmatprep.mubr.f32.mxu0 0.0
  %184 = vmatmul.mubr.f32.gmra.mrb[0].mxu0 %v51
  %v185 = vpop.f32.mrb[0].mxu0
  %v186 = vadd.f32 0.0, %v185
  %v187 = vpop.f32.mrb[0].mxu0
  %188 = vmatprep.mubr.f32.mxu0 0.0
  %189 = vmatmul.mubr.f32.gmra.mrb[0].mxu0 %v54
  %v190 = vpop.f32.mrb[0].mxu0
  %v191 = vadd.f32 0.0, %v190
  %v192 = vpop.f32.mrb[0].mxu0
  %193 = vmatprep.mubr.f32.mxu0 0.0
  %194 = vmatmul.mubr.f32.gmra.mrb[0].mxu0 %v57
  %v195 = vpop.f32.mrb[0].mxu0
  %v196 = vadd.f32 0.0, %v195
  %v197 = vpop.f32.mrb[0].mxu0
  %198 = vmatprep.mubr.f32.mxu0 0.0
  %199 = vmatmul.mubr.f32.gmra.mrb[0].mxu0 %v60
  %v200 = vpop.f32.mrb[0].mxu0
  %v201 = vadd.f32 0.0, %v200
  %v202 = vpop.f32.mrb[0].mxu0
  %203 = vmatprep.mubr.f32.mxu0 0.0
  %204 = vmatmul.mubr.f32.gmra.mrb[0].mxu0 %v63
  %v205 = vpop.f32.mrb[0].mxu0
  %v206 = vadd.f32 0.0, %v205
  %v207 = vpop.f32.mrb[0].mxu0
  %208 = vmatprep.mubr.f32.mxu0 0.0
  %209 = vmatmul.mubr.f32.gmra.mrb[0].mxu0 %v66
  %v210 = vpop.f32.mrb[0].mxu0
  %v211 = vadd.f32 0.0, %v210
  %v212 = vpop.f32.mrb[0].mxu0
  %213 = vmatprep.mubr.f32.mxu0 0.0
  %214 = vmatmul.mubr.f32.gmra.mrb[0].mxu0 %v69
  %v215 = vpop.f32.mrb[0].mxu0
  %v216 = vadd.f32 0.0, %v215
  %v217 = vpop.f32.mrb[0].mxu0
  %218 = vmatprep.mubr.f32.mxu0 0.0
  %219 = vmatmul.mubr.f32.gmra.mrb[0].mxu0 %v72
  %v220 = vpop.f32.mrb[0].mxu0
  %v221 = vadd.f32 0.0, %v220
  %v222 = vpop.f32.mrb[0].mxu0
  %223 = vmatprep.mubr.f32.mxu0 0.0
  %224 = vmatmul.mubr.f32.gmra.mrb[0].mxu0 %v75
  %v225 = vpop.f32.mrb[0].mxu0
  %v226 = vadd.f32 0.0, %v225
  %v227 = vpop.f32.mrb[0].mxu0
  %228 = vmatprep.mubr.f32.mxu0 0.0
  %229 = vmatmul.mubr.f32.gmra.mrb[0].mxu0 %v78
  %v230 = vpop.f32.mrb[0].mxu0
  %v231 = vadd.f32 0.0, %v230
  %v232 = vpop.f32.mrb[0].mxu0
  %233 = vmatprep.mubr.f32.mxu0 0.0
  %234 = vmatmul.mubr.f32.gmra.mrb[0].mxu0 %v81
  %v235 = vpop.f32.mrb[0].mxu0
  %v236 = vadd.f32 0.0, %v235
  %v237 = vpop.f32.mrb[0].mxu0
  %238 = vmatprep.mubr.f32.mxu0 0.0
  %239 = vmatmul.mubr.f32.gmra.mrb[0].mxu0 %v84
  %v240 = vpop.f32.mrb[0].mxu0
  %v241 = vadd.f32 0.0, %v240
  %v242 = vpop.f32.mrb[0].mxu0
  %243 = vmatprep.mubr.f32.mxu0 0.0
  %244 = vmatmul.mubr.f32.gmra.mrb[0].mxu0 %v87
  %v245 = vpop.f32.mrb[0].mxu0
  %v246 = vadd.f32 0.0, %v245
  %v247 = vpop.f32.mrb[0].mxu0
  %248 = vmatprep.mubr.f32.mxu0 0.0
  %249 = vmatmul.mubr.f32.gmra.mrb[0].mxu0 %v90
  %v250 = vpop.f32.mrb[0].mxu0
  %v251 = vadd.f32 0.0, %v250
  %v252 = vpop.f32.mrb[0].mxu0
  %253 = vmatprep.mubr.f32.mxu0 0.0
  %254 = vmatmul.mubr.f32.gmra.mrb[0].mxu0 %v93
  %v255 = vpop.f32.mrb[0].mxu0
  %v256 = vadd.f32 0.0, %v255
  %v257 = vpop.f32.mrb[0].mxu0
  %258 = vmatprep.mubr.f32.mxu0 0.0
  %259 = vmatmul.mubr.f32.gmra.mrb[0].mxu0 %v96
  %v260 = vpop.f32.mrb[0].mxu0
  %v261 = vadd.f32 0.0, %v260
  %v262 = vpop.f32.mrb[0].mxu0
  %263 = vmatprep.mubr.f32.mxu0 0.0
  %264 = vmatmul.mubr.f32.gmra.mrb[0].mxu0 %v99
  %v265 = vpop.f32.mrb[0].mxu0
  %v266 = vadd.f32 0.0, %v265
  %v267 = vpop.f32.mrb[0].mxu0
  %268 = vmatprep.mubr.f32.mxu0 0.0
  %269 = vmatmul.mubr.f32.gmra.mrb[0].mxu0 %v102
  %v270 = vpop.f32.mrb[0].mxu0
  %v271 = vadd.f32 0.0, %v270
  %v272 = vpop.f32.mrb[0].mxu0
  %273 = vdwg.mxu0
  %v274 = vld [vmem:[%s2] sm:$0x1]
  %v276 = vlaneseq
  %v277 = vshrl.u32 %v276, 7
  %v278 = vsub.s32 0, %v277
  %v279 = vrot.slane %v274, %v278
  %v281 = vmul.f32 %v171, %v279
  %v282 = vmul.f32 %v176, %v279
  %v283 = vmul.f32 %v181, %v279
  %v284 = vmul.f32 %v186, %v279
  %v285 = vmul.f32 %v191, %v279
  %v286 = vmul.f32 %v196, %v279
  %v287 = vmul.f32 %v201, %v279
  %v288 = vmul.f32 %v206, %v279
  %v289 = vmul.f32 %v211, %v279
  %v290 = vmul.f32 %v216, %v279
  %v291 = vmul.f32 %v221, %v279
  %v292 = vmul.f32 %v226, %v279
  %v293 = vmul.f32 %v231, %v279
  %v294 = vmul.f32 %v236, %v279
  %v295 = vmul.f32 %v241, %v279
  %v296 = vmul.f32 %v246, %v279
  %v297 = vmul.f32 %v251, %v279
  %v298 = vmul.f32 %v256, %v279
  %v299 = vmul.f32 %v261, %v279
  %v300 = vmul.f32 %v266, %v279
  %v301 = vmul.f32 %v271, %v279
  %v302 = vld [vmem:[%s3] sm:$0x1]
  %v304 = vlaneseq
  %v305 = vshrl.u32 %v304, 7
  %v306 = vsub.s32 0, %v305
  %v307 = vrot.slane %v302, %v306
  %v309 = vadd.f32 %v281, %v307
  %v310 = vadd.f32 %v282, %v307
  %v311 = vadd.f32 %v283, %v307
  %v312 = vadd.f32 %v284, %v307
  %v313 = vadd.f32 %v285, %v307
  %v314 = vadd.f32 %v286, %v307
  %v315 = vadd.f32 %v287, %v307
  %v316 = vadd.f32 %v288, %v307
  %v317 = vadd.f32 %v289, %v307
  %v318 = vadd.f32 %v290, %v307
  %v319 = vadd.f32 %v291, %v307
  %v320 = vadd.f32 %v292, %v307
  %v321 = vadd.f32 %v293, %v307
  %v322 = vadd.f32 %v294, %v307
  %v323 = vadd.f32 %v295, %v307
  %v324 = vadd.f32 %v296, %v307
  %v325 = vadd.f32 %v297, %v307
  %v326 = vadd.f32 %v298, %v307
  %v327 = vadd.f32 %v299, %v307
  %v328 = vadd.f32 %v300, %v307
  %v329 = vadd.f32 %v301, %v307
  %vm330 = vcmask 261120
  %331 = vst.msk [vmem:[%s4] sm:$0xff] %vm330, %v309
  %332 = vst.msk [vmem:[%s4 + $0x8] sm:$0xff] %vm330, %v310
  %333 = vst.msk [vmem:[%s4 + $0x10] sm:$0xff] %vm330, %v311
  %334 = vst.msk [vmem:[%s4 + $0x18] sm:$0xff] %vm330, %v312
  %335 = vst.msk [vmem:[%s4 + $0x20] sm:$0xff] %vm330, %v313
  %336 = vst.msk [vmem:[%s4 + $0x28] sm:$0xff] %vm330, %v314
  %337 = vst.msk [vmem:[%s4 + $0x30] sm:$0xff] %vm330, %v315
  %338 = vst.msk [vmem:[%s4 + $0x38] sm:$0xff] %vm330, %v316
  %339 = vst.msk [vmem:[%s4 + $0x40] sm:$0xff] %vm330, %v317
  %340 = vst.msk [vmem:[%s4 + $0x48] sm:$0xff] %vm330, %v318
  %341 = vst.msk [vmem:[%s4 + $0x50] sm:$0xff] %vm330, %v319
  %342 = vst.msk [vmem:[%s4 + $0x58] sm:$0xff] %vm330, %v320
  %343 = vst.msk [vmem:[%s4 + $0x60] sm:$0xff] %vm330, %v321
  %344 = vst.msk [vmem:[%s4 + $0x68] sm:$0xff] %vm330, %v322
  %345 = vst.msk [vmem:[%s4 + $0x70] sm:$0xff] %vm330, %v323
  %346 = vst.msk [vmem:[%s4 + $0x78] sm:$0xff] %vm330, %v324
  %347 = vst.msk [vmem:[%s4 + $0x80] sm:$0xff] %vm330, %v325
  %348 = vst.msk [vmem:[%s4 + $0x88] sm:$0xff] %vm330, %v326
  %349 = vst.msk [vmem:[%s4 + $0x90] sm:$0xff] %vm330, %v327
  %350 = vst.msk [vmem:[%s4 + $0x98] sm:$0xff] %vm330, %v328
  %vm351 = vcmask 254976
  %352 = vst.msk [vmem:[%s4 + $0xa0] sm:$0x3] %vm351, %v329
  // Predicated region
  $region18: #{_lambda_.39} parent=0 // pred_check
    _
  $region19: #{_lambda_.39} parent=0 // pred_check_branch
    %354 = sbr.rel (0) target = $region21
  $region20: #{_lambda_.39} parent=0 // pred_region
    _
  $region21: #{_lambda_.39} parent=0 // pred_fallthru
    _
  // Predicated region
  $region22: #{_lambda_.39} parent=0 // pred_check
    _
  $region23: #{_lambda_.39} parent=0 // pred_check_branch
    %356 = sbr.rel (0) target = $region25
  $region24: #{_lambda_.39} parent=0 // pred_region
    _
  $region25: #{_lambda_.39} parent=0 // pred_fallthru
    _

// kernel: _lambda_.33
$region0: #{_lambda_.33}
  #allocation0 [shape = 'u32[]', space=smem, size = 0x4, offset = 0x4, fixed_abs, tag = 'smem constant byte address 0x4 - core index']
  #allocation1 [shape = 'u32[144,128]{1,0:T(1,128)}', space=vmem, size = 0x12000, scoped, tag = 'internal scratch']
  %s0 = inlined_call_operand.vmem [shape: f32[162,144], index: 0, kind: input, shape index: {}]
  %s1 = inlined_call_operand.vmem [shape: f32[144,32], index: 1, kind: input, shape index: {}]
  %s2 = inlined_call_operand.vmem [shape: f32[1,32], index: 2, kind: input, shape index: {}]
  %s3 = inlined_call_operand.vmem [shape: f32[1,32], index: 3, kind: input, shape index: {}]
  %s4 = inlined_call_operand.vmem [shape: f32[162,32], index: 4, kind: output, shape index: {}]
  %s5 = sld [smem:[#allocation0]]
  $region26: #{_lambda_.33} parent=0
    _
  %s7 = ssub.s32 1, %s5
  %s8 = scalar_select 0, %s7, %s5
  // Predicated region
  $region2: #{_lambda_.33} parent=0 // pred_check
    _
  $region3: #{_lambda_.33} parent=0 // pred_check_branch
    %10 = sbr.rel (0) target = $region5
  $region4: #{_lambda_.33} parent=0 // pred_region
    _
  $region5: #{_lambda_.33} parent=0 // pred_fallthru
    _
  // Predicated region
  $region6: #{_lambda_.33} parent=0 // pred_check
    _
  $region7: #{_lambda_.33} parent=0 // pred_check_branch
    %12 = sbr.rel (0) target = $region9
  $region8: #{_lambda_.33} parent=0 // pred_region
    _
  $region9: #{_lambda_.33} parent=0 // pred_fallthru
    _
  // Predicated region
  $region10: #{_lambda_.33} parent=0 // pred_check
    _
  $region11: #{_lambda_.33} parent=0 // pred_check_branch
    %14 = sbr.rel (0) target = $region13
  $region12: #{_lambda_.33} parent=0 // pred_region
    _
  $region13: #{_lambda_.33} parent=0 // pred_fallthru
    _
  // Predicated region
  $region14: #{_lambda_.33} parent=0 // pred_check
    _
  $region15: #{_lambda_.33} parent=0 // pred_check_branch
    %16 = sbr.rel (0) target = $region17
  $region16: #{_lambda_.33} parent=0 // pred_region
    _
  $region17: #{_lambda_.33} parent=0 // pred_fallthru
    _
  %v17 = vld [vmem:[%s0] sm:$0xff]
  %v18 = vld [vmem:[%s0 + $0x8] sm:$0xff]
  %v19 = vld [vmem:[%s0 + $0x10] sm:$0xff]
  %v20 = vld [vmem:[%s0 + $0x18] sm:$0xff]
  %v21 = vld [vmem:[%s0 + $0x20] sm:$0xff]
  %v22 = vld [vmem:[%s0 + $0x28] sm:$0xff]
  %v23 = vld [vmem:[%s0 + $0x30] sm:$0xff]
  %v24 = vld [vmem:[%s0 + $0x38] sm:$0xff]
  %v25 = vld [vmem:[%s0 + $0x40] sm:$0xff]
  %v26 = vld [vmem:[%s0 + $0x48] sm:$0xff]
  %v27 = vld [vmem:[%s0 + $0x50] sm:$0xff]
  %v28 = vld [vmem:[%s0 + $0x58] sm:$0xff]
  %v29 = vld [vmem:[%s0 + $0x60] sm:$0xff]
  %v30 = vld [vmem:[%s0 + $0x68] sm:$0xff]
  %v31 = vld [vmem:[%s0 + $0x70] sm:$0xff]
  %v32 = vld [vmem:[%s0 + $0x78] sm:$0xff]
  %v33 = vld [vmem:[%s0 + $0x80] sm:$0xff]
  %v34 = vld [vmem:[%s0 + $0x88] sm:$0xff]
  %v35 = vld [vmem:[%s0 + $0x90] sm:$0xff]
  %v36 = vld [vmem:[%s0 + $0x98] sm:$0xff]
  %v37 = vld [vmem:[%s0 + $0xa0] sm:$0xff]
  %v38 = vld [vmem:[%s0 + $0xa8] sm:$0xff]
  %v39 = vld [vmem:[%s0 + $0xb0] sm:$0xff]
  %v40 = vld [vmem:[%s0 + $0xb8] sm:$0xff]
  %v41 = vld [vmem:[%s0 + $0xc0] sm:$0xff]
  %v42 = vld [vmem:[%s0 + $0xc8] sm:$0xff]
  %v43 = vld [vmem:[%s0 + $0xd0] sm:$0xff]
  %v44 = vld [vmem:[%s0 + $0xd8] sm:$0xff]
  %v45 = vld [vmem:[%s0 + $0xe0] sm:$0xff]
  %v46 = vld [vmem:[%s0 + $0xe8] sm:$0xff]
  %v47 = vld [vmem:[%s0 + $0xf0] sm:$0xff]
  %v48 = vld [vmem:[%s0 + $0xf8] sm:$0xff]
  %v49 = vld [vmem:[%s0 + $0x100] sm:$0xff]
  %v50 = vld [vmem:[%s0 + $0x108] sm:$0xff]
  %v51 = vld [vmem:[%s0 + $0x110] sm:$0xff]
  %v52 = vld [vmem:[%s0 + $0x118] sm:$0xff]
  %v53 = vld [vmem:[%s0 + $0x120] sm:$0xff]
  %v54 = vld [vmem:[%s0 + $0x128] sm:$0xff]
  %v55 = vld [vmem:[%s0 + $0x130] sm:$0xff]
  %v56 = vld [vmem:[%s0 + $0x138] sm:$0xff]
  %v57 = vld [vmem:[%s0 + $0x140] sm:$0x3]
  %v58 = vld [vmem:[%s0 + $0x148] sm:$0x3]
  %v59 = vld [vmem:[%s1] sm:$0xff]
  %v60 = vld [vmem:[%s1 + $0x8] sm:$0xff]
  %v61 = vld [vmem:[%s1 + $0x10] sm:$0xff]
  %v62 = vld [vmem:[%s1 + $0x18] sm:$0xff]
  %v63 = vld [vmem:[%s1 + $0x20] sm:$0xff]
  %v64 = vld [vmem:[%s1 + $0x28] sm:$0xff]
  %v65 = vld [vmem:[%s1 + $0x30] sm:$0xff]
  %v66 = vld [vmem:[%s1 + $0x38] sm:$0xff]
  %v67 = vld [vmem:[%s1 + $0x40] sm:$0xff]
  %v68 = vld [vmem:[%s1 + $0x48] sm:$0xff]
  %v69 = vld [vmem:[%s1 + $0x50] sm:$0xff]
  %v70 = vld [vmem:[%s1 + $0x58] sm:$0xff]
  %v71 = vld [vmem:[%s1 + $0x60] sm:$0xff]
  %v72 = vld [vmem:[%s1 + $0x68] sm:$0xff]
  %v73 = vld [vmem:[%s1 + $0x70] sm:$0xff]
  %v74 = vld [vmem:[%s1 + $0x78] sm:$0xff]
  %v75 = vld [vmem:[%s1 + $0x80] sm:$0xff]
  %v76 = vld [vmem:[%s1 + $0x88] sm:$0xff]
  %vm77 = vcmask 130048
  %v79 = vsel %vm77, %v18, 0
  %v82 = vsel %vm77, %v20, 0
  %v85 = vsel %vm77, %v22, 0
  %v88 = vsel %vm77, %v24, 0
  %v91 = vsel %vm77, %v26, 0
  %v94 = vsel %vm77, %v28, 0
  %v97 = vsel %vm77, %v30, 0
  %v100 = vsel %vm77, %v32, 0
  %v103 = vsel %vm77, %v34, 0
  %v106 = vsel %vm77, %v36, 0
  %v109 = vsel %vm77, %v38, 0
  %v112 = vsel %vm77, %v40, 0
  %v115 = vsel %vm77, %v42, 0
  %v118 = vsel %vm77, %v44, 0
  %v121 = vsel %vm77, %v46, 0
  %v124 = vsel %vm77, %v48, 0
  %v127 = vsel %vm77, %v50, 0
  %v130 = vsel %vm77, %v52, 0
  %v133 = vsel %vm77, %v54, 0
  %v136 = vsel %vm77, %v56, 0
  %v139 = vsel %vm77, %v58, 0
  %141 = vmatprep.subr.mxu0 0.0
  %142 = vmatpush1.msra.mxu0 %v59
  %143 = vmatprep.subr.mxu0 0.0
  %144 = vmatpush1.msra.mxu0 %v60
  %145 = vmatprep.subr.mxu0 0.0
  %146 = vmatpush1.msra.mxu0 %v61
  %147 = vmatprep.subr.mxu0 0.0
  %148 = vmatpush1.msra.mxu0 %v62
  %149 = vmatprep.subr.mxu0 0.0
  %150 = vmatpush1.msra.mxu0 %v63
  %151 = vmatprep.subr.mxu0 0.0
  %152 = vmatpush1.msra.mxu0 %v64
  %153 = vmatprep.subr.mxu0 0.0
  %154 = vmatpush1.msra.mxu0 %v65
  %155 = vmatprep.subr.mxu0 0.0
  %156 = vmatpush1.msra.mxu0 %v66
  %157 = vmatprep.subr.mxu0 0.0
  %158 = vmatpush1.msra.mxu0 %v67
  %159 = vmatprep.subr.mxu0 0.0
  %160 = vmatpush1.msra.mxu0 %v68
  %161 = vmatprep.subr.mxu0 0.0
  %162 = vmatpush1.msra.mxu0 %v69
  %163 = vmatprep.subr.mxu0 0.0
  %164 = vmatpush1.msra.mxu0 %v70
  %165 = vmatprep.subr.mxu0 0.0
  %166 = vmatpush1.msra.mxu0 %v71
  %167 = vmatprep.subr.mxu0 0.0
  %168 = vmatpush1.msra.mxu0 %v72
  %169 = vmatprep.subr.mxu0 0.0
  %170 = vmatpush1.msra.mxu0 %v73
  %171 = vmatprep.subr.mxu0 0.0
  %172 = vmatpush1.msra.mxu0 %v74
  %173 = vmatprep.subr.mxu0 0.0
  %174 = vmatpush1.msra.mxu0 %v75
  %175 = vmatprep.subr.mxu0 0.0
  %176 = vmatpush1.msra.mxu0 %v76
  %177 = vmatprep.subr.mxu0 0.0
  %178 = vmatpush1.msra.mxu0 0.0
  %179 = vmatprep.subr.mxu0 0.0
  %180 = vmatpush1.msra.mxu0 0.0
  %181 = vmatprep.subr.mxu0 0.0
  %182 = vmatpush1.msra.mxu0 0.0
  %183 = vmatprep.subr.mxu0 0.0
  %184 = vmatpush1.msra.mxu0 0.0
  %185 = vmatprep.subr.mxu0 0.0
  %186 = vmatpush1.msra.mxu0 0.0
  %187 = vmatprep.subr.mxu0 0.0
  %188 = vmatpush1.msra.mxu0 0.0
  %189 = vmatprep.subr.mxu0 0.0
  %190 = vmatpush1.msra.mxu0 0.0
  %191 = vmatprep.subr.mxu0 0.0
  %192 = vmatpush1.msra.mxu0 0.0
  %193 = vmatprep.subr.mxu0 0.0
  %194 = vmatpush1.msra.mxu0 0.0
  %195 = vmatprep.subr.mxu0 0.0
  %196 = vmatpush1.msra.mxu0 0.0
  %197 = vmatprep.subr.mxu0 0.0
  %198 = vmatpush1.msra.mxu0 0.0
  %199 = vmatprep.subr.mxu0 0.0
  %200 = vmatpush1.msra.mxu0 0.0
  %201 = vmatprep.subr.mxu0 0.0
  %202 = vmatpush1.msra.mxu0 0.0
  %203 = vmatprep.subr.mxu0 0.0
  %204 = vmatpush1.msra.mxu0 0.0
  %205 = vmatprep.mubr.f32.mxu0 %v79
  %206 = vmatmul.mubr.f32.gmra.mrb[0].mxu0 %v17
  %v207 = vpop.f32.mrb[0].mxu0
  %v208 = vadd.f32 0.0, %v207
  %v209 = vpop.f32.mrb[0].mxu0
  %210 = vmatprep.mubr.f32.mxu0 %v82
  %211 = vmatmul.mubr.f32.gmra.mrb[0].mxu0 %v19
  %v212 = vpop.f32.mrb[0].mxu0
  %v213 = vadd.f32 0.0, %v212
  %v214 = vpop.f32.mrb[0].mxu0
  %215 = vmatprep.mubr.f32.mxu0 %v85
  %216 = vmatmul.mubr.f32.gmra.mrb[0].mxu0 %v21
  %v217 = vpop.f32.mrb[0].mxu0
  %v218 = vadd.f32 0.0, %v217
  %v219 = vpop.f32.mrb[0].mxu0
  %220 = vmatprep.mubr.f32.mxu0 %v88
  %221 = vmatmul.mubr.f32.gmra.mrb[0].mxu0 %v23
  %v222 = vpop.f32.mrb[0].mxu0
  %v223 = vadd.f32 0.0, %v222
  %v224 = vpop.f32.mrb[0].mxu0
  %225 = vmatprep.mubr.f32.mxu0 %v91
  %226 = vmatmul.mubr.f32.gmra.mrb[0].mxu0 %v25
  %v227 = vpop.f32.mrb[0].mxu0
  %v228 = vadd.f32 0.0, %v227
  %v229 = vpop.f32.mrb[0].mxu0
  %230 = vmatprep.mubr.f32.mxu0 %v94
  %231 = vmatmul.mubr.f32.gmra.mrb[0].mxu0 %v27
  %v232 = vpop.f32.mrb[0].mxu0
  %v233 = vadd.f32 0.0, %v232
  %v234 = vpop.f32.mrb[0].mxu0
  %235 = vmatprep.mubr.f32.mxu0 %v97
  %236 = vmatmul.mubr.f32.gmra.mrb[0].mxu0 %v29
  %v237 = vpop.f32.mrb[0].mxu0
  %v238 = vadd.f32 0.0, %v237
  %v239 = vpop.f32.mrb[0].mxu0
  %240 = vmatprep.mubr.f32.mxu0 %v100
  %241 = vmatmul.mubr.f32.gmra.mrb[0].mxu0 %v31
  %v242 = vpop.f32.mrb[0].mxu0
  %v243 = vadd.f32 0.0, %v242
  %v244 = vpop.f32.mrb[0].mxu0
  %245 = vmatprep.mubr.f32.mxu0 %v103
  %246 = vmatmul.mubr.f32.gmra.mrb[0].mxu0 %v33
  %v247 = vpop.f32.mrb[0].mxu0
  %v248 = vadd.f32 0.0, %v247
  %v249 = vpop.f32.mrb[0].mxu0
  %250 = vmatprep.mubr.f32.mxu0 %v106
  %251 = vmatmul.mubr.f32.gmra.mrb[0].mxu0 %v35
  %v252 = vpop.f32.mrb[0].mxu0
  %v253 = vadd.f32 0.0, %v252
  %v254 = vpop.f32.mrb[0].mxu0
  %255 = vmatprep.mubr.f32.mxu0 %v109
  %256 = vmatmul.mubr.f32.gmra.mrb[0].mxu0 %v37
  %v257 = vpop.f32.mrb[0].mxu0
  %v258 = vadd.f32 0.0, %v257
  %v259 = vpop.f32.mrb[0].mxu0
  %260 = vmatprep.mubr.f32.mxu0 %v112
  %261 = vmatmul.mubr.f32.gmra.mrb[0].mxu0 %v39
  %v262 = vpop.f32.mrb[0].mxu0
  %v263 = vadd.f32 0.0, %v262
  %v264 = vpop.f32.mrb[0].mxu0
  %265 = vmatprep.mubr.f32.mxu0 %v115
  %266 = vmatmul.mubr.f32.gmra.mrb[0].mxu0 %v41
  %v267 = vpop.f32.mrb[0].mxu0
  %v268 = vadd.f32 0.0, %v267
  %v269 = vpop.f32.mrb[0].mxu0
  %270 = vmatprep.mubr.f32.mxu0 %v118
  %271 = vmatmul.mubr.f32.gmra.mrb[0].mxu0 %v43
  %v272 = vpop.f32.mrb[0].mxu0
  %v273 = vadd.f32 0.0, %v272
  %v274 = vpop.f32.mrb[0].mxu0
  %275 = vmatprep.mubr.f32.mxu0 %v121
  %276 = vmatmul.mubr.f32.gmra.mrb[0].mxu0 %v45
  %v277 = vpop.f32.mrb[0].mxu0
  %v278 = vadd.f32 0.0, %v277
  %v279 = vpop.f32.mrb[0].mxu0
  %280 = vmatprep.mubr.f32.mxu0 %v124
  %281 = vmatmul.mubr.f32.gmra.mrb[0].mxu0 %v47
  %v282 = vpop.f32.mrb[0].mxu0
  %v283 = vadd.f32 0.0, %v282
  %v284 = vpop.f32.mrb[0].mxu0
  %285 = vmatprep.mubr.f32.mxu0 %v127
  %286 = vmatmul.mubr.f32.gmra.mrb[0].mxu0 %v49
  %v287 = vpop.f32.mrb[0].mxu0
  %v288 = vadd.f32 0.0, %v287
  %v289 = vpop.f32.mrb[0].mxu0
  %290 = vmatprep.mubr.f32.mxu0 %v130
  %291 = vmatmul.mubr.f32.gmra.mrb[0].mxu0 %v51
  %v292 = vpop.f32.mrb[0].mxu0
  %v293 = vadd.f32 0.0, %v292
  %v294 = vpop.f32.mrb[0].mxu0
  %295 = vmatprep.mubr.f32.mxu0 %v133
  %296 = vmatmul.mubr.f32.gmra.mrb[0].mxu0 %v53
  %v297 = vpop.f32.mrb[0].mxu0
  %v298 = vadd.f32 0.0, %v297
  %v299 = vpop.f32.mrb[0].mxu0
  %300 = vmatprep.mubr.f32.mxu0 %v136
  %301 = vmatmul.mubr.f32.gmra.mrb[0].mxu0 %v55
  %v302 = vpop.f32.mrb[0].mxu0
  %v303 = vadd.f32 0.0, %v302
  %v304 = vpop.f32.mrb[0].mxu0
  %305 = vmatprep.mubr.f32.mxu0 %v139
  %306 = vmatmul.mubr.f32.gmra.mrb[0].mxu0 %v57
  %v307 = vpop.f32.mrb[0].mxu0
  %v308 = vadd.f32 0.0, %v307
  %v309 = vpop.f32.mrb[0].mxu0
  %310 = vdwg.mxu0
  %v311 = vld [vmem:[%s2] sm:$0x1]
  %v313 = vlaneseq
  %v314 = vshrl.u32 %v313, 7
  %v315 = vsub.s32 0, %v314
  %v316 = vrot.slane %v311, %v315
  %v318 = vmul.f32 %v208, %v316
  %v319 = vmul.f32 %v213, %v316
  %v320 = vmul.f32 %v218, %v316
  %v321 = vmul.f32 %v223, %v316
  %v322 = vmul.f32 %v228, %v316
  %v323 = vmul.f32 %v233, %v316
  %v324 = vmul.f32 %v238, %v316
  %v325 = vmul.f32 %v243, %v316
  %v326 = vmul.f32 %v248, %v316
  %v327 = vmul.f32 %v253, %v316
  %v328 = vmul.f32 %v258, %v316
  %v329 = vmul.f32 %v263, %v316
  %v330 = vmul.f32 %v268, %v316
  %v331 = vmul.f32 %v273, %v316
  %v332 = vmul.f32 %v278, %v316
  %v333 = vmul.f32 %v283, %v316
  %v334 = vmul.f32 %v288, %v316
  %v335 = vmul.f32 %v293, %v316
  %v336 = vmul.f32 %v298, %v316
  %v337 = vmul.f32 %v303, %v316
  %v338 = vmul.f32 %v308, %v316
  %v339 = vld [vmem:[%s3] sm:$0x1]
  %v341 = vlaneseq
  %v342 = vshrl.u32 %v341, 7
  %v343 = vsub.s32 0, %v342
  %v344 = vrot.slane %v339, %v343
  %v346 = vadd.f32 %v318, %v344
  %v347 = vadd.f32 %v319, %v344
  %v348 = vadd.f32 %v320, %v344
  %v349 = vadd.f32 %v321, %v344
  %v350 = vadd.f32 %v322, %v344
  %v351 = vadd.f32 %v323, %v344
  %v352 = vadd.f32 %v324, %v344
  %v353 = vadd.f32 %v325, %v344
  %v354 = vadd.f32 %v326, %v344
  %v355 = vadd.f32 %v327, %v344
  %v356 = vadd.f32 %v328, %v344
  %v357 = vadd.f32 %v329, %v344
  %v358 = vadd.f32 %v330, %v344
  %v359 = vadd.f32 %v331, %v344
  %v360 = vadd.f32 %v332, %v344
  %v361 = vadd.f32 %v333, %v344
  %v362 = vadd.f32 %v334, %v344
  %v363 = vadd.f32 %v335, %v344
  %v364 = vadd.f32 %v336, %v344
  %v365 = vadd.f32 %v337, %v344
  %v366 = vadd.f32 %v338, %v344
  %vm367 = vcmask 261120
  %368 = vst.msk [vmem:[%s4] sm:$0xff] %vm367, %v346
  %369 = vst.msk [vmem:[%s4 + $0x8] sm:$0xff] %vm367, %v347
  %370 = vst.msk [vmem:[%s4 + $0x10] sm:$0xff] %vm367, %v348
  %371 = vst.msk [vmem:[%s4 + $0x18] sm:$0xff] %vm367, %v349
  %372 = vst.msk [vmem:[%s4 + $0x20] sm:$0xff] %vm367, %v350
  %373 = vst.msk [vmem:[%s4 + $0x28] sm:$0xff] %vm367, %v351
  %374 = vst.msk [vmem:[%s4 + $0x30] sm:$0xff] %vm367, %v352
  %375 = vst.msk [vmem:[%s4 + $0x38] sm:$0xff] %vm367, %v353
  %376 = vst.msk [vmem:[%s4 + $0x40] sm:$0xff] %vm367, %v354
  %377 = vst.msk [vmem:[%s4 + $0x48] sm:$0xff] %vm367, %v355
  %378 = vst.msk [vmem:[%s4 + $0x50] sm:$0xff] %vm367, %v356
  %379 = vst.msk [vmem:[%s4 + $0x58] sm:$0xff] %vm367, %v357
  %380 = vst.msk [vmem:[%s4 + $0x60] sm:$0xff] %vm367, %v358
  %381 = vst.msk [vmem:[%s4 + $0x68] sm:$0xff] %vm367, %v359
  %382 = vst.msk [vmem:[%s4 + $0x70] sm:$0xff] %vm367, %v360
  %383 = vst.msk [vmem:[%s4 + $0x78] sm:$0xff] %vm367, %v361
  %384 = vst.msk [vmem:[%s4 + $0x80] sm:$0xff] %vm367, %v362
  %385 = vst.msk [vmem:[%s4 + $0x88] sm:$0xff] %vm367, %v363
  %386 = vst.msk [vmem:[%s4 + $0x90] sm:$0xff] %vm367, %v364
  %387 = vst.msk [vmem:[%s4 + $0x98] sm:$0xff] %vm367, %v365
  %vm388 = vcmask 254976
  %389 = vst.msk [vmem:[%s4 + $0xa0] sm:$0x3] %vm388, %v366
  // Predicated region
  $region18: #{_lambda_.33} parent=0 // pred_check
    _
  $region19: #{_lambda_.33} parent=0 // pred_check_branch
    %391 = sbr.rel (0) target = $region21
  $region20: #{_lambda_.33} parent=0 // pred_region
    _
  $region21: #{_lambda_.33} parent=0 // pred_fallthru
    _
  // Predicated region
  $region22: #{_lambda_.33} parent=0 // pred_check
    _
  $region23: #{_lambda_.33} parent=0 // pred_check_branch
    %393 = sbr.rel (0) target = $region25
  $region24: #{_lambda_.33} parent=0 // pred_region
    _
  $region25: #{_lambda_.33} parent=0 // pred_fallthru
    _

// kernel: _lambda_.34
$region0: #{_lambda_.34}
  #allocation0 [shape = 'u32[]', space=smem, size = 0x4, offset = 0x4, fixed_abs, tag = 'smem constant byte address 0x4 - core index']
  #allocation1 [shape = 'u32[144,128]{1,0:T(1,128)}', space=vmem, size = 0x12000, scoped, tag = 'internal scratch']
  %s0 = inlined_call_operand.vmem [shape: f32[576,9], index: 0, kind: input, shape index: {}]
  %s1 = inlined_call_operand.vmem [shape: f32[576,1], index: 1, kind: output, shape index: {}]
  %s2 = sld [smem:[#allocation0]]
  $region14: #{_lambda_.34} parent=0
    _
  %s4 = ssub.s32 1, %s2
  %s5 = scalar_select 0, %s4, %s2
  // Predicated region
  $region2: #{_lambda_.34} parent=0 // pred_check
    _
  $region3: #{_lambda_.34} parent=0 // pred_check_branch
    %7 = sbr.rel (0) target = $region5
  $region4: #{_lambda_.34} parent=0 // pred_region
    _
  $region5: #{_lambda_.34} parent=0 // pred_fallthru
    _
  %v8 = vld [vmem:[%s0] sm:$0xff]
  %v9 = vld [vmem:[%s0 + $0x8] sm:$0xff]
  %v10 = vld [vmem:[%s0 + $0x10] sm:$0xff]
  %v11 = vld [vmem:[%s0 + $0x18] sm:$0xff]
  %v12 = vld [vmem:[%s0 + $0x20] sm:$0xff]
  %v13 = vld [vmem:[%s0 + $0x28] sm:$0xff]
  %v14 = vld [vmem:[%s0 + $0x30] sm:$0xff]
  %v15 = vld [vmem:[%s0 + $0x38] sm:$0xff]
  %v16 = vld [vmem:[%s0 + $0x40] sm:$0xff]
  %v17 = vld [vmem:[%s0 + $0x48] sm:$0xff]
  %v18 = vld [vmem:[%s0 + $0x50] sm:$0xff]
  %v19 = vld [vmem:[%s0 + $0x58] sm:$0xff]
  %v20 = vld [vmem:[%s0 + $0x60] sm:$0xff]
  %v21 = vld [vmem:[%s0 + $0x68] sm:$0xff]
  %v22 = vld [vmem:[%s0 + $0x70] sm:$0xff]
  %v23 = vld [vmem:[%s0 + $0x78] sm:$0xff]
  %v24 = vld [vmem:[%s0 + $0x80] sm:$0xff]
  %v25 = vld [vmem:[%s0 + $0x88] sm:$0xff]
  %v26 = vld [vmem:[%s0 + $0x90] sm:$0xff]
  %v27 = vld [vmem:[%s0 + $0x98] sm:$0xff]
  %v28 = vld [vmem:[%s0 + $0xa0] sm:$0xff]
  %v29 = vld [vmem:[%s0 + $0xa8] sm:$0xff]
  %v30 = vld [vmem:[%s0 + $0xb0] sm:$0xff]
  %v31 = vld [vmem:[%s0 + $0xb8] sm:$0xff]
  %v32 = vld [vmem:[%s0 + $0xc0] sm:$0xff]
  %v33 = vld [vmem:[%s0 + $0xc8] sm:$0xff]
  %v34 = vld [vmem:[%s0 + $0xd0] sm:$0xff]
  %v35 = vld [vmem:[%s0 + $0xd8] sm:$0xff]
  %v36 = vld [vmem:[%s0 + $0xe0] sm:$0xff]
  %v37 = vld [vmem:[%s0 + $0xe8] sm:$0xff]
  %v38 = vld [vmem:[%s0 + $0xf0] sm:$0xff]
  %v39 = vld [vmem:[%s0 + $0xf8] sm:$0xff]
  %v40 = vld [vmem:[%s0 + $0x100] sm:$0xff]
  %v41 = vld [vmem:[%s0 + $0x108] sm:$0xff]
  %v42 = vld [vmem:[%s0 + $0x110] sm:$0xff]
  %v43 = vld [vmem:[%s0 + $0x118] sm:$0xff]
  %v44 = vld [vmem:[%s0 + $0x120] sm:$0xff]
  %v45 = vld [vmem:[%s0 + $0x128] sm:$0xff]
  %v46 = vld [vmem:[%s0 + $0x130] sm:$0xff]
  %v47 = vld [vmem:[%s0 + $0x138] sm:$0xff]
  %v48 = vld [vmem:[%s0 + $0x140] sm:$0xff]
  %v49 = vld [vmem:[%s0 + $0x148] sm:$0xff]
  %v50 = vld [vmem:[%s0 + $0x150] sm:$0xff]
  %v51 = vld [vmem:[%s0 + $0x158] sm:$0xff]
  %v52 = vld [vmem:[%s0 + $0x160] sm:$0xff]
  %v53 = vld [vmem:[%s0 + $0x168] sm:$0xff]
  %v54 = vld [vmem:[%s0 + $0x170] sm:$0xff]
  %v55 = vld [vmem:[%s0 + $0x178] sm:$0xff]
  %v56 = vld [vmem:[%s0 + $0x180] sm:$0xff]
  %v57 = vld [vmem:[%s0 + $0x188] sm:$0xff]
  %v58 = vld [vmem:[%s0 + $0x190] sm:$0xff]
  %v59 = vld [vmem:[%s0 + $0x198] sm:$0xff]
  %v60 = vld [vmem:[%s0 + $0x1a0] sm:$0xff]
  %v61 = vld [vmem:[%s0 + $0x1a8] sm:$0xff]
  %v62 = vld [vmem:[%s0 + $0x1b0] sm:$0xff]
  %v63 = vld [vmem:[%s0 + $0x1b8] sm:$0xff]
  %v64 = vld [vmem:[%s0 + $0x1c0] sm:$0xff]
  %v65 = vld [vmem:[%s0 + $0x1c8] sm:$0xff]
  %v66 = vld [vmem:[%s0 + $0x1d0] sm:$0xff]
  %v67 = vld [vmem:[%s0 + $0x1d8] sm:$0xff]
  %v68 = vld [vmem:[%s0 + $0x1e0] sm:$0xff]
  %v69 = vld [vmem:[%s0 + $0x1e8] sm:$0xff]
  %v70 = vld [vmem:[%s0 + $0x1f0] sm:$0xff]
  %v71 = vld [vmem:[%s0 + $0x1f8] sm:$0xff]
  %v72 = vld [vmem:[%s0 + $0x200] sm:$0xff]
  %v73 = vld [vmem:[%s0 + $0x208] sm:$0xff]
  %v74 = vld [vmem:[%s0 + $0x210] sm:$0xff]
  %v75 = vld [vmem:[%s0 + $0x218] sm:$0xff]
  %v76 = vld [vmem:[%s0 + $0x220] sm:$0xff]
  %v77 = vld [vmem:[%s0 + $0x228] sm:$0xff]
  %v78 = vld [vmem:[%s0 + $0x230] sm:$0xff]
  %v79 = vld [vmem:[%s0 + $0x238] sm:$0xff]
  %vm80 = vcmask 72704
  %v81 = vsel %vm80, %v8, 0.0
  %82 = vadd.xlane.f32.xlu0 %v81
  %v83 = vpop.xlane.xlu0 %82
  %v84 = vsel %vm80, %v9, 0.0
  %85 = vadd.xlane.f32.xlu0 %v84
  %v86 = vpop.xlane.xlu0 %85
  %v87 = vsel %vm80, %v10, 0.0
  %88 = vadd.xlane.f32.xlu0 %v87
  %v89 = vpop.xlane.xlu0 %88
  %v90 = vsel %vm80, %v11, 0.0
  %91 = vadd.xlane.f32.xlu0 %v90
  %v92 = vpop.xlane.xlu0 %91
  %v93 = vsel %vm80, %v12, 0.0
  %94 = vadd.xlane.f32.xlu0 %v93
  %v95 = vpop.xlane.xlu0 %94
  %v96 = vsel %vm80, %v13, 0.0
  %97 = vadd.xlane.f32.xlu0 %v96
  %v98 = vpop.xlane.xlu0 %97
  %v99 = vsel %vm80, %v14, 0.0
  %100 = vadd.xlane.f32.xlu0 %v99
  %v101 = vpop.xlane.xlu0 %100
  %v102 = vsel %vm80, %v15, 0.0
  %103 = vadd.xlane.f32.xlu0 %v102
  %v104 = vpop.xlane.xlu0 %103
  %v105 = vsel %vm80, %v16, 0.0
  %106 = vadd.xlane.f32.xlu0 %v105
  %v107 = vpop.xlane.xlu0 %106
  %v108 = vsel %vm80, %v17, 0.0
  %109 = vadd.xlane.f32.xlu0 %v108
  %v110 = vpop.xlane.xlu0 %109
  %v111 = vsel %vm80, %v18, 0.0
  %112 = vadd.xlane.f32.xlu0 %v111
  %v113 = vpop.xlane.xlu0 %112
  %v114 = vsel %vm80, %v19, 0.0
  %115 = vadd.xlane.f32.xlu0 %v114
  %v116 = vpop.xlane.xlu0 %115
  %v117 = vsel %vm80, %v20, 0.0
  %118 = vadd.xlane.f32.xlu0 %v117
  %v119 = vpop.xlane.xlu0 %118
  %v120 = vsel %vm80, %v21, 0.0
  %121 = vadd.xlane.f32.xlu0 %v120
  %v122 = vpop.xlane.xlu0 %121
  %v123 = vsel %vm80, %v22, 0.0
  %124 = vadd.xlane.f32.xlu0 %v123
  %v125 = vpop.xlane.xlu0 %124
  %v126 = vsel %vm80, %v23, 0.0
  %127 = vadd.xlane.f32.xlu0 %v126
  %v128 = vpop.xlane.xlu0 %127
  %v129 = vsel %vm80, %v24, 0.0
  %130 = vadd.xlane.f32.xlu0 %v129
  %v131 = vpop.xlane.xlu0 %130
  %v132 = vsel %vm80, %v25, 0.0
  %133 = vadd.xlane.f32.xlu0 %v132
  %v134 = vpop.xlane.xlu0 %133
  %v135 = vsel %vm80, %v26, 0.0
  %136 = vadd.xlane.f32.xlu0 %v135
  %v137 = vpop.xlane.xlu0 %136
  %v138 = vsel %vm80, %v27, 0.0
  %139 = vadd.xlane.f32.xlu0 %v138
  %v140 = vpop.xlane.xlu0 %139
  %v141 = vsel %vm80, %v28, 0.0
  %142 = vadd.xlane.f32.xlu0 %v141
  %v143 = vpop.xlane.xlu0 %142
  %v144 = vsel %vm80, %v29, 0.0
  %145 = vadd.xlane.f32.xlu0 %v144
  %v146 = vpop.xlane.xlu0 %145
  %v147 = vsel %vm80, %v30, 0.0
  %148 = vadd.xlane.f32.xlu0 %v147
  %v149 = vpop.xlane.xlu0 %148
  %v150 = vsel %vm80, %v31, 0.0
  %151 = vadd.xlane.f32.xlu0 %v150
  %v152 = vpop.xlane.xlu0 %151
  %v153 = vsel %vm80, %v32, 0.0
  %154 = vadd.xlane.f32.xlu0 %v153
  %v155 = vpop.xlane.xlu0 %154
  %v156 = vsel %vm80, %v33, 0.0
  %157 = vadd.xlane.f32.xlu0 %v156
  %v158 = vpop.xlane.xlu0 %157
  %v159 = vsel %vm80, %v34, 0.0
  %160 = vadd.xlane.f32.xlu0 %v159
  %v161 = vpop.xlane.xlu0 %160
  %v162 = vsel %vm80, %v35, 0.0
  %163 = vadd.xlane.f32.xlu0 %v162
  %v164 = vpop.xlane.xlu0 %163
  %v165 = vsel %vm80, %v36, 0.0
  %166 = vadd.xlane.f32.xlu0 %v165
  %v167 = vpop.xlane.xlu0 %166
  %v168 = vsel %vm80, %v37, 0.0
  %169 = vadd.xlane.f32.xlu0 %v168
  %v170 = vpop.xlane.xlu0 %169
  %v171 = vsel %vm80, %v38, 0.0
  %172 = vadd.xlane.f32.xlu0 %v171
  %v173 = vpop.xlane.xlu0 %172
  %v174 = vsel %vm80, %v39, 0.0
  %175 = vadd.xlane.f32.xlu0 %v174
  %v176 = vpop.xlane.xlu0 %175
  %v177 = vsel %vm80, %v40, 0.0
  %178 = vadd.xlane.f32.xlu0 %v177
  %v179 = vpop.xlane.xlu0 %178
  %v180 = vsel %vm80, %v41, 0.0
  %181 = vadd.xlane.f32.xlu0 %v180
  %v182 = vpop.xlane.xlu0 %181
  %v183 = vsel %vm80, %v42, 0.0
  %184 = vadd.xlane.f32.xlu0 %v183
  %v185 = vpop.xlane.xlu0 %184
  %v186 = vsel %vm80, %v43, 0.0
  %187 = vadd.xlane.f32.xlu0 %v186
  %v188 = vpop.xlane.xlu0 %187
  %v189 = vsel %vm80, %v44, 0.0
  %190 = vadd.xlane.f32.xlu0 %v189
  %v191 = vpop.xlane.xlu0 %190
  %v192 = vsel %vm80, %v45, 0.0
  %193 = vadd.xlane.f32.xlu0 %v192
  %v194 = vpop.xlane.xlu0 %193
  %v195 = vsel %vm80, %v46, 0.0
  %196 = vadd.xlane.f32.xlu0 %v195
  %v197 = vpop.xlane.xlu0 %196
  %v198 = vsel %vm80, %v47, 0.0
  %199 = vadd.xlane.f32.xlu0 %v198
  %v200 = vpop.xlane.xlu0 %199
  %v201 = vsel %vm80, %v48, 0.0
  %202 = vadd.xlane.f32.xlu0 %v201
  %v203 = vpop.xlane.xlu0 %202
  %v204 = vsel %vm80, %v49, 0.0
  %205 = vadd.xlane.f32.xlu0 %v204
  %v206 = vpop.xlane.xlu0 %205
  %v207 = vsel %vm80, %v50, 0.0
  %208 = vadd.xlane.f32.xlu0 %v207
  %v209 = vpop.xlane.xlu0 %208
  %v210 = vsel %vm80, %v51, 0.0
  %211 = vadd.xlane.f32.xlu0 %v210
  %v212 = vpop.xlane.xlu0 %211
  %v213 = vsel %vm80, %v52, 0.0
  %214 = vadd.xlane.f32.xlu0 %v213
  %v215 = vpop.xlane.xlu0 %214
  %v216 = vsel %vm80, %v53, 0.0
  %217 = vadd.xlane.f32.xlu0 %v216
  %v218 = vpop.xlane.xlu0 %217
  %v219 = vsel %vm80, %v54, 0.0
  %220 = vadd.xlane.f32.xlu0 %v219
  %v221 = vpop.xlane.xlu0 %220
  %v222 = vsel %vm80, %v55, 0.0
  %223 = vadd.xlane.f32.xlu0 %v222
  %v224 = vpop.xlane.xlu0 %223
  %v225 = vsel %vm80, %v56, 0.0
  %226 = vadd.xlane.f32.xlu0 %v225
  %v227 = vpop.xlane.xlu0 %226
  %v228 = vsel %vm80, %v57, 0.0
  %229 = vadd.xlane.f32.xlu0 %v228
  %v230 = vpop.xlane.xlu0 %229
  %v231 = vsel %vm80, %v58, 0.0
  %232 = vadd.xlane.f32.xlu0 %v231
  %v233 = vpop.xlane.xlu0 %232
  %v234 = vsel %vm80, %v59, 0.0
  %235 = vadd.xlane.f32.xlu0 %v234
  %v236 = vpop.xlane.xlu0 %235
  %v237 = vsel %vm80, %v60, 0.0
  %238 = vadd.xlane.f32.xlu0 %v237
  %v239 = vpop.xlane.xlu0 %238
  %v240 = vsel %vm80, %v61, 0.0
  %241 = vadd.xlane.f32.xlu0 %v240
  %v242 = vpop.xlane.xlu0 %241
  %v243 = vsel %vm80, %v62, 0.0
  %244 = vadd.xlane.f32.xlu0 %v243
  %v245 = vpop.xlane.xlu0 %244
  %v246 = vsel %vm80, %v63, 0.0
  %247 = vadd.xlane.f32.xlu0 %v246
  %v248 = vpop.xlane.xlu0 %247
  %v249 = vsel %vm80, %v64, 0.0
  %250 = vadd.xlane.f32.xlu0 %v249
  %v251 = vpop.xlane.xlu0 %250
  %v252 = vsel %vm80, %v65, 0.0
  %253 = vadd.xlane.f32.xlu0 %v252
  %v254 = vpop.xlane.xlu0 %253
  %v255 = vsel %vm80, %v66, 0.0
  %256 = vadd.xlane.f32.xlu0 %v255
  %v257 = vpop.xlane.xlu0 %256
  %v258 = vsel %vm80, %v67, 0.0
  %259 = vadd.xlane.f32.xlu0 %v258
  %v260 = vpop.xlane.xlu0 %259
  %v261 = vsel %vm80, %v68, 0.0
  %262 = vadd.xlane.f32.xlu0 %v261
  %v263 = vpop.xlane.xlu0 %262
  %v264 = vsel %vm80, %v69, 0.0
  %265 = vadd.xlane.f32.xlu0 %v264
  %v266 = vpop.xlane.xlu0 %265
  %v267 = vsel %vm80, %v70, 0.0
  %268 = vadd.xlane.f32.xlu0 %v267
  %v269 = vpop.xlane.xlu0 %268
  %v270 = vsel %vm80, %v71, 0.0
  %271 = vadd.xlane.f32.xlu0 %v270
  %v272 = vpop.xlane.xlu0 %271
  %v273 = vsel %vm80, %v72, 0.0
  %274 = vadd.xlane.f32.xlu0 %v273
  %v275 = vpop.xlane.xlu0 %274
  %v276 = vsel %vm80, %v73, 0.0
  %277 = vadd.xlane.f32.xlu0 %v276
  %v278 = vpop.xlane.xlu0 %277
  %v279 = vsel %vm80, %v74, 0.0
  %280 = vadd.xlane.f32.xlu0 %v279
  %v281 = vpop.xlane.xlu0 %280
  %v282 = vsel %vm80, %v75, 0.0
  %283 = vadd.xlane.f32.xlu0 %v282
  %v284 = vpop.xlane.xlu0 %283
  %v285 = vsel %vm80, %v76, 0.0
  %286 = vadd.xlane.f32.xlu0 %v285
  %v287 = vpop.xlane.xlu0 %286
  %v288 = vsel %vm80, %v77, 0.0
  %289 = vadd.xlane.f32.xlu0 %v288
  %v290 = vpop.xlane.xlu0 %289
  %v291 = vsel %vm80, %v78, 0.0
  %292 = vadd.xlane.f32.xlu0 %v291
  %v293 = vpop.xlane.xlu0 %292
  %v294 = vsel %vm80, %v79, 0.0
  %295 = vadd.xlane.f32.xlu0 %v294
  %v296 = vpop.xlane.xlu0 %295
  %v297 = vrcp.pop 9.0
  %v298 = vmul.f32 %v83, %v297
  %v299 = vmul.f32 %v86, %v297
  %v300 = vmul.f32 %v89, %v297
  %v301 = vmul.f32 %v92, %v297
  %v302 = vmul.f32 %v95, %v297
  %v303 = vmul.f32 %v98, %v297
  %v304 = vmul.f32 %v101, %v297
  %v305 = vmul.f32 %v104, %v297
  %v306 = vmul.f32 %v107, %v297
  %v307 = vmul.f32 %v110, %v297
  %v308 = vmul.f32 %v113, %v297
  %v309 = vmul.f32 %v116, %v297
  %v310 = vmul.f32 %v119, %v297
  %v311 = vmul.f32 %v122, %v297
  %v312 = vmul.f32 %v125, %v297
  %v313 = vmul.f32 %v128, %v297
  %v314 = vmul.f32 %v131, %v297
  %v315 = vmul.f32 %v134, %v297
  %v316 = vmul.f32 %v137, %v297
  %v317 = vmul.f32 %v140, %v297
  %v318 = vmul.f32 %v143, %v297
  %v319 = vmul.f32 %v146, %v297
  %v320 = vmul.f32 %v149, %v297
  %v321 = vmul.f32 %v152, %v297
  %v322 = vmul.f32 %v155, %v297
  %v323 = vmul.f32 %v158, %v297
  %v324 = vmul.f32 %v161, %v297
  %v325 = vmul.f32 %v164, %v297
  %v326 = vmul.f32 %v167, %v297
  %v327 = vmul.f32 %v170, %v297
  %v328 = vmul.f32 %v173, %v297
  %v329 = vmul.f32 %v176, %v297
  %v330 = vmul.f32 %v179, %v297
  %v331 = vmul.f32 %v182, %v297
  %v332 = vmul.f32 %v185, %v297
  %v333 = vmul.f32 %v188, %v297
  %v334 = vmul.f32 %v191, %v297
  %v335 = vmul.f32 %v194, %v297
  %v336 = vmul.f32 %v197, %v297
  %v337 = vmul.f32 %v200, %v297
  %v338 = vmul.f32 %v203, %v297
  %v339 = vmul.f32 %v206, %v297
  %v340 = vmul.f32 %v209, %v297
  %v341 = vmul.f32 %v212, %v297
  %v342 = vmul.f32 %v215, %v297
  %v343 = vmul.f32 %v218, %v297
  %v344 = vmul.f32 %v221, %v297
  %v345 = vmul.f32 %v224, %v297
  %v346 = vmul.f32 %v227, %v297
  %v347 = vmul.f32 %v230, %v297
  %v348 = vmul.f32 %v233, %v297
  %v349 = vmul.f32 %v236, %v297
  %v350 = vmul.f32 %v239, %v297
  %v351 = vmul.f32 %v242, %v297
  %v352 = vmul.f32 %v245, %v297
  %v353 = vmul.f32 %v248, %v297
  %v354 = vmul.f32 %v251, %v297
  %v355 = vmul.f32 %v254, %v297
  %v356 = vmul.f32 %v257, %v297
  %v357 = vmul.f32 %v260, %v297
  %v358 = vmul.f32 %v263, %v297
  %v359 = vmul.f32 %v266, %v297
  %v360 = vmul.f32 %v269, %v297
  %v361 = vmul.f32 %v272, %v297
  %v362 = vmul.f32 %v275, %v297
  %v363 = vmul.f32 %v278, %v297
  %v364 = vmul.f32 %v281, %v297
  %v365 = vmul.f32 %v284, %v297
  %v366 = vmul.f32 %v287, %v297
  %v367 = vmul.f32 %v290, %v297
  %v368 = vmul.f32 %v293, %v297
  %v369 = vmul.f32 %v296, %v297
  %vm370 = vcmask 7168
  %371 = vst.msk [vmem:[%s1] sm:$0xff] %vm370, %v298
  %372 = vst.msk [vmem:[%s1 + $0x8] sm:$0xff] %vm370, %v299
  %373 = vst.msk [vmem:[%s1 + $0x10] sm:$0xff] %vm370, %v300
  %374 = vst.msk [vmem:[%s1 + $0x18] sm:$0xff] %vm370, %v301
  %375 = vst.msk [vmem:[%s1 + $0x20] sm:$0xff] %vm370, %v302
  %376 = vst.msk [vmem:[%s1 + $0x28] sm:$0xff] %vm370, %v303
  %377 = vst.msk [vmem:[%s1 + $0x30] sm:$0xff] %vm370, %v304
  %378 = vst.msk [vmem:[%s1 + $0x38] sm:$0xff] %vm370, %v305
  %379 = vst.msk [vmem:[%s1 + $0x40] sm:$0xff] %vm370, %v306
  %380 = vst.msk [vmem:[%s1 + $0x48] sm:$0xff] %vm370, %v307
  %381 = vst.msk [vmem:[%s1 + $0x50] sm:$0xff] %vm370, %v308
  %382 = vst.msk [vmem:[%s1 + $0x58] sm:$0xff] %vm370, %v309
  %383 = vst.msk [vmem:[%s1 + $0x60] sm:$0xff] %vm370, %v310
  %384 = vst.msk [vmem:[%s1 + $0x68] sm:$0xff] %vm370, %v311
  %385 = vst.msk [vmem:[%s1 + $0x70] sm:$0xff] %vm370, %v312
  %386 = vst.msk [vmem:[%s1 + $0x78] sm:$0xff] %vm370, %v313
  %387 = vst.msk [vmem:[%s1 + $0x80] sm:$0xff] %vm370, %v314
  %388 = vst.msk [vmem:[%s1 + $0x88] sm:$0xff] %vm370, %v315
  %389 = vst.msk [vmem:[%s1 + $0x90] sm:$0xff] %vm370, %v316
  %390 = vst.msk [vmem:[%s1 + $0x98] sm:$0xff] %vm370, %v317
  %391 = vst.msk [vmem:[%s1 + $0xa0] sm:$0xff] %vm370, %v318
  %392 = vst.msk [vmem:[%s1 + $0xa8] sm:$0xff] %vm370, %v319
  %393 = vst.msk [vmem:[%s1 + $0xb0] sm:$0xff] %vm370, %v320
  %394 = vst.msk [vmem:[%s1 + $0xb8] sm:$0xff] %vm370, %v321
  %395 = vst.msk [vmem:[%s1 + $0xc0] sm:$0xff] %vm370, %v322
  %396 = vst.msk [vmem:[%s1 + $0xc8] sm:$0xff] %vm370, %v323
  %397 = vst.msk [vmem:[%s1 + $0xd0] sm:$0xff] %vm370, %v324
  %398 = vst.msk [vmem:[%s1 + $0xd8] sm:$0xff] %vm370, %v325
  %399 = vst.msk [vmem:[%s1 + $0xe0] sm:$0xff] %vm370, %v326
  %400 = vst.msk [vmem:[%s1 + $0xe8] sm:$0xff] %vm370, %v327
  %401 = vst.msk [vmem:[%s1 + $0xf0] sm:$0xff] %vm370, %v328
  %402 = vst.msk [vmem:[%s1 + $0xf8] sm:$0xff] %vm370, %v329
  %403 = vst.msk [vmem:[%s1 + $0x100] sm:$0xff] %vm370, %v330
  %404 = vst.msk [vmem:[%s1 + $0x108] sm:$0xff] %vm370, %v331
  %405 = vst.msk [vmem:[%s1 + $0x110] sm:$0xff] %vm370, %v332
  %406 = vst.msk [vmem:[%s1 + $0x118] sm:$0xff] %vm370, %v333
  %407 = vst.msk [vmem:[%s1 + $0x120] sm:$0xff] %vm370, %v334
  %408 = vst.msk [vmem:[%s1 + $0x128] sm:$0xff] %vm370, %v335
  %409 = vst.msk [vmem:[%s1 + $0x130] sm:$0xff] %vm370, %v336
  %410 = vst.msk [vmem:[%s1 + $0x138] sm:$0xff] %vm370, %v337
  %411 = vst.msk [vmem:[%s1 + $0x140] sm:$0xff] %vm370, %v338
  %412 = vst.msk [vmem:[%s1 + $0x148] sm:$0xff] %vm370, %v339
  %413 = vst.msk [vmem:[%s1 + $0x150] sm:$0xff] %vm370, %v340
  %414 = vst.msk [vmem:[%s1 + $0x158] sm:$0xff] %vm370, %v341
  %415 = vst.msk [vmem:[%s1 + $0x160] sm:$0xff] %vm370, %v342
  %416 = vst.msk [vmem:[%s1 + $0x168] sm:$0xff] %vm370, %v343
  %417 = vst.msk [vmem:[%s1 + $0x170] sm:$0xff] %vm370, %v344
  %418 = vst.msk [vmem:[%s1 + $0x178] sm:$0xff] %vm370, %v345
  %419 = vst.msk [vmem:[%s1 + $0x180] sm:$0xff] %vm370, %v346
  %420 = vst.msk [vmem:[%s1 + $0x188] sm:$0xff] %vm370, %v347
  %421 = vst.msk [vmem:[%s1 + $0x190] sm:$0xff] %vm370, %v348
  %422 = vst.msk [vmem:[%s1 + $0x198] sm:$0xff] %vm370, %v349
  %423 = vst.msk [vmem:[%s1 + $0x1a0] sm:$0xff] %vm370, %v350
  %424 = vst.msk [vmem:[%s1 + $0x1a8] sm:$0xff] %vm370, %v351
  %425 = vst.msk [vmem:[%s1 + $0x1b0] sm:$0xff] %vm370, %v352
  %426 = vst.msk [vmem:[%s1 + $0x1b8] sm:$0xff] %vm370, %v353
  %427 = vst.msk [vmem:[%s1 + $0x1c0] sm:$0xff] %vm370, %v354
  %428 = vst.msk [vmem:[%s1 + $0x1c8] sm:$0xff] %vm370, %v355
  %429 = vst.msk [vmem:[%s1 + $0x1d0] sm:$0xff] %vm370, %v356
  %430 = vst.msk [vmem:[%s1 + $0x1d8] sm:$0xff] %vm370, %v357
  %431 = vst.msk [vmem:[%s1 + $0x1e0] sm:$0xff] %vm370, %v358
  %432 = vst.msk [vmem:[%s1 + $0x1e8] sm:$0xff] %vm370, %v359
  %433 = vst.msk [vmem:[%s1 + $0x1f0] sm:$0xff] %vm370, %v360
  %434 = vst.msk [vmem:[%s1 + $0x1f8] sm:$0xff] %vm370, %v361
  %435 = vst.msk [vmem:[%s1 + $0x200] sm:$0xff] %vm370, %v362
  %436 = vst.msk [vmem:[%s1 + $0x208] sm:$0xff] %vm370, %v363
  %437 = vst.msk [vmem:[%s1 + $0x210] sm:$0xff] %vm370, %v364
  %438 = vst.msk [vmem:[%s1 + $0x218] sm:$0xff] %vm370, %v365
  %439 = vst.msk [vmem:[%s1 + $0x220] sm:$0xff] %vm370, %v366
  %440 = vst.msk [vmem:[%s1 + $0x228] sm:$0xff] %vm370, %v367
  %441 = vst.msk [vmem:[%s1 + $0x230] sm:$0xff] %vm370, %v368
  %442 = vst.msk [vmem:[%s1 + $0x238] sm:$0xff] %vm370, %v369
  // Predicated region
  $region6: #{_lambda_.34} parent=0 // pred_check
    _
  $region7: #{_lambda_.34} parent=0 // pred_check_branch
    %444 = sbr.rel (0) target = $region9
  $region8: #{_lambda_.34} parent=0 // pred_region
    _
  $region9: #{_lambda_.34} parent=0 // pred_fallthru
    _
  // Predicated region
  $region10: #{_lambda_.34} parent=0 // pred_check
    _
  $region11: #{_lambda_.34} parent=0 // pred_check_branch
    %446 = sbr.rel (0) target = $region13
  $region12: #{_lambda_.34} parent=0 // pred_region
    _
  $region13: #{_lambda_.34} parent=0 // pred_fallthru
    _

// kernel: _lambda_.36
$region0: #{_lambda_.36}
  #allocation0 [shape = 'u32[]', space=smem, size = 0x4, offset = 0x4, fixed_abs, tag = 'smem constant byte address 0x4 - core index']
  #allocation1 [shape = 'u32[144,128]{1,0:T(1,128)}', space=vmem, size = 0x12000, scoped, tag = 'internal scratch']
  %s0 = inlined_call_operand.vmem [shape: f32[36,32], index: 0, kind: input, shape index: {}]
  %s1 = inlined_call_operand.vmem [shape: f32[32,8], index: 1, kind: input, shape index: {}]
  %s2 = inlined_call_operand.vmem [shape: f32[1,8], index: 2, kind: input, shape index: {}]
  %s3 = inlined_call_operand.vmem [shape: f32[1,8], index: 3, kind: input, shape index: {}]
  %s4 = inlined_call_operand.vmem [shape: f32[36,8], index: 4, kind: output, shape index: {}]
  %s5 = sld [smem:[#allocation0]]
  $region26: #{_lambda_.36} parent=0
    _
  %s7 = ssub.s32 1, %s5
  %s8 = scalar_select 0, %s7, %s5
  // Predicated region
  $region2: #{_lambda_.36} parent=0 // pred_check
    _
  $region3: #{_lambda_.36} parent=0 // pred_check_branch
    %10 = sbr.rel (0) target = $region5
  $region4: #{_lambda_.36} parent=0 // pred_region
    _
  $region5: #{_lambda_.36} parent=0 // pred_fallthru
    _
  // Predicated region
  $region6: #{_lambda_.36} parent=0 // pred_check
    _
  $region7: #{_lambda_.36} parent=0 // pred_check_branch
    %12 = sbr.rel (0) target = $region9
  $region8: #{_lambda_.36} parent=0 // pred_region
    _
  $region9: #{_lambda_.36} parent=0 // pred_fallthru
    _
  // Predicated region
  $region10: #{_lambda_.36} parent=0 // pred_check
    _
  $region11: #{_lambda_.36} parent=0 // pred_check_branch
    %14 = sbr.rel (0) target = $region13
  $region12: #{_lambda_.36} parent=0 // pred_region
    _
  $region13: #{_lambda_.36} parent=0 // pred_fallthru
    _
  // Predicated region
  $region14: #{_lambda_.36} parent=0 // pred_check
    _
  $region15: #{_lambda_.36} parent=0 // pred_check_branch
    %16 = sbr.rel (0) target = $region17
  $region16: #{_lambda_.36} parent=0 // pred_region
    _
  $region17: #{_lambda_.36} parent=0 // pred_fallthru
    _
  %v17 = vld [vmem:[%s0] sm:$0xff]
  %v18 = vld [vmem:[%s0 + $0x8] sm:$0xff]
  %v19 = vld [vmem:[%s0 + $0x10] sm:$0xff]
  %v20 = vld [vmem:[%s0 + $0x18] sm:$0xff]
  %v21 = vld [vmem:[%s0 + $0x20] sm:$0xf]
  %v22 = vld [vmem:[%s1] sm:$0xff]
  %v23 = vld [vmem:[%s1 + $0x8] sm:$0xff]
  %v24 = vld [vmem:[%s1 + $0x10] sm:$0xff]
  %v25 = vld [vmem:[%s1 + $0x18] sm:$0xff]
  %vm26 = vcmask 261120
  %v28 = vsel %vm26, %v17, 0
  %v31 = vsel %vm26, %v18, 0
  %v34 = vsel %vm26, %v19, 0
  %v37 = vsel %vm26, %v20, 0
  %v40 = vsel %vm26, %v21, 0
  %42 = vmatprep.subr.mxu0 0.0
  %43 = vmatpush1.msra.mxu0 %v22
  %44 = vmatprep.subr.mxu0 0.0
  %45 = vmatpush1.msra.mxu0 %v23
  %46 = vmatprep.subr.mxu0 0.0
  %47 = vmatpush1.msra.mxu0 %v24
  %48 = vmatprep.subr.mxu0 0.0
  %49 = vmatpush1.msra.mxu0 %v25
  %50 = vmatprep.subr.mxu0 0.0
  %51 = vmatpush1.msra.mxu0 0.0
  %52 = vmatprep.subr.mxu0 0.0
  %53 = vmatpush1.msra.mxu0 0.0
  %54 = vmatprep.subr.mxu0 0.0
  %55 = vmatpush1.msra.mxu0 0.0
  %56 = vmatprep.subr.mxu0 0.0
  %57 = vmatpush1.msra.mxu0 0.0
  %58 = vmatprep.subr.mxu0 0.0
  %59 = vmatpush1.msra.mxu0 0.0
  %60 = vmatprep.subr.mxu0 0.0
  %61 = vmatpush1.msra.mxu0 0.0
  %62 = vmatprep.subr.mxu0 0.0
  %63 = vmatpush1.msra.mxu0 0.0
  %64 = vmatprep.subr.mxu0 0.0
  %65 = vmatpush1.msra.mxu0 0.0
  %66 = vmatprep.subr.mxu0 0.0
  %67 = vmatpush1.msra.mxu0 0.0
  %68 = vmatprep.subr.mxu0 0.0
  %69 = vmatpush1.msra.mxu0 0.0
  %70 = vmatprep.subr.mxu0 0.0
  %71 = vmatpush1.msra.mxu0 0.0
  %72 = vmatprep.subr.mxu0 0.0
  %73 = vmatpush1.msra.mxu0 0.0
  %74 = vmatprep.subr.mxu0 0.0
  %75 = vmatpush1.msra.mxu0 0.0
  %76 = vmatprep.subr.mxu0 0.0
  %77 = vmatpush1.msra.mxu0 0.0
  %78 = vmatprep.subr.mxu0 0.0
  %79 = vmatpush1.msra.mxu0 0.0
  %80 = vmatprep.subr.mxu0 0.0
  %81 = vmatpush1.msra.mxu0 0.0
  %82 = vmatprep.subr.mxu0 0.0
  %83 = vmatpush1.msra.mxu0 0.0
  %84 = vmatprep.subr.mxu0 0.0
  %85 = vmatpush1.msra.mxu0 0.0
  %86 = vmatprep.subr.mxu0 0.0
  %87 = vmatpush1.msra.mxu0 0.0
  %88 = vmatprep.subr.mxu0 0.0
  %89 = vmatpush1.msra.mxu0 0.0
  %90 = vmatprep.subr.mxu0 0.0
  %91 = vmatpush1.msra.mxu0 0.0
  %92 = vmatprep.subr.mxu0 0.0
  %93 = vmatpush1.msra.mxu0 0.0
  %94 = vmatprep.subr.mxu0 0.0
  %95 = vmatpush1.msra.mxu0 0.0
  %96 = vmatprep.subr.mxu0 0.0
  %97 = vmatpush1.msra.mxu0 0.0
  %98 = vmatprep.subr.mxu0 0.0
  %99 = vmatpush1.msra.mxu0 0.0
  %100 = vmatprep.subr.mxu0 0.0
  %101 = vmatpush1.msra.mxu0 0.0
  %102 = vmatprep.subr.mxu0 0.0
  %103 = vmatpush1.msra.mxu0 0.0
  %104 = vmatprep.subr.mxu0 0.0
  %105 = vmatpush1.msra.mxu0 0.0
  %106 = vmatprep.mubr.f32.mxu0 0.0
  %107 = vmatmul.mubr.f32.gmra.mrb[0].mxu0 %v28
  %v108 = vpop.f32.mrb[0].mxu0
  %v109 = vadd.f32 0.0, %v108
  %v110 = vpop.f32.mrb[0].mxu0
  %111 = vmatprep.mubr.f32.mxu0 0.0
  %112 = vmatmul.mubr.f32.gmra.mrb[0].mxu0 %v31
  %v113 = vpop.f32.mrb[0].mxu0
  %v114 = vadd.f32 0.0, %v113
  %v115 = vpop.f32.mrb[0].mxu0
  %116 = vmatprep.mubr.f32.mxu0 0.0
  %117 = vmatmul.mubr.f32.gmra.mrb[0].mxu0 %v34
  %v118 = vpop.f32.mrb[0].mxu0
  %v119 = vadd.f32 0.0, %v118
  %v120 = vpop.f32.mrb[0].mxu0
  %121 = vmatprep.mubr.f32.mxu0 0.0
  %122 = vmatmul.mubr.f32.gmra.mrb[0].mxu0 %v37
  %v123 = vpop.f32.mrb[0].mxu0
  %v124 = vadd.f32 0.0, %v123
  %v125 = vpop.f32.mrb[0].mxu0
  %126 = vmatprep.mubr.f32.mxu0 0.0
  %127 = vmatmul.mubr.f32.gmra.mrb[0].mxu0 %v40
  %v128 = vpop.f32.mrb[0].mxu0
  %v129 = vadd.f32 0.0, %v128
  %v130 = vpop.f32.mrb[0].mxu0
  %131 = vdwg.mxu0
  %v132 = vld [vmem:[%s2] sm:$0x1]
  %v134 = vlaneseq
  %v135 = vshrl.u32 %v134, 7
  %v136 = vsub.s32 0, %v135
  %v137 = vrot.slane %v132, %v136
  %v139 = vmul.f32 %v109, %v137
  %v140 = vmul.f32 %v114, %v137
  %v141 = vmul.f32 %v119, %v137
  %v142 = vmul.f32 %v124, %v137
  %v143 = vmul.f32 %v129, %v137
  %v144 = vld [vmem:[%s3] sm:$0x1]
  %v146 = vlaneseq
  %v147 = vshrl.u32 %v146, 7
  %v148 = vsub.s32 0, %v147
  %v149 = vrot.slane %v144, %v148
  %v151 = vadd.f32 %v139, %v149
  %v152 = vadd.f32 %v140, %v149
  %v153 = vadd.f32 %v141, %v149
  %v154 = vadd.f32 %v142, %v149
  %v155 = vadd.f32 %v143, %v149
  %v156 = vadd.f32 %v151, 3.0
  %v157 = vadd.f32 %v152, 3.0
  %v158 = vadd.f32 %v153, 3.0
  %v159 = vadd.f32 %v154, 3.0
  %v160 = vadd.f32 %v155, 3.0
  %v161 = vmax.f32 %v156, 0.0
  %v162 = vmax.f32 %v157, 0.0
  %v163 = vmax.f32 %v158, 0.0
  %v164 = vmax.f32 %v159, 0.0
  %v165 = vmax.f32 %v160, 0.0
  %v166 = vmin.f32 %v161, 6.0
  %v167 = vmin.f32 %v162, 6.0
  %v168 = vmin.f32 %v163, 6.0
  %v169 = vmin.f32 %v164, 6.0
  %v170 = vmin.f32 %v165, 6.0
  %v171 = vmul.f32 %v166, 0.16666667
  %v172 = vmul.f32 %v167, 0.16666667
  %v173 = vmul.f32 %v168, 0.16666667
  %v174 = vmul.f32 %v169, 0.16666667
  %v175 = vmul.f32 %v170, 0.16666667
  %v176 = vmul.f32 %v151, %v171
  %v177 = vmul.f32 %v152, %v172
  %v178 = vmul.f32 %v153, %v173
  %v179 = vmul.f32 %v154, %v174
  %v180 = vmul.f32 %v155, %v175
  %vm181 = vcmask 64512
  %182 = vst.msk [vmem:[%s4] sm:$0xff] %vm181, %v176
  %183 = vst.msk [vmem:[%s4 + $0x8] sm:$0xff] %vm181, %v177
  %184 = vst.msk [vmem:[%s4 + $0x10] sm:$0xff] %vm181, %v178
  %185 = vst.msk [vmem:[%s4 + $0x18] sm:$0xff] %vm181, %v179
  %vm186 = vcmask 60416
  %187 = vst.msk [vmem:[%s4 + $0x20] sm:$0xf] %vm186, %v180
  // Predicated region
  $region18: #{_lambda_.36} parent=0 // pred_check
    _
  $region19: #{_lambda_.36} parent=0 // pred_check_branch
    %189 = sbr.rel (0) target = $region21
  $region20: #{_lambda_.36} parent=0 // pred_region
    _
  $region21: #{_lambda_.36} parent=0 // pred_fallthru
    _
  // Predicated region
  $region22: #{_lambda_.36} parent=0 // pred_check
    _
  $region23: #{_lambda_.36} parent=0 // pred_check_branch
    %191 = sbr.rel (0) target = $region25
  $region24: #{_lambda_.36} parent=0 // pred_region
    _
  $region25: #{_lambda_.36} parent=0 // pred_fallthru
    _

// kernel: _lambda_.37
$region0: #{_lambda_.37}
  #allocation0 [shape = 'u32[]', space=smem, size = 0x4, offset = 0x4, fixed_abs, tag = 'smem constant byte address 0x4 - core index']
  #allocation1 [shape = 'u32[144,128]{1,0:T(1,128)}', space=vmem, size = 0x12000, scoped, tag = 'internal scratch']
  %s0 = inlined_call_operand.vmem [shape: f32[18,8], index: 0, kind: input, shape index: {}]
  %s1 = inlined_call_operand.vmem [shape: f32[8,32], index: 1, kind: input, shape index: {}]
  %s2 = inlined_call_operand.vmem [shape: f32[1,32], index: 2, kind: input, shape index: {}]
  %s3 = inlined_call_operand.vmem [shape: f32[1,32], index: 3, kind: input, shape index: {}]
  %s4 = inlined_call_operand.vmem [shape: f32[18,32], index: 4, kind: output, shape index: {}]
  %s5 = sld [smem:[#allocation0]]
  $region26: #{_lambda_.37} parent=0
    _
  %s7 = ssub.s32 1, %s5
  %s8 = scalar_select 0, %s7, %s5
  // Predicated region
  $region2: #{_lambda_.37} parent=0 // pred_check
    _
  $region3: #{_lambda_.37} parent=0 // pred_check_branch
    %10 = sbr.rel (0) target = $region5
  $region4: #{_lambda_.37} parent=0 // pred_region
    _
  $region5: #{_lambda_.37} parent=0 // pred_fallthru
    _
  // Predicated region
  $region6: #{_lambda_.37} parent=0 // pred_check
    _
  $region7: #{_lambda_.37} parent=0 // pred_check_branch
    %12 = sbr.rel (0) target = $region9
  $region8: #{_lambda_.37} parent=0 // pred_region
    _
  $region9: #{_lambda_.37} parent=0 // pred_fallthru
    _
  // Predicated region
  $region10: #{_lambda_.37} parent=0 // pred_check
    _
  $region11: #{_lambda_.37} parent=0 // pred_check_branch
    %14 = sbr.rel (0) target = $region13
  $region12: #{_lambda_.37} parent=0 // pred_region
    _
  $region13: #{_lambda_.37} parent=0 // pred_fallthru
    _
  // Predicated region
  $region14: #{_lambda_.37} parent=0 // pred_check
    _
  $region15: #{_lambda_.37} parent=0 // pred_check_branch
    %16 = sbr.rel (0) target = $region17
  $region16: #{_lambda_.37} parent=0 // pred_region
    _
  $region17: #{_lambda_.37} parent=0 // pred_fallthru
    _
  %v17 = vld [vmem:[%s0] sm:$0xff]
  %v18 = vld [vmem:[%s0 + $0x8] sm:$0xff]
  %v19 = vld [vmem:[%s0 + $0x10] sm:$0x3]
  %v20 = vld [vmem:[%s1] sm:$0xff]
  %vm21 = vcmask 64512
  %v23 = vsel %vm21, %v17, 0
  %v26 = vsel %vm21, %v18, 0
  %v29 = vsel %vm21, %v19, 0
  %31 = vmatprep.subr.mxu0 0.0
  %32 = vmatpush1.msra.mxu0 %v20
  %33 = vmatprep.subr.mxu0 0.0
  %34 = vmatpush1.msra.mxu0 0.0
  %35 = vmatprep.subr.mxu0 0.0
  %36 = vmatpush1.msra.mxu0 0.0
  %37 = vmatprep.subr.mxu0 0.0
  %38 = vmatpush1.msra.mxu0 0.0
  %39 = vmatprep.subr.mxu0 0.0
  %40 = vmatpush1.msra.mxu0 0.0
  %41 = vmatprep.subr.mxu0 0.0
  %42 = vmatpush1.msra.mxu0 0.0
  %43 = vmatprep.subr.mxu0 0.0
  %44 = vmatpush1.msra.mxu0 0.0
  %45 = vmatprep.subr.mxu0 0.0
  %46 = vmatpush1.msra.mxu0 0.0
  %47 = vmatprep.subr.mxu0 0.0
  %48 = vmatpush1.msra.mxu0 0.0
  %49 = vmatprep.subr.mxu0 0.0
  %50 = vmatpush1.msra.mxu0 0.0
  %51 = vmatprep.subr.mxu0 0.0
  %52 = vmatpush1.msra.mxu0 0.0
  %53 = vmatprep.subr.mxu0 0.0
  %54 = vmatpush1.msra.mxu0 0.0
  %55 = vmatprep.subr.mxu0 0.0
  %56 = vmatpush1.msra.mxu0 0.0
  %57 = vmatprep.subr.mxu0 0.0
  %58 = vmatpush1.msra.mxu0 0.0
  %59 = vmatprep.subr.mxu0 0.0
  %60 = vmatpush1.msra.mxu0 0.0
  %61 = vmatprep.subr.mxu0 0.0
  %62 = vmatpush1.msra.mxu0 0.0
  %63 = vmatprep.subr.mxu0 0.0
  %64 = vmatpush1.msra.mxu0 0.0
  %65 = vmatprep.subr.mxu0 0.0
  %66 = vmatpush1.msra.mxu0 0.0
  %67 = vmatprep.subr.mxu0 0.0
  %68 = vmatpush1.msra.mxu0 0.0
  %69 = vmatprep.subr.mxu0 0.0
  %70 = vmatpush1.msra.mxu0 0.0
  %71 = vmatprep.subr.mxu0 0.0
  %72 = vmatpush1.msra.mxu0 0.0
  %73 = vmatprep.subr.mxu0 0.0
  %74 = vmatpush1.msra.mxu0 0.0
  %75 = vmatprep.subr.mxu0 0.0
  %76 = vmatpush1.msra.mxu0 0.0
  %77 = vmatprep.subr.mxu0 0.0
  %78 = vmatpush1.msra.mxu0 0.0
  %79 = vmatprep.subr.mxu0 0.0
  %80 = vmatpush1.msra.mxu0 0.0
  %81 = vmatprep.subr.mxu0 0.0
  %82 = vmatpush1.msra.mxu0 0.0
  %83 = vmatprep.subr.mxu0 0.0
  %84 = vmatpush1.msra.mxu0 0.0
  %85 = vmatprep.subr.mxu0 0.0
  %86 = vmatpush1.msra.mxu0 0.0
  %87 = vmatprep.subr.mxu0 0.0
  %88 = vmatpush1.msra.mxu0 0.0
  %89 = vmatprep.subr.mxu0 0.0
  %90 = vmatpush1.msra.mxu0 0.0
  %91 = vmatprep.subr.mxu0 0.0
  %92 = vmatpush1.msra.mxu0 0.0
  %93 = vmatprep.subr.mxu0 0.0
  %94 = vmatpush1.msra.mxu0 0.0
  %95 = vmatprep.mubr.f32.mxu0 0.0
  %96 = vmatmul.mubr.f32.gmra.mrb[0].mxu0 %v23
  %v97 = vpop.f32.mrb[0].mxu0
  %v98 = vadd.f32 0.0, %v97
  %v99 = vpop.f32.mrb[0].mxu0
  %100 = vmatprep.mubr.f32.mxu0 0.0
  %101 = vmatmul.mubr.f32.gmra.mrb[0].mxu0 %v26
  %v102 = vpop.f32.mrb[0].mxu0
  %v103 = vadd.f32 0.0, %v102
  %v104 = vpop.f32.mrb[0].mxu0
  %105 = vmatprep.mubr.f32.mxu0 0.0
  %106 = vmatmul.mubr.f32.gmra.mrb[0].mxu0 %v29
  %v107 = vpop.f32.mrb[0].mxu0
  %v108 = vadd.f32 0.0, %v107
  %v109 = vpop.f32.mrb[0].mxu0
  %110 = vdwg.mxu0
  %v111 = vld [vmem:[%s2] sm:$0x1]
  %v113 = vlaneseq
  %v114 = vshrl.u32 %v113, 7
  %v115 = vsub.s32 0, %v114
  %v116 = vrot.slane %v111, %v115
  %v118 = vmul.f32 %v98, %v116
  %v119 = vmul.f32 %v103, %v116
  %v120 = vmul.f32 %v108, %v116
  %v121 = vld [vmem:[%s3] sm:$0x1]
  %v123 = vlaneseq
  %v124 = vshrl.u32 %v123, 7
  %v125 = vsub.s32 0, %v124
  %v126 = vrot.slane %v121, %v125
  %v128 = vadd.f32 %v118, %v126
  %v129 = vadd.f32 %v119, %v126
  %v130 = vadd.f32 %v120, %v126
  %v131 = vsub.f32 0.0, %v128
  %v132 = vsub.f32 0.0, %v129
  %v133 = vsub.f32 0.0, %v130
  %v134 = vmul.f32 %v131, 1.442695
  %v135 = vpow.pop %v134
  %v136 = vmul.f32 %v132, 1.442695
  %v137 = vpow.pop %v136
  %v138 = vmul.f32 %v133, 1.442695
  %v139 = vpow.pop %v138
  %v140 = vadd.f32 %v135, 1.0
  %v141 = vadd.f32 %v137, 1.0
  %v142 = vadd.f32 %v139, 1.0
  %v143 = vrcp.pop %v140
  %v144 = vmul.f32 1.0, %v143
  %v145 = vrcp.pop %v141
  %v146 = vmul.f32 1.0, %v145
  %v147 = vrcp.pop %v142
  %v148 = vmul.f32 1.0, %v147
  %vm149 = vcmask 261120
  %150 = vst.msk [vmem:[%s4] sm:$0xff] %vm149, %v144
  %151 = vst.msk [vmem:[%s4 + $0x8] sm:$0xff] %vm149, %v146
  %vm152 = vcmask 254976
  %153 = vst.msk [vmem:[%s4 + $0x10] sm:$0x3] %vm152, %v148
  // Predicated region
  $region18: #{_lambda_.37} parent=0 // pred_check
    _
  $region19: #{_lambda_.37} parent=0 // pred_check_branch
    %155 = sbr.rel (0) target = $region21
  $region20: #{_lambda_.37} parent=0 // pred_region
    _
  $region21: #{_lambda_.37} parent=0 // pred_fallthru
    _
  // Predicated region
  $region22: #{_lambda_.37} parent=0 // pred_check
    _
  $region23: #{_lambda_.37} parent=0 // pred_check_branch
    %157 = sbr.rel (0) target = $region25
  $region24: #{_lambda_.37} parent=0 // pred_region
    _
  $region25: #{_lambda_.37} parent=0 // pred_fallthru
    _

// kernel: _lambda_.40
$region0: #{_lambda_.40}
  #allocation0 [shape = 'u32[]', space=smem, size = 0x4, offset = 0x4, fixed_abs, tag = 'smem constant byte address 0x4 - core index']
  #allocation1 [shape = 'u32[144,128]{1,0:T(1,128)}', space=vmem, size = 0x12000, scoped, tag = 'internal scratch']
  %s0 = inlined_call_operand.vmem [shape: f32[18,9,32], index: 0, kind: input, shape index: {}]
  %s1 = inlined_call_operand.vmem [shape: f32[18,1,32], index: 1, kind: input, shape index: {}]
  %s2 = inlined_call_operand.vmem [shape: f32[18,9,32], index: 2, kind: output, shape index: {}]
  %s3 = sld [smem:[#allocation0]]
  $region18: #{_lambda_.40} parent=0
    _
  %s5 = ssub.s32 1, %s3
  %s6 = scalar_select 0, %s5, %s3
  // Predicated region
  $region2: #{_lambda_.40} parent=0 // pred_check
    _
  $region3: #{_lambda_.40} parent=0 // pred_check_branch
    %8 = sbr.rel (0) target = $region5
  $region4: #{_lambda_.40} parent=0 // pred_region
    _
  $region5: #{_lambda_.40} parent=0 // pred_fallthru
    _
  // Predicated region
  $region6: #{_lambda_.40} parent=0 // pred_check
    _
  $region7: #{_lambda_.40} parent=0 // pred_check_branch
    %10 = sbr.rel (0) target = $region9
  $region8: #{_lambda_.40} parent=0 // pred_region
    _
  $region9: #{_lambda_.40} parent=0 // pred_fallthru
    _
  %v11 = vld [vmem:[%s0] sm:$0xff]
  %v12 = vld [vmem:[%s0 + $0x8] sm:$0x1]
  %v13 = vld [vmem:[%s0 + $0x10] sm:$0xff]
  %v14 = vld [vmem:[%s0 + $0x18] sm:$0x1]
  %v15 = vld [vmem:[%s0 + $0x20] sm:$0xff]
  %v16 = vld [vmem:[%s0 + $0x28] sm:$0x1]
  %v17 = vld [vmem:[%s0 + $0x30] sm:$0xff]
  %v18 = vld [vmem:[%s0 + $0x38] sm:$0x1]
  %v19 = vld [vmem:[%s0 + $0x40] sm:$0xff]
  %v20 = vld [vmem:[%s0 + $0x48] sm:$0x1]
  %v21 = vld [vmem:[%s0 + $0x50] sm:$0xff]
  %v22 = vld [vmem:[%s0 + $0x58] sm:$0x1]
  %v23 = vld [vmem:[%s0 + $0x60] sm:$0xff]
  %v24 = vld [vmem:[%s0 + $0x68] sm:$0x1]
  %v25 = vld [vmem:[%s0 + $0x70] sm:$0xff]
  %v26 = vld [vmem:[%s0 + $0x78] sm:$0x1]
  %v27 = vld [vmem:[%s0 + $0x80] sm:$0xff]
  %v28 = vld [vmem:[%s0 + $0x88] sm:$0x1]
  %v29 = vld [vmem:[%s0 + $0x90] sm:$0xff]
  %v30 = vld [vmem:[%s0 + $0x98] sm:$0x1]
  %v31 = vld [vmem:[%s0 + $0xa0] sm:$0xff]
  %v32 = vld [vmem:[%s0 + $0xa8] sm:$0x1]
  %v33 = vld [vmem:[%s0 + $0xb0] sm:$0xff]
  %v34 = vld [vmem:[%s0 + $0xb8] sm:$0x1]
  %v35 = vld [vmem:[%s0 + $0xc0] sm:$0xff]
  %v36 = vld [vmem:[%s0 + $0xc8] sm:$0x1]
  %v37 = vld [vmem:[%s0 + $0xd0] sm:$0xff]
  %v38 = vld [vmem:[%s0 + $0xd8] sm:$0x1]
  %v39 = vld [vmem:[%s0 + $0xe0] sm:$0xff]
  %v40 = vld [vmem:[%s0 + $0xe8] sm:$0x1]
  %v41 = vld [vmem:[%s0 + $0xf0] sm:$0xff]
  %v42 = vld [vmem:[%s0 + $0xf8] sm:$0x1]
  %v43 = vld [vmem:[%s0 + $0x100] sm:$0xff]
  %v44 = vld [vmem:[%s0 + $0x108] sm:$0x1]
  %v45 = vld [vmem:[%s0 + $0x110] sm:$0xff]
  %v46 = vld [vmem:[%s0 + $0x118] sm:$0x1]
  %v47 = vld [vmem:[%s1] sm:$0x1]
  %v48 = vld [vmem:[%s1 + $0x1] sm:$0x1]
  %v49 = vld [vmem:[%s1 + $0x2] sm:$0x1]
  %v50 = vld [vmem:[%s1 + $0x3] sm:$0x1]
  %v51 = vld [vmem:[%s1 + $0x4] sm:$0x1]
  %v52 = vld [vmem:[%s1 + $0x5] sm:$0x1]
  %v53 = vld [vmem:[%s1 + $0x6] sm:$0x1]
  %v54 = vld [vmem:[%s1 + $0x7] sm:$0x1]
  %v55 = vld [vmem:[%s1 + $0x8] sm:$0x1]
  %v56 = vld [vmem:[%s1 + $0x9] sm:$0x1]
  %v57 = vld [vmem:[%s1 + $0xa] sm:$0x1]
  %v58 = vld [vmem:[%s1 + $0xb] sm:$0x1]
  %v59 = vld [vmem:[%s1 + $0xc] sm:$0x1]
  %v60 = vld [vmem:[%s1 + $0xd] sm:$0x1]
  %v61 = vld [vmem:[%s1 + $0xe] sm:$0x1]
  %v62 = vld [vmem:[%s1 + $0xf] sm:$0x1]
  %v63 = vld [vmem:[%s1 + $0x10] sm:$0x1]
  %v64 = vld [vmem:[%s1 + $0x11] sm:$0x1]
  %v83 = vlaneseq
  %v84 = vshrl.u32 %v83, 7
  %v85 = vsub.s32 0, %v84
  %v86 = vrot.slane %v47, %v85
  %v87 = vlaneseq
  %v88 = vshrl.u32 %v87, 7
  %v89 = vsub.s32 0, %v88
  %v90 = vrot.slane %v48, %v89
  %v91 = vlaneseq
  %v92 = vshrl.u32 %v91, 7
  %v93 = vsub.s32 0, %v92
  %v94 = vrot.slane %v49, %v93
  %v95 = vlaneseq
  %v96 = vshrl.u32 %v95, 7
  %v97 = vsub.s32 0, %v96
  %v98 = vrot.slane %v50, %v97
  %v99 = vlaneseq
  %v100 = vshrl.u32 %v99, 7
  %v101 = vsub.s32 0, %v100
  %v102 = vrot.slane %v51, %v101
  %v103 = vlaneseq
  %v104 = vshrl.u32 %v103, 7
  %v105 = vsub.s32 0, %v104
  %v106 = vrot.slane %v52, %v105
  %v107 = vlaneseq
  %v108 = vshrl.u32 %v107, 7
  %v109 = vsub.s32 0, %v108
  %v110 = vrot.slane %v53, %v109
  %v111 = vlaneseq
  %v112 = vshrl.u32 %v111, 7
  %v113 = vsub.s32 0, %v112
  %v114 = vrot.slane %v54, %v113
  %v115 = vlaneseq
  %v116 = vshrl.u32 %v115, 7
  %v117 = vsub.s32 0, %v116
  %v118 = vrot.slane %v55, %v117
  %v119 = vlaneseq
  %v120 = vshrl.u32 %v119, 7
  %v121 = vsub.s32 0, %v120
  %v122 = vrot.slane %v56, %v121
  %v123 = vlaneseq
  %v124 = vshrl.u32 %v123, 7
  %v125 = vsub.s32 0, %v124
  %v126 = vrot.slane %v57, %v125
  %v127 = vlaneseq
  %v128 = vshrl.u32 %v127, 7
  %v129 = vsub.s32 0, %v128
  %v130 = vrot.slane %v58, %v129
  %v131 = vlaneseq
  %v132 = vshrl.u32 %v131, 7
  %v133 = vsub.s32 0, %v132
  %v134 = vrot.slane %v59, %v133
  %v135 = vlaneseq
  %v136 = vshrl.u32 %v135, 7
  %v137 = vsub.s32 0, %v136
  %v138 = vrot.slane %v60, %v137
  %v139 = vlaneseq
  %v140 = vshrl.u32 %v139, 7
  %v141 = vsub.s32 0, %v140
  %v142 = vrot.slane %v61, %v141
  %v143 = vlaneseq
  %v144 = vshrl.u32 %v143, 7
  %v145 = vsub.s32 0, %v144
  %v146 = vrot.slane %v62, %v145
  %v147 = vlaneseq
  %v148 = vshrl.u32 %v147, 7
  %v149 = vsub.s32 0, %v148
  %v150 = vrot.slane %v63, %v149
  %v151 = vlaneseq
  %v152 = vshrl.u32 %v151, 7
  %v153 = vsub.s32 0, %v152
  %v154 = vrot.slane %v64, %v153
  %v173 = vmul.f32 %v11, %v86
  %v174 = vmul.f32 %v12, %v86
  %v175 = vmul.f32 %v13, %v90
  %v176 = vmul.f32 %v14, %v90
  %v177 = vmul.f32 %v15, %v94
  %v178 = vmul.f32 %v16, %v94
  %v179 = vmul.f32 %v17, %v98
  %v180 = vmul.f32 %v18, %v98
  %v181 = vmul.f32 %v19, %v102
  %v182 = vmul.f32 %v20, %v102
  %v183 = vmul.f32 %v21, %v106
  %v184 = vmul.f32 %v22, %v106
  %v185 = vmul.f32 %v23, %v110
  %v186 = vmul.f32 %v24, %v110
  %v187 = vmul.f32 %v25, %v114
  %v188 = vmul.f32 %v26, %v114
  %v189 = vmul.f32 %v27, %v118
  %v190 = vmul.f32 %v28, %v118
  %v191 = vmul.f32 %v29, %v122
  %v192 = vmul.f32 %v30, %v122
  %v193 = vmul.f32 %v31, %v126
  %v194 = vmul.f32 %v32, %v126
  %v195 = vmul.f32 %v33, %v130
  %v196 = vmul.f32 %v34, %v130
  %v197 = vmul.f32 %v35, %v134
  %v198 = vmul.f32 %v36, %v134
  %v199 = vmul.f32 %v37, %v138
  %v200 = vmul.f32 %v38, %v138
  %v201 = vmul.f32 %v39, %v142
  %v202 = vmul.f32 %v40, %v142
  %v203 = vmul.f32 %v41, %v146
  %v204 = vmul.f32 %v42, %v146
  %v205 = vmul.f32 %v43, %v150
  %v206 = vmul.f32 %v44, %v150
  %v207 = vmul.f32 %v45, %v154
  %v208 = vmul.f32 %v46, %v154
  %vm209 = vcmask 261120
  %210 = vst.msk [vmem:[%s2] sm:$0xff] %vm209, %v173
  %vm211 = vcmask 253952
  %212 = vst.msk [vmem:[%s2 + $0x8] sm:$0x1] %vm211, %v174
  %213 = vst.msk [vmem:[%s2 + $0x10] sm:$0xff] %vm209, %v175
  %214 = vst.msk [vmem:[%s2 + $0x18] sm:$0x1] %vm211, %v176
  %215 = vst.msk [vmem:[%s2 + $0x20] sm:$0xff] %vm209, %v177
  %216 = vst.msk [vmem:[%s2 + $0x28] sm:$0x1] %vm211, %v178
  %217 = vst.msk [vmem:[%s2 + $0x30] sm:$0xff] %vm209, %v179
  %218 = vst.msk [vmem:[%s2 + $0x38] sm:$0x1] %vm211, %v180
  %219 = vst.msk [vmem:[%s2 + $0x40] sm:$0xff] %vm209, %v181
  %220 = vst.msk [vmem:[%s2 + $0x48] sm:$0x1] %vm211, %v182
  %221 = vst.msk [vmem:[%s2 + $0x50] sm:$0xff] %vm209, %v183
  %222 = vst.msk [vmem:[%s2 + $0x58] sm:$0x1] %vm211, %v184
  %223 = vst.msk [vmem:[%s2 + $0x60] sm:$0xff] %vm209, %v185
  %224 = vst.msk [vmem:[%s2 + $0x68] sm:$0x1] %vm211, %v186
  %225 = vst.msk [vmem:[%s2 + $0x70] sm:$0xff] %vm209, %v187
  %226 = vst.msk [vmem:[%s2 + $0x78] sm:$0x1] %vm211, %v188
  %227 = vst.msk [vmem:[%s2 + $0x80] sm:$0xff] %vm209, %v189
  %228 = vst.msk [vmem:[%s2 + $0x88] sm:$0x1] %vm211, %v190
  %229 = vst.msk [vmem:[%s2 + $0x90] sm:$0xff] %vm209, %v191
  %230 = vst.msk [vmem:[%s2 + $0x98] sm:$0x1] %vm211, %v192
  %231 = vst.msk [vmem:[%s2 + $0xa0] sm:$0xff] %vm209, %v193
  %232 = vst.msk [vmem:[%s2 + $0xa8] sm:$0x1] %vm211, %v194
  %233 = vst.msk [vmem:[%s2 + $0xb0] sm:$0xff] %vm209, %v195
  %234 = vst.msk [vmem:[%s2 + $0xb8] sm:$0x1] %vm211, %v196
  %235 = vst.msk [vmem:[%s2 + $0xc0] sm:$0xff] %vm209, %v197
  %236 = vst.msk [vmem:[%s2 + $0xc8] sm:$0x1] %vm211, %v198
  %237 = vst.msk [vmem:[%s2 + $0xd0] sm:$0xff] %vm209, %v199
  %238 = vst.msk [vmem:[%s2 + $0xd8] sm:$0x1] %vm211, %v200
  %239 = vst.msk [vmem:[%s2 + $0xe0] sm:$0xff] %vm209, %v201
  %240 = vst.msk [vmem:[%s2 + $0xe8] sm:$0x1] %vm211, %v202
  %241 = vst.msk [vmem:[%s2 + $0xf0] sm:$0xff] %vm209, %v203
  %242 = vst.msk [vmem:[%s2 + $0xf8] sm:$0x1] %vm211, %v204
  %243 = vst.msk [vmem:[%s2 + $0x100] sm:$0xff] %vm209, %v205
  %244 = vst.msk [vmem:[%s2 + $0x108] sm:$0x1] %vm211, %v206
  %245 = vst.msk [vmem:[%s2 + $0x110] sm:$0xff] %vm209, %v207
  %246 = vst.msk [vmem:[%s2 + $0x118] sm:$0x1] %vm211, %v208
  // Predicated region
  $region10: #{_lambda_.40} parent=0 // pred_check
    _
  $region11: #{_lambda_.40} parent=0 // pred_check_branch
    %248 = sbr.rel (0) target = $region13
  $region12: #{_lambda_.40} parent=0 // pred_region
    _
  $region13: #{_lambda_.40} parent=0 // pred_fallthru
    _
  // Predicated region
  $region14: #{_lambda_.40} parent=0 // pred_check
    _
  $region15: #{_lambda_.40} parent=0 // pred_check_branch
    %250 = sbr.rel (0) target = $region17
  $region16: #{_lambda_.40} parent=0 // pred_region
    _
  $region17: #{_lambda_.40} parent=0 // pred_fallthru
    _

// kernel: _lambda_.41
$region0: #{_lambda_.41}
  #allocation0 [shape = 'u32[]', space=smem, size = 0x4, offset = 0x4, fixed_abs, tag = 'smem constant byte address 0x4 - core index']
  #allocation1 [shape = 'u32[144,128]{1,0:T(1,128)}', space=vmem, size = 0x12000, scoped, tag = 'internal scratch']
  %s0 = inlined_call_operand.vmem [shape: f32[2,9,288], index: 0, kind: input, shape index: {}]
  %s1 = inlined_call_operand.vmem [shape: f32[2,1,288], index: 1, kind: input, shape index: {}]
  %s2 = inlined_call_operand.vmem [shape: f32[2,9,288], index: 2, kind: input, shape index: {}]
  %s3 = inlined_call_operand.vmem [shape: f32[2,9,288], index: 3, kind: output, shape index: {}]
  %s4 = sld [smem:[#allocation0]]
  $region22: #{_lambda_.41} parent=0
    _
  %s6 = ssub.s32 1, %s4
  %s7 = scalar_select 0, %s6, %s4
  // Predicated region
  $region2: #{_lambda_.41} parent=0 // pred_check
    _
  $region3: #{_lambda_.41} parent=0 // pred_check_branch
    %9 = sbr.rel (0) target = $region5
  $region4: #{_lambda_.41} parent=0 // pred_region
    _
  $region5: #{_lambda_.41} parent=0 // pred_fallthru
    _
  // Predicated region
  $region6: #{_lambda_.41} parent=0 // pred_check
    _
  $region7: #{_lambda_.41} parent=0 // pred_check_branch
    %11 = sbr.rel (0) target = $region9
  $region8: #{_lambda_.41} parent=0 // pred_region
    _
  $region9: #{_lambda_.41} parent=0 // pred_fallthru
    _
  // Predicated region
  $region10: #{_lambda_.41} parent=0 // pred_check
    _
  $region11: #{_lambda_.41} parent=0 // pred_check_branch
    %13 = sbr.rel (0) target = $region13
  $region12: #{_lambda_.41} parent=0 // pred_region
    _
  $region13: #{_lambda_.41} parent=0 // pred_fallthru
    _
  %v14 = vld [vmem:[%s0] sm:$0xff]
  %v15 = vld [vmem:[%s0 + $0x8] sm:$0xff]
  %v16 = vld [vmem:[%s0 + $0x10] sm:$0xff]
  %v17 = vld [vmem:[%s0 + $0x18] sm:$0x1]
  %v18 = vld [vmem:[%s0 + $0x20] sm:$0x1]
  %v19 = vld [vmem:[%s0 + $0x28] sm:$0x1]
  %v20 = vld [vmem:[%s0 + $0x30] sm:$0xff]
  %v21 = vld [vmem:[%s0 + $0x38] sm:$0xff]
  %v22 = vld [vmem:[%s0 + $0x40] sm:$0xff]
  %v23 = vld [vmem:[%s0 + $0x48] sm:$0x1]
  %v24 = vld [vmem:[%s0 + $0x50] sm:$0x1]
  %v25 = vld [vmem:[%s0 + $0x58] sm:$0x1]
  %v26 = vld [vmem:[%s1] sm:$0x7]
  %v27 = vld [vmem:[%s1 + $0x3] sm:$0x7]
  %v30 = vlaneseq
  %v31 = vshrl.u32 %v30, 7
  %v32 = vsub.s32 0, %v31
  %v33 = vrot.slane %v26, %v32
  %v34 = vlaneseq
  %v35 = vshrl.u32 %v34, 7
  %v36 = vsub.s32 1, %v35
  %v37 = vrot.slane %v26, %v36
  %v38 = vlaneseq
  %v39 = vshrl.u32 %v38, 7
  %v40 = vsub.s32 2, %v39
  %v41 = vrot.slane %v26, %v40
  %v42 = vlaneseq
  %v43 = vshrl.u32 %v42, 7
  %v44 = vsub.s32 0, %v43
  %v45 = vrot.slane %v27, %v44
  %v46 = vlaneseq
  %v47 = vshrl.u32 %v46, 7
  %v48 = vsub.s32 1, %v47
  %v49 = vrot.slane %v27, %v48
  %v50 = vlaneseq
  %v51 = vshrl.u32 %v50, 7
  %v52 = vsub.s32 2, %v51
  %v53 = vrot.slane %v27, %v52
  %v60 = vmul.f32 %v14, %v33
  %v61 = vmul.f32 %v15, %v37
  %v62 = vmul.f32 %v16, %v41
  %v63 = vmul.f32 %v17, %v33
  %v64 = vmul.f32 %v18, %v37
  %v65 = vmul.f32 %v19, %v41
  %v66 = vmul.f32 %v20, %v45
  %v67 = vmul.f32 %v21, %v49
  %v68 = vmul.f32 %v22, %v53
  %v69 = vmul.f32 %v23, %v45
  %v70 = vmul.f32 %v24, %v49
  %v71 = vmul.f32 %v25, %v53
  %v72 = vld [vmem:[%s2] sm:$0xff]
  %v73 = vld [vmem:[%s2 + $0x8] sm:$0xff]
  %v74 = vld [vmem:[%s2 + $0x10] sm:$0xff]
  %v75 = vld [vmem:[%s2 + $0x18] sm:$0x1]
  %v76 = vld [vmem:[%s2 + $0x20] sm:$0x1]
  %v77 = vld [vmem:[%s2 + $0x28] sm:$0x1]
  %v78 = vld [vmem:[%s2 + $0x30] sm:$0xff]
  %v79 = vld [vmem:[%s2 + $0x38] sm:$0xff]
  %v80 = vld [vmem:[%s2 + $0x40] sm:$0xff]
  %v81 = vld [vmem:[%s2 + $0x48] sm:$0x1]
  %v82 = vld [vmem:[%s2 + $0x50] sm:$0x1]
  %v83 = vld [vmem:[%s2 + $0x58] sm:$0x1]
  %v84 = vadd.f32 %v60, %v72
  %v85 = vadd.f32 %v61, %v73
  %v86 = vadd.f32 %v62, %v74
  %v87 = vadd.f32 %v63, %v75
  %v88 = vadd.f32 %v64, %v76
  %v89 = vadd.f32 %v65, %v77
  %v90 = vadd.f32 %v66, %v78
  %v91 = vadd.f32 %v67, %v79
  %v92 = vadd.f32 %v68, %v80
  %v93 = vadd.f32 %v69, %v81
  %v94 = vadd.f32 %v70, %v82
  %v95 = vadd.f32 %v71, %v83
  %v96 = vsub.f32 0.0, %v84
  %v97 = vsub.f32 0.0, %v85
  %v98 = vsub.f32 0.0, %v86
  %v99 = vsub.f32 0.0, %v87
  %v100 = vsub.f32 0.0, %v88
  %v101 = vsub.f32 0.0, %v89
  %v102 = vsub.f32 0.0, %v90
  %v103 = vsub.f32 0.0, %v91
  %v104 = vsub.f32 0.0, %v92
  %v105 = vsub.f32 0.0, %v93
  %v106 = vsub.f32 0.0, %v94
  %v107 = vsub.f32 0.0, %v95
  %v108 = vmul.f32 %v96, 1.442695
  %v109 = vpow.pop %v108
  %v110 = vmul.f32 %v97, 1.442695
  %v111 = vpow.pop %v110
  %v112 = vmul.f32 %v98, 1.442695
  %v113 = vpow.pop %v112
  %v114 = vmul.f32 %v99, 1.442695
  %v115 = vpow.pop %v114
  %v116 = vmul.f32 %v100, 1.442695
  %v117 = vpow.pop %v116
  %v118 = vmul.f32 %v101, 1.442695
  %v119 = vpow.pop %v118
  %v120 = vmul.f32 %v102, 1.442695
  %v121 = vpow.pop %v120
  %v122 = vmul.f32 %v103, 1.442695
  %v123 = vpow.pop %v122
  %v124 = vmul.f32 %v104, 1.442695
  %v125 = vpow.pop %v124
  %v126 = vmul.f32 %v105, 1.442695
  %v127 = vpow.pop %v126
  %v128 = vmul.f32 %v106, 1.442695
  %v129 = vpow.pop %v128
  %v130 = vmul.f32 %v107, 1.442695
  %v131 = vpow.pop %v130
  %v132 = vadd.f32 %v109, 1.0
  %v133 = vadd.f32 %v111, 1.0
  %v134 = vadd.f32 %v113, 1.0
  %v135 = vadd.f32 %v115, 1.0
  %v136 = vadd.f32 %v117, 1.0
  %v137 = vadd.f32 %v119, 1.0
  %v138 = vadd.f32 %v121, 1.0
  %v139 = vadd.f32 %v123, 1.0
  %v140 = vadd.f32 %v125, 1.0
  %v141 = vadd.f32 %v127, 1.0
  %v142 = vadd.f32 %v129, 1.0
  %v143 = vadd.f32 %v131, 1.0
  %v144 = vrcp.pop %v132
  %v145 = vmul.f32 1.0, %v144
  %v146 = vrcp.pop %v133
  %v147 = vmul.f32 1.0, %v146
  %v148 = vrcp.pop %v134
  %v149 = vmul.f32 1.0, %v148
  %v150 = vrcp.pop %v135
  %v151 = vmul.f32 1.0, %v150
  %v152 = vrcp.pop %v136
  %v153 = vmul.f32 1.0, %v152
  %v154 = vrcp.pop %v137
  %v155 = vmul.f32 1.0, %v154
  %v156 = vrcp.pop %v138
  %v157 = vmul.f32 1.0, %v156
  %v158 = vrcp.pop %v139
  %v159 = vmul.f32 1.0, %v158
  %v160 = vrcp.pop %v140
  %v161 = vmul.f32 1.0, %v160
  %v162 = vrcp.pop %v141
  %v163 = vmul.f32 1.0, %v162
  %v164 = vrcp.pop %v142
  %v165 = vmul.f32 1.0, %v164
  %v166 = vrcp.pop %v143
  %v167 = vmul.f32 1.0, %v166
  %v168 = vmul.f32 %v84, %v145
  %v169 = vmul.f32 %v85, %v147
  %v170 = vmul.f32 %v86, %v149
  %v171 = vmul.f32 %v87, %v151
  %v172 = vmul.f32 %v88, %v153
  %v173 = vmul.f32 %v89, %v155
  %v174 = vmul.f32 %v90, %v157
  %v175 = vmul.f32 %v91, %v159
  %v176 = vmul.f32 %v92, %v161
  %v177 = vmul.f32 %v93, %v163
  %v178 = vmul.f32 %v94, %v165
  %v179 = vmul.f32 %v95, %v167
  %180 = vst [vmem:[%s3] sm:$0xff] %v168
  %181 = vst [vmem:[%s3 + $0x8] sm:$0xff] %v169
  %vm182 = vcmask 261120
  %183 = vst.msk [vmem:[%s3 + $0x10] sm:$0xff] %vm182, %v170
  %184 = vst [vmem:[%s3 + $0x18] sm:$0x1] %v171
  %185 = vst [vmem:[%s3 + $0x20] sm:$0x1] %v172
  %vm186 = vcmask 253952
  %187 = vst.msk [vmem:[%s3 + $0x28] sm:$0x1] %vm186, %v173
  %188 = vst [vmem:[%s3 + $0x30] sm:$0xff] %v174
  %189 = vst [vmem:[%s3 + $0x38] sm:$0xff] %v175
  %190 = vst.msk [vmem:[%s3 + $0x40] sm:$0xff] %vm182, %v176
  %191 = vst [vmem:[%s3 + $0x48] sm:$0x1] %v177
  %192 = vst [vmem:[%s3 + $0x50] sm:$0x1] %v178
  %193 = vst.msk [vmem:[%s3 + $0x58] sm:$0x1] %vm186, %v179
  // Predicated region
  $region14: #{_lambda_.41} parent=0 // pred_check
    _
  $region15: #{_lambda_.41} parent=0 // pred_check_branch
    %195 = sbr.rel (0) target = $region17
  $region16: #{_lambda_.41} parent=0 // pred_region
    _
  $region17: #{_lambda_.41} parent=0 // pred_fallthru
    _
  // Predicated region
  $region18: #{_lambda_.41} parent=0 // pred_check
    _
  $region19: #{_lambda_.41} parent=0 // pred_check_branch
    %197 = sbr.rel (0) target = $region21
  $region20: #{_lambda_.41} parent=0 // pred_region
    _
  $region21: #{_lambda_.41} parent=0 // pred_fallthru
    _

// kernel: _lambda_.42
$region0: #{_lambda_.42}
  #allocation0 [shape = 'u32[]', space=smem, size = 0x4, offset = 0x4, fixed_abs, tag = 'smem constant byte address 0x4 - core index']
  #allocation1 [shape = 'u32[144,128]{1,0:T(1,128)}', space=vmem, size = 0x12000, scoped, tag = 'internal scratch']
  %s0 = inlined_call_operand.vmem [shape: f32[162,32], index: 0, kind: input, shape index: {}]
  %s1 = inlined_call_operand.vmem [shape: f32[32,32], index: 1, kind: input, shape index: {}]
  %s2 = inlined_call_operand.vmem [shape: f32[1,32], index: 2, kind: input, shape index: {}]
  %s3 = inlined_call_operand.vmem [shape: f32[1,32], index: 3, kind: input, shape index: {}]
  %s4 = inlined_call_operand.vmem [shape: f32[162,32], index: 4, kind: output, shape index: {}]
  %s5 = sld [smem:[#allocation0]]
  $region26: #{_lambda_.42} parent=0
    _
  %s7 = ssub.s32 1, %s5
  %s8 = scalar_select 0, %s7, %s5
  // Predicated region
  $region2: #{_lambda_.42} parent=0 // pred_check
    _
  $region3: #{_lambda_.42} parent=0 // pred_check_branch
    %10 = sbr.rel (0) target = $region5
  $region4: #{_lambda_.42} parent=0 // pred_region
    _
  $region5: #{_lambda_.42} parent=0 // pred_fallthru
    _
  // Predicated region
  $region6: #{_lambda_.42} parent=0 // pred_check
    _
  $region7: #{_lambda_.42} parent=0 // pred_check_branch
    %12 = sbr.rel (0) target = $region9
  $region8: #{_lambda_.42} parent=0 // pred_region
    _
  $region9: #{_lambda_.42} parent=0 // pred_fallthru
    _
  // Predicated region
  $region10: #{_lambda_.42} parent=0 // pred_check
    _
  $region11: #{_lambda_.42} parent=0 // pred_check_branch
    %14 = sbr.rel (0) target = $region13
  $region12: #{_lambda_.42} parent=0 // pred_region
    _
  $region13: #{_lambda_.42} parent=0 // pred_fallthru
    _
  // Predicated region
  $region14: #{_lambda_.42} parent=0 // pred_check
    _
  $region15: #{_lambda_.42} parent=0 // pred_check_branch
    %16 = sbr.rel (0) target = $region17
  $region16: #{_lambda_.42} parent=0 // pred_region
    _
  $region17: #{_lambda_.42} parent=0 // pred_fallthru
    _
  %v17 = vld [vmem:[%s0] sm:$0xff]
  %v18 = vld [vmem:[%s0 + $0x8] sm:$0xff]
  %v19 = vld [vmem:[%s0 + $0x10] sm:$0xff]
  %v20 = vld [vmem:[%s0 + $0x18] sm:$0xff]
  %v21 = vld [vmem:[%s0 + $0x20] sm:$0xff]
  %v22 = vld [vmem:[%s0 + $0x28] sm:$0xff]
  %v23 = vld [vmem:[%s0 + $0x30] sm:$0xff]
  %v24 = vld [vmem:[%s0 + $0x38] sm:$0xff]
  %v25 = vld [vmem:[%s0 + $0x40] sm:$0xff]
  %v26 = vld [vmem:[%s0 + $0x48] sm:$0xff]
  %v27 = vld [vmem:[%s0 + $0x50] sm:$0xff]
  %v28 = vld [vmem:[%s0 + $0x58] sm:$0xff]
  %v29 = vld [vmem:[%s0 + $0x60] sm:$0xff]
  %v30 = vld [vmem:[%s0 + $0x68] sm:$0xff]
  %v31 = vld [vmem:[%s0 + $0x70] sm:$0xff]
  %v32 = vld [vmem:[%s0 + $0x78] sm:$0xff]
  %v33 = vld [vmem:[%s0 + $0x80] sm:$0xff]
  %v34 = vld [vmem:[%s0 + $0x88] sm:$0xff]
  %v35 = vld [vmem:[%s0 + $0x90] sm:$0xff]
  %v36 = vld [vmem:[%s0 + $0x98] sm:$0xff]
  %v37 = vld [vmem:[%s0 + $0xa0] sm:$0x3]
  %v38 = vld [vmem:[%s1] sm:$0xff]
  %v39 = vld [vmem:[%s1 + $0x8] sm:$0xff]
  %v40 = vld [vmem:[%s1 + $0x10] sm:$0xff]
  %v41 = vld [vmem:[%s1 + $0x18] sm:$0xff]
  %vm42 = vcmask 261120
  %v44 = vsel %vm42, %v17, 0
  %v47 = vsel %vm42, %v18, 0
  %v50 = vsel %vm42, %v19, 0
  %v53 = vsel %vm42, %v20, 0
  %v56 = vsel %vm42, %v21, 0
  %v59 = vsel %vm42, %v22, 0
  %v62 = vsel %vm42, %v23, 0
  %v65 = vsel %vm42, %v24, 0
  %v68 = vsel %vm42, %v25, 0
  %v71 = vsel %vm42, %v26, 0
  %v74 = vsel %vm42, %v27, 0
  %v77 = vsel %vm42, %v28, 0
  %v80 = vsel %vm42, %v29, 0
  %v83 = vsel %vm42, %v30, 0
  %v86 = vsel %vm42, %v31, 0
  %v89 = vsel %vm42, %v32, 0
  %v92 = vsel %vm42, %v33, 0
  %v95 = vsel %vm42, %v34, 0
  %v98 = vsel %vm42, %v35, 0
  %v101 = vsel %vm42, %v36, 0
  %v104 = vsel %vm42, %v37, 0
  %106 = vmatprep.subr.mxu0 0.0
  %107 = vmatpush1.msra.mxu0 %v38
  %108 = vmatprep.subr.mxu0 0.0
  %109 = vmatpush1.msra.mxu0 %v39
  %110 = vmatprep.subr.mxu0 0.0
  %111 = vmatpush1.msra.mxu0 %v40
  %112 = vmatprep.subr.mxu0 0.0
  %113 = vmatpush1.msra.mxu0 %v41
  %114 = vmatprep.subr.mxu0 0.0
  %115 = vmatpush1.msra.mxu0 0.0
  %116 = vmatprep.subr.mxu0 0.0
  %117 = vmatpush1.msra.mxu0 0.0
  %118 = vmatprep.subr.mxu0 0.0
  %119 = vmatpush1.msra.mxu0 0.0
  %120 = vmatprep.subr.mxu0 0.0
  %121 = vmatpush1.msra.mxu0 0.0
  %122 = vmatprep.subr.mxu0 0.0
  %123 = vmatpush1.msra.mxu0 0.0
  %124 = vmatprep.subr.mxu0 0.0
  %125 = vmatpush1.msra.mxu0 0.0
  %126 = vmatprep.subr.mxu0 0.0
  %127 = vmatpush1.msra.mxu0 0.0
  %128 = vmatprep.subr.mxu0 0.0
  %129 = vmatpush1.msra.mxu0 0.0
  %130 = vmatprep.subr.mxu0 0.0
  %131 = vmatpush1.msra.mxu0 0.0
  %132 = vmatprep.subr.mxu0 0.0
  %133 = vmatpush1.msra.mxu0 0.0
  %134 = vmatprep.subr.mxu0 0.0
  %135 = vmatpush1.msra.mxu0 0.0
  %136 = vmatprep.subr.mxu0 0.0
  %137 = vmatpush1.msra.mxu0 0.0
  %138 = vmatprep.subr.mxu0 0.0
  %139 = vmatpush1.msra.mxu0 0.0
  %140 = vmatprep.subr.mxu0 0.0
  %141 = vmatpush1.msra.mxu0 0.0
  %142 = vmatprep.subr.mxu0 0.0
  %143 = vmatpush1.msra.mxu0 0.0
  %144 = vmatprep.subr.mxu0 0.0
  %145 = vmatpush1.msra.mxu0 0.0
  %146 = vmatprep.subr.mxu0 0.0
  %147 = vmatpush1.msra.mxu0 0.0
  %148 = vmatprep.subr.mxu0 0.0
  %149 = vmatpush1.msra.mxu0 0.0
  %150 = vmatprep.subr.mxu0 0.0
  %151 = vmatpush1.msra.mxu0 0.0
  %152 = vmatprep.subr.mxu0 0.0
  %153 = vmatpush1.msra.mxu0 0.0
  %154 = vmatprep.subr.mxu0 0.0
  %155 = vmatpush1.msra.mxu0 0.0
  %156 = vmatprep.subr.mxu0 0.0
  %157 = vmatpush1.msra.mxu0 0.0
  %158 = vmatprep.subr.mxu0 0.0
  %159 = vmatpush1.msra.mxu0 0.0
  %160 = vmatprep.subr.mxu0 0.0
  %161 = vmatpush1.msra.mxu0 0.0
  %162 = vmatprep.subr.mxu0 0.0
  %163 = vmatpush1.msra.mxu0 0.0
  %164 = vmatprep.subr.mxu0 0.0
  %165 = vmatpush1.msra.mxu0 0.0
  %166 = vmatprep.subr.mxu0 0.0
  %167 = vmatpush1.msra.mxu0 0.0
  %168 = vmatprep.subr.mxu0 0.0
  %169 = vmatpush1.msra.mxu0 0.0
  %170 = vmatprep.mubr.f32.mxu0 0.0
  %171 = vmatmul.mubr.f32.gmra.mrb[0].mxu0 %v44
  %v172 = vpop.f32.mrb[0].mxu0
  %v173 = vadd.f32 0.0, %v172
  %v174 = vpop.f32.mrb[0].mxu0
  %175 = vmatprep.mubr.f32.mxu0 0.0
  %176 = vmatmul.mubr.f32.gmra.mrb[0].mxu0 %v47
  %v177 = vpop.f32.mrb[0].mxu0
  %v178 = vadd.f32 0.0, %v177
  %v179 = vpop.f32.mrb[0].mxu0
  %180 = vmatprep.mubr.f32.mxu0 0.0
  %181 = vmatmul.mubr.f32.gmra.mrb[0].mxu0 %v50
  %v182 = vpop.f32.mrb[0].mxu0
  %v183 = vadd.f32 0.0, %v182
  %v184 = vpop.f32.mrb[0].mxu0
  %185 = vmatprep.mubr.f32.mxu0 0.0
  %186 = vmatmul.mubr.f32.gmra.mrb[0].mxu0 %v53
  %v187 = vpop.f32.mrb[0].mxu0
  %v188 = vadd.f32 0.0, %v187
  %v189 = vpop.f32.mrb[0].mxu0
  %190 = vmatprep.mubr.f32.mxu0 0.0
  %191 = vmatmul.mubr.f32.gmra.mrb[0].mxu0 %v56
  %v192 = vpop.f32.mrb[0].mxu0
  %v193 = vadd.f32 0.0, %v192
  %v194 = vpop.f32.mrb[0].mxu0
  %195 = vmatprep.mubr.f32.mxu0 0.0
  %196 = vmatmul.mubr.f32.gmra.mrb[0].mxu0 %v59
  %v197 = vpop.f32.mrb[0].mxu0
  %v198 = vadd.f32 0.0, %v197
  %v199 = vpop.f32.mrb[0].mxu0
  %200 = vmatprep.mubr.f32.mxu0 0.0
  %201 = vmatmul.mubr.f32.gmra.mrb[0].mxu0 %v62
  %v202 = vpop.f32.mrb[0].mxu0
  %v203 = vadd.f32 0.0, %v202
  %v204 = vpop.f32.mrb[0].mxu0
  %205 = vmatprep.mubr.f32.mxu0 0.0
  %206 = vmatmul.mubr.f32.gmra.mrb[0].mxu0 %v65
  %v207 = vpop.f32.mrb[0].mxu0
  %v208 = vadd.f32 0.0, %v207
  %v209 = vpop.f32.mrb[0].mxu0
  %210 = vmatprep.mubr.f32.mxu0 0.0
  %211 = vmatmul.mubr.f32.gmra.mrb[0].mxu0 %v68
  %v212 = vpop.f32.mrb[0].mxu0
  %v213 = vadd.f32 0.0, %v212
  %v214 = vpop.f32.mrb[0].mxu0
  %215 = vmatprep.mubr.f32.mxu0 0.0
  %216 = vmatmul.mubr.f32.gmra.mrb[0].mxu0 %v71
  %v217 = vpop.f32.mrb[0].mxu0
  %v218 = vadd.f32 0.0, %v217
  %v219 = vpop.f32.mrb[0].mxu0
  %220 = vmatprep.mubr.f32.mxu0 0.0
  %221 = vmatmul.mubr.f32.gmra.mrb[0].mxu0 %v74
  %v222 = vpop.f32.mrb[0].mxu0
  %v223 = vadd.f32 0.0, %v222
  %v224 = vpop.f32.mrb[0].mxu0
  %225 = vmatprep.mubr.f32.mxu0 0.0
  %226 = vmatmul.mubr.f32.gmra.mrb[0].mxu0 %v77
  %v227 = vpop.f32.mrb[0].mxu0
  %v228 = vadd.f32 0.0, %v227
  %v229 = vpop.f32.mrb[0].mxu0
  %230 = vmatprep.mubr.f32.mxu0 0.0
  %231 = vmatmul.mubr.f32.gmra.mrb[0].mxu0 %v80
  %v232 = vpop.f32.mrb[0].mxu0
  %v233 = vadd.f32 0.0, %v232
  %v234 = vpop.f32.mrb[0].mxu0
  %235 = vmatprep.mubr.f32.mxu0 0.0
  %236 = vmatmul.mubr.f32.gmra.mrb[0].mxu0 %v83
  %v237 = vpop.f32.mrb[0].mxu0
  %v238 = vadd.f32 0.0, %v237
  %v239 = vpop.f32.mrb[0].mxu0
  %240 = vmatprep.mubr.f32.mxu0 0.0
  %241 = vmatmul.mubr.f32.gmra.mrb[0].mxu0 %v86
  %v242 = vpop.f32.mrb[0].mxu0
  %v243 = vadd.f32 0.0, %v242
  %v244 = vpop.f32.mrb[0].mxu0
  %245 = vmatprep.mubr.f32.mxu0 0.0
  %246 = vmatmul.mubr.f32.gmra.mrb[0].mxu0 %v89
  %v247 = vpop.f32.mrb[0].mxu0
  %v248 = vadd.f32 0.0, %v247
  %v249 = vpop.f32.mrb[0].mxu0
  %250 = vmatprep.mubr.f32.mxu0 0.0
  %251 = vmatmul.mubr.f32.gmra.mrb[0].mxu0 %v92
  %v252 = vpop.f32.mrb[0].mxu0
  %v253 = vadd.f32 0.0, %v252
  %v254 = vpop.f32.mrb[0].mxu0
  %255 = vmatprep.mubr.f32.mxu0 0.0
  %256 = vmatmul.mubr.f32.gmra.mrb[0].mxu0 %v95
  %v257 = vpop.f32.mrb[0].mxu0
  %v258 = vadd.f32 0.0, %v257
  %v259 = vpop.f32.mrb[0].mxu0
  %260 = vmatprep.mubr.f32.mxu0 0.0
  %261 = vmatmul.mubr.f32.gmra.mrb[0].mxu0 %v98
  %v262 = vpop.f32.mrb[0].mxu0
  %v263 = vadd.f32 0.0, %v262
  %v264 = vpop.f32.mrb[0].mxu0
  %265 = vmatprep.mubr.f32.mxu0 0.0
  %266 = vmatmul.mubr.f32.gmra.mrb[0].mxu0 %v101
  %v267 = vpop.f32.mrb[0].mxu0
  %v268 = vadd.f32 0.0, %v267
  %v269 = vpop.f32.mrb[0].mxu0
  %270 = vmatprep.mubr.f32.mxu0 0.0
  %271 = vmatmul.mubr.f32.gmra.mrb[0].mxu0 %v104
  %v272 = vpop.f32.mrb[0].mxu0
  %v273 = vadd.f32 0.0, %v272
  %v274 = vpop.f32.mrb[0].mxu0
  %275 = vdwg.mxu0
  %v276 = vld [vmem:[%s2] sm:$0x1]
  %v278 = vlaneseq
  %v279 = vshrl.u32 %v278, 7
  %v280 = vsub.s32 0, %v279
  %v281 = vrot.slane %v276, %v280
  %v283 = vmul.f32 %v173, %v281
  %v284 = vmul.f32 %v178, %v281
  %v285 = vmul.f32 %v183, %v281
  %v286 = vmul.f32 %v188, %v281
  %v287 = vmul.f32 %v193, %v281
  %v288 = vmul.f32 %v198, %v281
  %v289 = vmul.f32 %v203, %v281
  %v290 = vmul.f32 %v208, %v281
  %v291 = vmul.f32 %v213, %v281
  %v292 = vmul.f32 %v218, %v281
  %v293 = vmul.f32 %v223, %v281
  %v294 = vmul.f32 %v228, %v281
  %v295 = vmul.f32 %v233, %v281
  %v296 = vmul.f32 %v238, %v281
  %v297 = vmul.f32 %v243, %v281
  %v298 = vmul.f32 %v248, %v281
  %v299 = vmul.f32 %v253, %v281
  %v300 = vmul.f32 %v258, %v281
  %v301 = vmul.f32 %v263, %v281
  %v302 = vmul.f32 %v268, %v281
  %v303 = vmul.f32 %v273, %v281
  %v304 = vld [vmem:[%s3] sm:$0x1]
  %v306 = vlaneseq
  %v307 = vshrl.u32 %v306, 7
  %v308 = vsub.s32 0, %v307
  %v309 = vrot.slane %v304, %v308
  %v311 = vadd.f32 %v283, %v309
  %v312 = vadd.f32 %v284, %v309
  %v313 = vadd.f32 %v285, %v309
  %v314 = vadd.f32 %v286, %v309
  %v315 = vadd.f32 %v287, %v309
  %v316 = vadd.f32 %v288, %v309
  %v317 = vadd.f32 %v289, %v309
  %v318 = vadd.f32 %v290, %v309
  %v319 = vadd.f32 %v291, %v309
  %v320 = vadd.f32 %v292, %v309
  %v321 = vadd.f32 %v293, %v309
  %v322 = vadd.f32 %v294, %v309
  %v323 = vadd.f32 %v295, %v309
  %v324 = vadd.f32 %v296, %v309
  %v325 = vadd.f32 %v297, %v309
  %v326 = vadd.f32 %v298, %v309
  %v327 = vadd.f32 %v299, %v309
  %v328 = vadd.f32 %v300, %v309
  %v329 = vadd.f32 %v301, %v309
  %v330 = vadd.f32 %v302, %v309
  %v331 = vadd.f32 %v303, %v309
  %v332 = vsub.f32 0.0, %v311
  %v333 = vsub.f32 0.0, %v312
  %v334 = vsub.f32 0.0, %v313
  %v335 = vsub.f32 0.0, %v314
  %v336 = vsub.f32 0.0, %v315
  %v337 = vsub.f32 0.0, %v316
  %v338 = vsub.f32 0.0, %v317
  %v339 = vsub.f32 0.0, %v318
  %v340 = vsub.f32 0.0, %v319
  %v341 = vsub.f32 0.0, %v320
  %v342 = vsub.f32 0.0, %v321
  %v343 = vsub.f32 0.0, %v322
  %v344 = vsub.f32 0.0, %v323
  %v345 = vsub.f32 0.0, %v324
  %v346 = vsub.f32 0.0, %v325
  %v347 = vsub.f32 0.0, %v326
  %v348 = vsub.f32 0.0, %v327
  %v349 = vsub.f32 0.0, %v328
  %v350 = vsub.f32 0.0, %v329
  %v351 = vsub.f32 0.0, %v330
  %v352 = vsub.f32 0.0, %v331
  %v353 = vmul.f32 %v332, 1.442695
  %v354 = vpow.pop %v353
  %v355 = vmul.f32 %v333, 1.442695
  %v356 = vpow.pop %v355
  %v357 = vmul.f32 %v334, 1.442695
  %v358 = vpow.pop %v357
  %v359 = vmul.f32 %v335, 1.442695
  %v360 = vpow.pop %v359
  %v361 = vmul.f32 %v336, 1.442695
  %v362 = vpow.pop %v361
  %v363 = vmul.f32 %v337, 1.442695
  %v364 = vpow.pop %v363
  %v365 = vmul.f32 %v338, 1.442695
  %v366 = vpow.pop %v365
  %v367 = vmul.f32 %v339, 1.442695
  %v368 = vpow.pop %v367
  %v369 = vmul.f32 %v340, 1.442695
  %v370 = vpow.pop %v369
  %v371 = vmul.f32 %v341, 1.442695
  %v372 = vpow.pop %v371
  %v373 = vmul.f32 %v342, 1.442695
  %v374 = vpow.pop %v373
  %v375 = vmul.f32 %v343, 1.442695
  %v376 = vpow.pop %v375
  %v377 = vmul.f32 %v344, 1.442695
  %v378 = vpow.pop %v377
  %v379 = vmul.f32 %v345, 1.442695
  %v380 = vpow.pop %v379
  %v381 = vmul.f32 %v346, 1.442695
  %v382 = vpow.pop %v381
  %v383 = vmul.f32 %v347, 1.442695
  %v384 = vpow.pop %v383
  %v385 = vmul.f32 %v348, 1.442695
  %v386 = vpow.pop %v385
  %v387 = vmul.f32 %v349, 1.442695
  %v388 = vpow.pop %v387
  %v389 = vmul.f32 %v350, 1.442695
  %v390 = vpow.pop %v389
  %v391 = vmul.f32 %v351, 1.442695
  %v392 = vpow.pop %v391
  %v393 = vmul.f32 %v352, 1.442695
  %v394 = vpow.pop %v393
  %v395 = vadd.f32 %v354, 1.0
  %v396 = vadd.f32 %v356, 1.0
  %v397 = vadd.f32 %v358, 1.0
  %v398 = vadd.f32 %v360, 1.0
  %v399 = vadd.f32 %v362, 1.0
  %v400 = vadd.f32 %v364, 1.0
  %v401 = vadd.f32 %v366, 1.0
  %v402 = vadd.f32 %v368, 1.0
  %v403 = vadd.f32 %v370, 1.0
  %v404 = vadd.f32 %v372, 1.0
  %v405 = vadd.f32 %v374, 1.0
  %v406 = vadd.f32 %v376, 1.0
  %v407 = vadd.f32 %v378, 1.0
  %v408 = vadd.f32 %v380, 1.0
  %v409 = vadd.f32 %v382, 1.0
  %v410 = vadd.f32 %v384, 1.0
  %v411 = vadd.f32 %v386, 1.0
  %v412 = vadd.f32 %v388, 1.0
  %v413 = vadd.f32 %v390, 1.0
  %v414 = vadd.f32 %v392, 1.0
  %v415 = vadd.f32 %v394, 1.0
  %v416 = vrcp.pop %v395
  %v417 = vmul.f32 1.0, %v416
  %v418 = vrcp.pop %v396
  %v419 = vmul.f32 1.0, %v418
  %v420 = vrcp.pop %v397
  %v421 = vmul.f32 1.0, %v420
  %v422 = vrcp.pop %v398
  %v423 = vmul.f32 1.0, %v422
  %v424 = vrcp.pop %v399
  %v425 = vmul.f32 1.0, %v424
  %v426 = vrcp.pop %v400
  %v427 = vmul.f32 1.0, %v426
  %v428 = vrcp.pop %v401
  %v429 = vmul.f32 1.0, %v428
  %v430 = vrcp.pop %v402
  %v431 = vmul.f32 1.0, %v430
  %v432 = vrcp.pop %v403
  %v433 = vmul.f32 1.0, %v432
  %v434 = vrcp.pop %v404
  %v435 = vmul.f32 1.0, %v434
  %v436 = vrcp.pop %v405
  %v437 = vmul.f32 1.0, %v436
  %v438 = vrcp.pop %v406
  %v439 = vmul.f32 1.0, %v438
  %v440 = vrcp.pop %v407
  %v441 = vmul.f32 1.0, %v440
  %v442 = vrcp.pop %v408
  %v443 = vmul.f32 1.0, %v442
  %v444 = vrcp.pop %v409
  %v445 = vmul.f32 1.0, %v444
  %v446 = vrcp.pop %v410
  %v447 = vmul.f32 1.0, %v446
  %v448 = vrcp.pop %v411
  %v449 = vmul.f32 1.0, %v448
  %v450 = vrcp.pop %v412
  %v451 = vmul.f32 1.0, %v450
  %v452 = vrcp.pop %v413
  %v453 = vmul.f32 1.0, %v452
  %v454 = vrcp.pop %v414
  %v455 = vmul.f32 1.0, %v454
  %v456 = vrcp.pop %v415
  %v457 = vmul.f32 1.0, %v456
  %v458 = vmul.f32 %v311, %v417
  %v459 = vmul.f32 %v312, %v419
  %v460 = vmul.f32 %v313, %v421
  %v461 = vmul.f32 %v314, %v423
  %v462 = vmul.f32 %v315, %v425
  %v463 = vmul.f32 %v316, %v427
  %v464 = vmul.f32 %v317, %v429
  %v465 = vmul.f32 %v318, %v431
  %v466 = vmul.f32 %v319, %v433
  %v467 = vmul.f32 %v320, %v435
  %v468 = vmul.f32 %v321, %v437
  %v469 = vmul.f32 %v322, %v439
  %v470 = vmul.f32 %v323, %v441
  %v471 = vmul.f32 %v324, %v443
  %v472 = vmul.f32 %v325, %v445
  %v473 = vmul.f32 %v326, %v447
  %v474 = vmul.f32 %v327, %v449
  %v475 = vmul.f32 %v328, %v451
  %v476 = vmul.f32 %v329, %v453
  %v477 = vmul.f32 %v330, %v455
  %v478 = vmul.f32 %v331, %v457
  %479 = vst.msk [vmem:[%s4] sm:$0xff] %vm42, %v458
  %480 = vst.msk [vmem:[%s4 + $0x8] sm:$0xff] %vm42, %v459
  %481 = vst.msk [vmem:[%s4 + $0x10] sm:$0xff] %vm42, %v460
  %482 = vst.msk [vmem:[%s4 + $0x18] sm:$0xff] %vm42, %v461
  %483 = vst.msk [vmem:[%s4 + $0x20] sm:$0xff] %vm42, %v462
  %484 = vst.msk [vmem:[%s4 + $0x28] sm:$0xff] %vm42, %v463
  %485 = vst.msk [vmem:[%s4 + $0x30] sm:$0xff] %vm42, %v464
  %486 = vst.msk [vmem:[%s4 + $0x38] sm:$0xff] %vm42, %v465
  %487 = vst.msk [vmem:[%s4 + $0x40] sm:$0xff] %vm42, %v466
  %488 = vst.msk [vmem:[%s4 + $0x48] sm:$0xff] %vm42, %v467
  %489 = vst.msk [vmem:[%s4 + $0x50] sm:$0xff] %vm42, %v468
  %490 = vst.msk [vmem:[%s4 + $0x58] sm:$0xff] %vm42, %v469
  %491 = vst.msk [vmem:[%s4 + $0x60] sm:$0xff] %vm42, %v470
  %492 = vst.msk [vmem:[%s4 + $0x68] sm:$0xff] %vm42, %v471
  %493 = vst.msk [vmem:[%s4 + $0x70] sm:$0xff] %vm42, %v472
  %494 = vst.msk [vmem:[%s4 + $0x78] sm:$0xff] %vm42, %v473
  %495 = vst.msk [vmem:[%s4 + $0x80] sm:$0xff] %vm42, %v474
  %496 = vst.msk [vmem:[%s4 + $0x88] sm:$0xff] %vm42, %v475
  %497 = vst.msk [vmem:[%s4 + $0x90] sm:$0xff] %vm42, %v476
  %498 = vst.msk [vmem:[%s4 + $0x98] sm:$0xff] %vm42, %v477
  %vm499 = vcmask 254976
  %500 = vst.msk [vmem:[%s4 + $0xa0] sm:$0x3] %vm499, %v478
  // Predicated region
  $region18: #{_lambda_.42} parent=0 // pred_check
    _
  $region19: #{_lambda_.42} parent=0 // pred_check_branch
    %502 = sbr.rel (0) target = $region21
  $region20: #{_lambda_.42} parent=0 // pred_region
    _
  $region21: #{_lambda_.42} parent=0 // pred_fallthru
    _
  // Predicated region
  $region22: #{_lambda_.42} parent=0 // pred_check
    _
  $region23: #{_lambda_.42} parent=0 // pred_check_branch
    %504 = sbr.rel (0) target = $region25
  $region24: #{_lambda_.42} parent=0 // pred_region
    _
  $region25: #{_lambda_.42} parent=0 // pred_fallthru
    _

// kernel: _lambda_.43
$region0: #{_lambda_.43}
  #allocation0 [shape = 'u32[]', space=smem, size = 0x4, offset = 0x4, fixed_abs, tag = 'smem constant byte address 0x4 - core index']
  #allocation1 [shape = 'u32[144,128]{1,0:T(1,128)}', space=vmem, size = 0x12000, scoped, tag = 'internal scratch']
  %s0 = inlined_call_operand.vmem [shape: f32[64,81], index: 0, kind: input, shape index: {}]
  %s1 = inlined_call_operand.vmem [shape: f32[64,1], index: 1, kind: output, shape index: {}]
  %s2 = sld [smem:[#allocation0]]
  $region14: #{_lambda_.43} parent=0
    _
  %s4 = ssub.s32 1, %s2
  %s5 = scalar_select 0, %s4, %s2
  // Predicated region
  $region2: #{_lambda_.43} parent=0 // pred_check
    _
  $region3: #{_lambda_.43} parent=0 // pred_check_branch
    %7 = sbr.rel (0) target = $region5
  $region4: #{_lambda_.43} parent=0 // pred_region
    _
  $region5: #{_lambda_.43} parent=0 // pred_fallthru
    _
  %v8 = vld [vmem:[%s0] sm:$0xff]
  %v9 = vld [vmem:[%s0 + $0x8] sm:$0xff]
  %v10 = vld [vmem:[%s0 + $0x10] sm:$0xff]
  %v11 = vld [vmem:[%s0 + $0x18] sm:$0xff]
  %v12 = vld [vmem:[%s0 + $0x20] sm:$0xff]
  %v13 = vld [vmem:[%s0 + $0x28] sm:$0xff]
  %v14 = vld [vmem:[%s0 + $0x30] sm:$0xff]
  %v15 = vld [vmem:[%s0 + $0x38] sm:$0xff]
  %vm16 = vcmask 662528
  %v17 = vsel %vm16, %v8, 0.0
  %18 = vadd.xlane.f32.xlu0 %v17
  %v19 = vpop.xlane.xlu0 %18
  %v20 = vsel %vm16, %v9, 0.0
  %21 = vadd.xlane.f32.xlu0 %v20
  %v22 = vpop.xlane.xlu0 %21
  %v23 = vsel %vm16, %v10, 0.0
  %24 = vadd.xlane.f32.xlu0 %v23
  %v25 = vpop.xlane.xlu0 %24
  %v26 = vsel %vm16, %v11, 0.0
  %27 = vadd.xlane.f32.xlu0 %v26
  %v28 = vpop.xlane.xlu0 %27
  %v29 = vsel %vm16, %v12, 0.0
  %30 = vadd.xlane.f32.xlu0 %v29
  %v31 = vpop.xlane.xlu0 %30
  %v32 = vsel %vm16, %v13, 0.0
  %33 = vadd.xlane.f32.xlu0 %v32
  %v34 = vpop.xlane.xlu0 %33
  %v35 = vsel %vm16, %v14, 0.0
  %36 = vadd.xlane.f32.xlu0 %v35
  %v37 = vpop.xlane.xlu0 %36
  %v38 = vsel %vm16, %v15, 0.0
  %39 = vadd.xlane.f32.xlu0 %v38
  %v40 = vpop.xlane.xlu0 %39
  %v41 = vrcp.pop 81.0
  %v42 = vmul.f32 %v19, %v41
  %v43 = vmul.f32 %v22, %v41
  %v44 = vmul.f32 %v25, %v41
  %v45 = vmul.f32 %v28, %v41
  %v46 = vmul.f32 %v31, %v41
  %v47 = vmul.f32 %v34, %v41
  %v48 = vmul.f32 %v37, %v41
  %v49 = vmul.f32 %v40, %v41
  %vm50 = vcmask 7168
  %51 = vst.msk [vmem:[%s1] sm:$0xff] %vm50, %v42
  %52 = vst.msk [vmem:[%s1 + $0x8] sm:$0xff] %vm50, %v43
  %53 = vst.msk [vmem:[%s1 + $0x10] sm:$0xff] %vm50, %v44
  %54 = vst.msk [vmem:[%s1 + $0x18] sm:$0xff] %vm50, %v45
  %55 = vst.msk [vmem:[%s1 + $0x20] sm:$0xff] %vm50, %v46
  %56 = vst.msk [vmem:[%s1 + $0x28] sm:$0xff] %vm50, %v47
  %57 = vst.msk [vmem:[%s1 + $0x30] sm:$0xff] %vm50, %v48
  %58 = vst.msk [vmem:[%s1 + $0x38] sm:$0xff] %vm50, %v49
  // Predicated region
  $region6: #{_lambda_.43} parent=0 // pred_check
    _
  $region7: #{_lambda_.43} parent=0 // pred_check_branch
    %60 = sbr.rel (0) target = $region9
  $region8: #{_lambda_.43} parent=0 // pred_region
    _
  $region9: #{_lambda_.43} parent=0 // pred_fallthru
    _
  // Predicated region
  $region10: #{_lambda_.43} parent=0 // pred_check
    _
  $region11: #{_lambda_.43} parent=0 // pred_check_branch
    %62 = sbr.rel (0) target = $region13
  $region12: #{_lambda_.43} parent=0 // pred_region
    _
  $region13: #{_lambda_.43} parent=0 // pred_fallthru
    _

</llo_original>
